<compile_context>
chip_gen: v6e
topology: v6e:2x2x1
jax: 0.10.0
libtpu: 0.0.40
codegen_flags: <defaults>
</compile_context>

<pallas_src>
import functools
import math

import jax
import jax.numpy as jnp
from jax.experimental import pallas as pl
from jax.experimental.pallas import tpu as pltpu

FEATURE_DIM = 128                                   # nn.Linear(128, 128)
_VMEM_LIMIT_BYTES = 32 * 1024 * 1024                # explicit scoped VMEM limit
_VMEM_TILE_BUDGET = _VMEM_LIMIT_BYTES // 2          # working set target (~half)


# ----------------------------------------------------------------------------
# Kernel
# ----------------------------------------------------------------------------
def _cross_attn_kernel(sm_ref, im_ref, wkv_ref, bkv_ref, wq_ref, bq_ref,
                       wd_ref, bd_ref, out_ref,
                       q_sc, m_sc, l_sc, acc_sc, *, compute_dtype):
    D = FEATURE_DIM
    Bt, Sk_t, _ = sm_ref.shape
    _, Sq_t, _ = im_ref.shape
    k_idx = pl.program_id(2)

    @pl.when(k_idx == 0)
    def _init():
        # Q projection (softmax scale already folded into wq/bq), computed once
        # per (batch, q) tile and kept resident in VMEM across the S_k loop.
        im2d = im_ref[...].reshape(Bt * Sq_t, D).astype(compute_dtype)
        q = jnp.dot(im2d, wq_ref[...],
                    preferred_element_type=jnp.float32) + bq_ref[...]
        q_sc[...] = q.reshape(Bt, Sq_t, D).astype(q_sc.dtype)
        m_sc[...] = jnp.full(m_sc.shape, -jnp.inf, m_sc.dtype)
        l_sc[...] = jnp.zeros(l_sc.shape, l_sc.dtype)
        acc_sc[...] = jnp.zeros(acc_sc.shape, acc_sc.dtype)

    # Fused K/V projection for this S_k tile: one (Bt*Sk_t, D) @ (D, 2D) matmul
    # (N=256 matches the v6e/v7x MXU width); the D=128 slice is lane-aligned.
    sm2d = sm_ref[...].reshape(Bt * Sk_t, D).astype(compute_dtype)
    kv = jnp.dot(sm2d, wkv_ref[...],
                 preferred_element_type=jnp.float32) + bkv_ref[...]
    k_mat = kv[:, :D].reshape(Bt, Sk_t, D).astype(compute_dtype)
    v_mat = kv[:, D:].reshape(Bt, Sk_t, D).astype(compute_dtype)

    # energy = (Q/sqrt(128)) @ K^T; the transpose is folded into the MXU
    # operand by the einsum (no XLU transpose), accumulation in f32.
    s = jnp.einsum("bqd,bkd->bqk", q_sc[...], k_mat,
                   preferred_element_type=jnp.float32)

    # Flash-style online softmax over the S_k grid axis (all stats in f32;
    # exactly one exp per energy element to keep the single EUP slot light).
    m_prev = m_sc[...]
    m_new = jnp.maximum(m_prev, jnp.max(s, axis=-1, keepdims=True))
    alpha = jnp.exp(m_prev - m_new)
    p = jnp.exp(s - m_new)
    l_sc[...] = alpha * l_sc[...] + jnp.sum(p, axis=-1, keepdims=True)
    acc_sc[...] = alpha * acc_sc[...] + jnp.einsum(
        "bqk,bkd->bqd", p.astype(compute_dtype), v_mat,
        preferred_element_type=jnp.float32)
    m_sc[...] = m_new

    @pl.when(k_idx == pl.num_programs(2) - 1)
    def _finalize():
        # Exact normalization (the approx reciprocal broke the reference check),
        # then the decoder linear on the flattened (Bt*Sq_t, D) tile.
        fusion = acc_sc[...] / l_sc[...]
        out = jnp.dot(fusion.reshape(Bt * Sq_t, D).astype(compute_dtype),
                      wd_ref[...],
                      preferred_element_type=jnp.float32) + bd_ref[...]
        out_ref[...] = out.reshape(Bt, Sq_t, D).astype(out_ref.dtype)


# ----------------------------------------------------------------------------
# Tiling heuristics (VMEM-budget + MXU-row-target driven)
# ----------------------------------------------------------------------------
def _largest_divisor_at_most(n, cap):
    cap = int(max(1, min(n, cap)))
    for d in range(cap, 0, -1):
        if n % d == 0:
            return d
    return 1


def _pick_seq_tile(S, cap=512):
    """Largest divisor of S <= cap, preferring multiples of 8 so the in-kernel
    (Bt, S, 128) <-> (Bt*S, 128) reshapes preserve (8, 128) sublane tiling."""
    if S <= cap:
        return S
    best8 = 0
    for d in range(8, cap + 1, 8):
        if S % d == 0:
            best8 = d
    return best8 if best8 else _largest_divisor_at_most(S, cap)


def _pick_batch_tile(B, q_tile, k_tile, in_itemsize, c_itemsize,
                     tile_budget=_VMEM_TILE_BUDGET):
    D = FEATURE_DIM
    # Per-step, per-batch-element working set (bytes): double-buffered I/O
    # tiles (BlockSpec pipelining), per-(b,q) scratch, and in-kernel
    # intermediates (energy/p are the quadratic term the tiling bounds).
    per_b = (2 * k_tile * D * in_itemsize          # smiles tile  (x2 buffers)
             + 2 * q_tile * D * in_itemsize        # image tile   (x2 buffers)
             + 2 * q_tile * D * 4                  # output tile  (x2 buffers)
             + q_tile * D * (c_itemsize + 4)       # Q scratch + f32 acc scratch
             + 2 * q_tile * 4                      # m / l scratch
             + 2 * q_tile * k_tile * 4             # energy + exp(energy), f32
             + k_tile * 2 * D * 4                  # fused KV projection, f32
             + 2 * k_tile * D * c_itemsize)        # K and V in compute dtype
    weight_bytes = 2 * (4 * D * D * c_itemsize + 4 * D * 4)   # resident weights
    bt_vmem = max(1, (tile_budget - weight_bytes) // per_b)
    # ~512 LHS rows per projection matmul keeps the 256-wide MXU (v6e/v7x) fed.
    bt_rows = max(1, -(-512 // q_tile))
    bt = _largest_divisor_at_most(B, min(bt_vmem, bt_rows))
    # Prefer a few grid steps along the batch axis (pipeline steady state and
    # both v7x TensorCores) as long as each step keeps >= ~256 LHS rows.
    while B // bt < 4 and bt > 1 and (bt // 2) * q_tile >= 256:
        bt = _largest_divisor_at_most(B, bt // 2)
    if B > 1 and B // bt < 2:
        bt = _largest_divisor_at_most(B, max(1, bt // 2))
    return bt


# ----------------------------------------------------------------------------
# Parameter prep (one-time, hoisted out of the per-call path)
# ----------------------------------------------------------------------------
def prepare_params(params, compute_dtype=jnp.bfloat16):
    """params = (wv, bv, wk, bk, wq, bq, wd, bd); weights already transposed to
    [D_in, D_out], biases [1, D_out] (so y = x @ W + b matches nn.Linear).

    Fuses K/V weights into one (D, 2D) matmul, folds the 1/sqrt(128) softmax
    scale (PyTorch hardcodes 128.0) into the Q projection, and casts the MXU
    operands to compute_dtype.  Biases stay f32 (added to f32 accumulators)."""
    wv, bv, wk, bk, wq, bq, wd, bd = params
    scale = jnp.float32(1.0 / math.sqrt(128.0))
    wkv = jnp.concatenate([wk, wv], axis=1)            # (D, 2D)
    bkv = jnp.concatenate([bk, bv], axis=1)            # (1, 2D)
    return (wkv.astype(compute_dtype), bkv.astype(jnp.float32),
            (wq * scale).astype(compute_dtype), (bq * scale).astype(jnp.float32),
            wd.astype(compute_dtype), bd.astype(jnp.float32))


# ----------------------------------------------------------------------------
# Wrapper
# ----------------------------------------------------------------------------
def cross_attention_fusion(smiles_features, image_features, prepared_params, *,
                           batch_tile=None, q_tile=None, k_tile=None):
    """smiles_features: [B, S_k, 128], image_features: [B, S_q, 128] (float32).
    prepared_params: output of prepare_params()."""
    B, S_k, D = smiles_features.shape
    Bq, S_q, Dq = image_features.shape
    assert D == FEATURE_DIM and Dq == FEATURE_DIM and Bq == B

    wkv, bkv, wq, bq, wd, bd = prepared_params
    compute_dtype = wq.dtype

    if q_tile is None:
        q_tile = _pick_seq_tile(S_q)
    if k_tile is None:
        k_tile = _pick_seq_tile(S_k)
    assert S_q % q_tile == 0 and S_k % k_tile == 0
    if batch_tile is None:
        batch_tile = _pick_batch_tile(
            B, q_tile, k_tile,
            smiles_features.dtype.itemsize, jnp.dtype(compute_dtype).itemsize)
    assert B % batch_tile == 0, "batch_tile must divide B"
    # TODO(synk): S_q/S_k that are not multiples of 8 stay correct but can
    # trigger relayout copies around the in-kernel reshapes; pad wrapper-side
    # if such shapes become common.

    grid = (B // batch_tile, S_q // q_tile, S_k // k_tile)

    def mat_spec(n):
        return pl.BlockSpec((D, n), lambda b, q, k: (0, 0))

    def vec_spec(n):
        return pl.BlockSpec((1, n), lambda b, q, k: (0, 0))

    kernel = functools.partial(_cross_attn_kernel, compute_dtype=compute_dtype)

    return pl.pallas_call(
        kernel,
        out_shape=jax.ShapeDtypeStruct((B, S_q, D), image_features.dtype),
        grid_spec=pltpu.PrefetchScalarGridSpec(
            num_scalar_prefetch=0,
            grid=grid,
            in_specs=[
                pl.BlockSpec((batch_tile, k_tile, D), lambda b, q, k: (b, k, 0)),
                pl.BlockSpec((batch_tile, q_tile, D), lambda b, q, k: (b, q, 0)),
                mat_spec(2 * D), vec_spec(2 * D),   # fused K/V projection
                mat_spec(D), vec_spec(D),           # Q projection (scale folded)
                mat_spec(D), vec_spec(D),           # decoder
            ],
            out_specs=pl.BlockSpec((batch_tile, q_tile, D),
                                   lambda b, q, k: (b, q, 0)),
            scratch_shapes=[
                pltpu.VMEM((batch_tile, q_tile, D), compute_dtype),   # Q
                pltpu.VMEM((batch_tile, q_tile, 1), jnp.float32),     # running max
                pltpu.VMEM((batch_tile, q_tile, 1), jnp.float32),     # running sum
                pltpu.VMEM((batch_tile, q_tile, D), jnp.float32),     # accumulator
            ],
        ),
        compiler_params=pltpu.CompilerParams(
            dimension_semantics=("parallel", "parallel", "arbitrary"),
            vmem_limit_bytes=_VMEM_LIMIT_BYTES),
    )(smiles_features, image_features, wkv, bkv, wq, bq, wd, bd)


# ----------------------------------------------------------------------------
# Reference / init
# ----------------------------------------------------------------------------
def init_params(key, feature_dim=FEATURE_DIM):
    """nn.Linear-style U(-1/sqrt(fan_in), 1/sqrt(fan_in)) init; weights are
    returned already transposed to [D_in, D_out], biases as [1, D_out]."""
    bound = 1.0 / math.sqrt(feature_dim)
    keys = jax.random.split(key, 8)
    params = []
    for i in range(4):  # v_proj, k_proj, q_proj, decoder
        w = jax.random.uniform(keys[2 * i], (feature_dim, feature_dim),
                               jnp.float32, -bound, bound)
        b = jax.random.uniform(keys[2 * i + 1], (1, feature_dim),
                               jnp.float32, -bound, bound)
        params += [w, b]
    return tuple(params)


def reference(smiles_features, image_features, params):
    wv, bv, wk, bk, wq, bq, wd, bd = params
    V = smiles_features @ wv + bv
    K = smiles_features @ wk + bk
    Q = image_features @ wq + bq
    energy = jnp.einsum("bqd,bkd->bqk", Q, K) / jnp.sqrt(jnp.float32(128.0))
    attention = jax.nn.softmax(energy, axis=-1)
    fusion = jnp.einsum("bqk,bkd->bqd", attention, V)
    return fusion @ wd + bd


if __name__ == "__main__":
    key = jax.random.PRNGKey(0)
    k_sm, k_im, k_p = jax.random.split(key, 3)

    B, S_k, S_q, D = 2, 8, 8, FEATURE_DIM
    smiles_features = jax.random.normal(k_sm, (B, S_k, D), jnp.float32)
    image_features = jax.random.normal(k_im, (B, S_q, D), jnp.float32)
    params = init_params(k_p, D)

    # Strict check: f32 compute path vs. pure-JAX reference, with full-precision
    # matmuls on both sides so the comparison is backend-agnostic.
    with jax.default_matmul_precision("float32"):
        ref = reference(smiles_features, image_features, params)
        out_f32 = cross_attention_fusion(
            smiles_features, image_features,
            prepare_params(params, compute_dtype=jnp.float32))
        out_f32 = jax.block_until_ready(out_f32)
    assert out_f32.shape == (B, S_q, D)
    assert jnp.allclose(out_f32, ref, atol=1e-4, rtol=1e-4), "f32 path mismatch"

    # Default (performance) path: bf16 MXU operands with f32 accumulation;
    # tolerance reflects bf16 operand rounding.
    out = cross_attention_fusion(smiles_features, image_features,
                                 prepare_params(params))
    out = jax.block_until_ready(out)
    assert out.shape == (B, S_q, D)
    assert jnp.allclose(out, ref, atol=5e-2, rtol=5e-2), "bf16 path mismatch"

    print("KERNEL_OK")
</pallas_src>

<mosaic_0001>
module attributes {stable_mosaic.version = 11 : i64} {
  func.func @_cross_attn_kernel(%arg0: i32, %arg1: i32, %arg2: i32, %arg3: memref<1x8x128xf32, #tpu.memory_space<vmem>>, %arg4: memref<1x8x128xf32, #tpu.memory_space<vmem>>, %arg5: memref<128x256xf32, #tpu.memory_space<vmem>>, %arg6: memref<1x256xf32, #tpu.memory_space<vmem>>, %arg7: memref<128x128xf32, #tpu.memory_space<vmem>>, %arg8: memref<1x128xf32, #tpu.memory_space<vmem>>, %arg9: memref<128x128xf32, #tpu.memory_space<vmem>>, %arg10: memref<1x128xf32, #tpu.memory_space<vmem>>, %arg11: memref<1x8x128xf32, #tpu.memory_space<vmem>>, %arg12: memref<1x8x128xf32, #tpu.memory_space<vmem>>, %arg13: memref<1x8x1xf32, #tpu.memory_space<vmem>>, %arg14: memref<1x8x1xf32, #tpu.memory_space<vmem>>, %arg15: memref<1x8x128xf32, #tpu.memory_space<vmem>>) attributes {dimension_semantics = [#tpu.dimension_semantics<parallel>, #tpu.dimension_semantics<parallel>, #tpu.dimension_semantics<arbitrary>], iteration_bounds = array<i64: 2, 1, 1>, scalar_prefetch = 0 : i64, scratch_operands = 4 : i64, tpu.core_type = #tpu.core_type<tc>, window_params = [{transform_indices = @transform_0, window_bounds = array<i64: 1, 8, 128>}, {transform_indices = @transform_1, window_bounds = array<i64: 1, 8, 128>}, {pipeline_mode = #tpu.pipeline_mode<synchronous>, transform_indices = @transform_2, window_bounds = array<i64: 128, 256>}, {pipeline_mode = #tpu.pipeline_mode<synchronous>, transform_indices = @transform_3, window_bounds = array<i64: 1, 256>}, {pipeline_mode = #tpu.pipeline_mode<synchronous>, transform_indices = @transform_4, window_bounds = array<i64: 128, 128>}, {pipeline_mode = #tpu.pipeline_mode<synchronous>, transform_indices = @transform_5, window_bounds = array<i64: 1, 128>}, {pipeline_mode = #tpu.pipeline_mode<synchronous>, transform_indices = @transform_6, window_bounds = array<i64: 128, 128>}, {pipeline_mode = #tpu.pipeline_mode<synchronous>, transform_indices = @transform_7, window_bounds = array<i64: 1, 128>}, {transform_indices = @transform_8, window_bounds = array<i64: 1, 8, 128>}]} {
    %c0_i32 = arith.constant 0 : i32
    %0 = arith.cmpi eq, %arg2, %c0_i32 : i32
    %1 = arith.extui %0 : i1 to i32
    %c0_i32_0 = arith.constant 0 : i32
    %2 = arith.cmpi ne, %1, %c0_i32_0 : i32
    scf.if %2 {
      %c0_34 = arith.constant 0 : index
      %c0_35 = arith.constant 0 : index
      %c0_36 = arith.constant 0 : index
      %41 = vector.load %arg4[%c0_34, %c0_35, %c0_36] : memref<1x8x128xf32, #tpu.memory_space<vmem>>, vector<1x8x128xf32>
      %42 = vector.shape_cast %41 : vector<1x8x128xf32> to vector<8x128xf32>
      %c0_37 = arith.constant 0 : index
      %c0_38 = arith.constant 0 : index
      %43 = vector.load %arg7[%c0_37, %c0_38] : memref<128x128xf32, #tpu.memory_space<vmem>>, vector<128x128xf32>
      %cst_39 = arith.constant dense<0.000000e+00> : vector<8x128xf32>
      %44 = tpu.matmul %42, %43, %cst_39 {dimension_numbers = #tpu.dot_dimension_numbers<[1], [0], [0], [1], [0, 0, 1, 1], [], []>, precision = #tpu.contract_precision<fp32>} : vector<8x128xf32>, vector<128x128xf32>, vector<8x128xf32> -> vector<8x128xf32>
      %c0_40 = arith.constant 0 : index
      %c0_41 = arith.constant 0 : index
      %45 = vector.load %arg8[%c0_40, %c0_41] : memref<1x128xf32, #tpu.memory_space<vmem>>, vector<1x128xf32>
      %46 = vector.broadcast %45 : vector<1x128xf32> to vector<8x128xf32>
      %47 = arith.addf %44, %46 : vector<8x128xf32>
      %48 = vector.shape_cast %47 : vector<8x128xf32> to vector<1x8x128xf32>
      %c0_42 = arith.constant 0 : index
      %c0_43 = arith.constant 0 : index
      %c0_44 = arith.constant 0 : index
      %49 = vector.load %arg12[%c0_42, %c0_43, %c0_44] : memref<1x8x128xf32, #tpu.memory_space<vmem>>, vector<1x8x128xf32>
      tpu.vector_store %arg12[%c0_42, %c0_43, %c0_44], %48 {strides = array<i32>} : memref<1x8x128xf32, #tpu.memory_space<vmem>>, vector<1x8x128xf32>,
      %cst_45 = arith.constant 0xFF800000 : f32
      %50 = vector.broadcast %cst_45 : f32 to vector<1x8x1xf32>
      %c0_46 = arith.constant 0 : index
      %c0_47 = arith.constant 0 : index
      %c0_48 = arith.constant 0 : index
      %51 = vector.load %arg13[%c0_46, %c0_47, %c0_48] : memref<1x8x1xf32, #tpu.memory_space<vmem>>, vector<1x8x1xf32>
      tpu.vector_store %arg13[%c0_46, %c0_47, %c0_48], %50 {strides = array<i32>} : memref<1x8x1xf32, #tpu.memory_space<vmem>>, vector<1x8x1xf32>,
      %cst_49 = arith.constant 0.000000e+00 : f32
      %52 = vector.broadcast %cst_49 : f32 to vector<1x8x1xf32>
      %c0_50 = arith.constant 0 : index
      %c0_51 = arith.constant 0 : index
      %c0_52 = arith.constant 0 : index
      %53 = vector.load %arg14[%c0_50, %c0_51, %c0_52] : memref<1x8x1xf32, #tpu.memory_space<vmem>>, vector<1x8x1xf32>
      tpu.vector_store %arg14[%c0_50, %c0_51, %c0_52], %52 {strides = array<i32>} : memref<1x8x1xf32, #tpu.memory_space<vmem>>, vector<1x8x1xf32>,
      %cst_53 = arith.constant 0.000000e+00 : f32
      %54 = vector.broadcast %cst_53 : f32 to vector<1x8x128xf32>
      %c0_54 = arith.constant 0 : index
      %c0_55 = arith.constant 0 : index
      %c0_56 = arith.constant 0 : index
      %55 = vector.load %arg15[%c0_54, %c0_55, %c0_56] : memref<1x8x128xf32, #tpu.memory_space<vmem>>, vector<1x8x128xf32>
      tpu.vector_store %arg15[%c0_54, %c0_55, %c0_56], %54 {strides = array<i32>} : memref<1x8x128xf32, #tpu.memory_space<vmem>>, vector<1x8x128xf32>,
    } else {
    }
    %c0 = arith.constant 0 : index
    %c0_1 = arith.constant 0 : index
    %c0_2 = arith.constant 0 : index
    %3 = vector.load %arg3[%c0, %c0_1, %c0_2] : memref<1x8x128xf32, #tpu.memory_space<vmem>>, vector<1x8x128xf32>
    %4 = vector.shape_cast %3 : vector<1x8x128xf32> to vector<8x128xf32>
    %c0_3 = arith.constant 0 : index
    %c0_4 = arith.constant 0 : index
    %5 = vector.load %arg5[%c0_3, %c0_4] : memref<128x256xf32, #tpu.memory_space<vmem>>, vector<128x256xf32>
    %cst = arith.constant dense<0.000000e+00> : vector<8x256xf32>
    %6 = tpu.matmul %4, %5, %cst {dimension_numbers = #tpu.dot_dimension_numbers<[1], [0], [0], [1], [0, 0, 1, 1], [], []>, precision = #tpu.contract_precision<fp32>} : vector<8x128xf32>, vector<128x256xf32>, vector<8x256xf32> -> vector<8x256xf32>
    %c0_5 = arith.constant 0 : index
    %c0_6 = arith.constant 0 : index
    %7 = vector.load %arg6[%c0_5, %c0_6] : memref<1x256xf32, #tpu.memory_space<vmem>>, vector<1x256xf32>
    %8 = vector.broadcast %7 : vector<1x256xf32> to vector<8x256xf32>
    %9 = arith.addf %6, %8 : vector<8x256xf32>
    %10 = vector.extract_strided_slice %9 {offsets = [0, 0], sizes = [8, 128], strides = [1, 1]} : vector<8x256xf32> to vector<8x128xf32>
    %11 = vector.shape_cast %10 : vector<8x128xf32> to vector<1x8x128xf32>
    %12 = vector.extract_strided_slice %9 {offsets = [0, 128], sizes = [8, 128], strides = [1, 1]} : vector<8x256xf32> to vector<8x128xf32>
    %13 = vector.shape_cast %12 : vector<8x128xf32> to vector<1x8x128xf32>
    %c0_7 = arith.constant 0 : index
    %c0_8 = arith.constant 0 : index
    %c0_9 = arith.constant 0 : index
    %14 = vector.load %arg12[%c0_7, %c0_8, %c0_9] : memref<1x8x128xf32, #tpu.memory_space<vmem>>, vector<1x8x128xf32>
    "tpu.trace_start"() <{level = 10 : i32, message = "bqd,bkd->bqk"}> : () -> ()
    %cst_10 = arith.constant dense<0.000000e+00> : vector<1x8x8xf32>
    %15 = tpu.matmul %14, %11, %cst_10 {dimension_numbers = #tpu.dot_dimension_numbers<[2], [2], [1], [1], [0, 0, 0, 1, 1, 1], [0], [0]>, precision = #tpu.contract_precision<fp32>} : vector<1x8x128xf32>, vector<1x8x128xf32>, vector<1x8x8xf32> -> vector<1x8x8xf32>
    "tpu.trace_stop"() : () -> ()
    %c0_11 = arith.constant 0 : index
    %c0_12 = arith.constant 0 : index
    %c0_13 = arith.constant 0 : index
    %16 = vector.load %arg13[%c0_11, %c0_12, %c0_13] : memref<1x8x1xf32, #tpu.memory_space<vmem>>, vector<1x8x1xf32>
    %cst_14 = arith.constant dense<0xFF800000> : vector<1x8xf32>
    %17 = vector.multi_reduction <maximumf>, %15, %cst_14 [2] : vector<1x8x8xf32> to vector<1x8xf32>
    %18 = vector.shape_cast %17 : vector<1x8xf32> to vector<1x8x1xf32>
    %19 = arith.maximumf %16, %18 : vector<1x8x1xf32>
    %20 = arith.subf %16, %19 : vector<1x8x1xf32>
    %21 = math.exp %20 : vector<1x8x1xf32>
    %22 = vector.broadcast %19 : vector<1x8x1xf32> to vector<1x8x8xf32>
    %23 = arith.subf %15, %22 : vector<1x8x8xf32>
    %24 = math.exp %23 : vector<1x8x8xf32>
    %c0_15 = arith.constant 0 : index
    %c0_16 = arith.constant 0 : index
    %c0_17 = arith.constant 0 : index
    %25 = vector.load %arg14[%c0_15, %c0_16, %c0_17] : memref<1x8x1xf32, #tpu.memory_space<vmem>>, vector<1x8x1xf32>
    %26 = arith.mulf %21, %25 : vector<1x8x1xf32>
    %cst_18 = arith.constant dense<0.000000e+00> : vector<1x8xf32>
    %27 = vector.multi_reduction <add>, %24, %cst_18 [2] : vector<1x8x8xf32> to vector<1x8xf32>
    %28 = vector.shape_cast %27 : vector<1x8xf32> to vector<1x8x1xf32>
    %29 = arith.addf %26, %28 : vector<1x8x1xf32>
    %c0_19 = arith.constant 0 : index
    %c0_20 = arith.constant 0 : index
    %c0_21 = arith.constant 0 : index
    %30 = vector.load %arg14[%c0_19, %c0_20, %c0_21] : memref<1x8x1xf32, #tpu.memory_space<vmem>>, vector<1x8x1xf32>
    tpu.vector_store %arg14[%c0_19, %c0_20, %c0_21], %29 {strides = array<i32>} : memref<1x8x1xf32, #tpu.memory_space<vmem>>, vector<1x8x1xf32>,
    %c0_22 = arith.constant 0 : index
    %c0_23 = arith.constant 0 : index
    %c0_24 = arith.constant 0 : index
    %31 = vector.load %arg15[%c0_22, %c0_23, %c0_24] : memref<1x8x128xf32, #tpu.memory_space<vmem>>, vector<1x8x128xf32>
    %32 = vector.broadcast %21 : vector<1x8x1xf32> to vector<1x8x128xf32>
    %33 = arith.mulf %32, %31 : vector<1x8x128xf32>
    "tpu.trace_start"() <{level = 10 : i32, message = "bqk,bkd->bqd"}> : () -> ()
    %cst_25 = arith.constant dense<0.000000e+00> : vector<1x8x128xf32>
    %34 = tpu.matmul %24, %13, %cst_25 {dimension_numbers = #tpu.dot_dimension_numbers<[2], [1], [1], [2], [0, 0, 0, 1, 1, 2], [0], [0]>, precision = #tpu.contract_precision<fp32>} : vector<1x8x8xf32>, vector<1x8x128xf32>, vector<1x8x128xf32> -> vector<1x8x128xf32>
    "tpu.trace_stop"() : () -> ()
    %35 = arith.addf %33, %34 : vector<1x8x128xf32>
    %c0_26 = arith.constant 0 : index
    %c0_27 = arith.constant 0 : index
    %c0_28 = arith.constant 0 : index
    %36 = vector.load %arg15[%c0_26, %c0_27, %c0_28] : memref<1x8x128xf32, #tpu.memory_space<vmem>>, vector<1x8x128xf32>
    tpu.vector_store %arg15[%c0_26, %c0_27, %c0_28], %35 {strides = array<i32>} : memref<1x8x128xf32, #tpu.memory_space<vmem>>, vector<1x8x128xf32>,
    %c0_29 = arith.constant 0 : index
    %c0_30 = arith.constant 0 : index
    %c0_31 = arith.constant 0 : index
    %37 = vector.load %arg13[%c0_29, %c0_30, %c0_31] : memref<1x8x1xf32, #tpu.memory_space<vmem>>, vector<1x8x1xf32>
    tpu.vector_store %arg13[%c0_29, %c0_30, %c0_31], %19 {strides = array<i32>} : memref<1x8x1xf32, #tpu.memory_space<vmem>>, vector<1x8x1xf32>,
    %c0_i32_32 = arith.constant 0 : i32
    %38 = arith.cmpi eq, %arg2, %c0_i32_32 : i32
    %39 = arith.extui %38 : i1 to i32
    %c0_i32_33 = arith.constant 0 : i32
    %40 = arith.cmpi ne, %39, %c0_i32_33 : i32
    scf.if %40 {
      %c0_34 = arith.constant 0 : index
      %c0_35 = arith.constant 0 : index
      %c0_36 = arith.constant 0 : index
      %41 = vector.load %arg15[%c0_34, %c0_35, %c0_36] : memref<1x8x128xf32, #tpu.memory_space<vmem>>, vector<1x8x128xf32>
      %c0_37 = arith.constant 0 : index
      %c0_38 = arith.constant 0 : index
      %c0_39 = arith.constant 0 : index
      %42 = vector.load %arg14[%c0_37, %c0_38, %c0_39] : memref<1x8x1xf32, #tpu.memory_space<vmem>>, vector<1x8x1xf32>
      %43 = vector.broadcast %42 : vector<1x8x1xf32> to vector<1x8x128xf32>
      %44 = arith.divf %41, %43 : vector<1x8x128xf32>
      %45 = vector.shape_cast %44 : vector<1x8x128xf32> to vector<8x128xf32>
      %c0_40 = arith.constant 0 : index
      %c0_41 = arith.constant 0 : index
      %46 = vector.load %arg9[%c0_40, %c0_41] : memref<128x128xf32, #tpu.memory_space<vmem>>, vector<128x128xf32>
      %cst_42 = arith.constant dense<0.000000e+00> : vector<8x128xf32>
      %47 = tpu.matmul %45, %46, %cst_42 {dimension_numbers = #tpu.dot_dimension_numbers<[1], [0], [0], [1], [0, 0, 1, 1], [], []>, precision = #tpu.contract_precision<fp32>} : vector<8x128xf32>, vector<128x128xf32>, vector<8x128xf32> -> vector<8x128xf32>
      %c0_43 = arith.constant 0 : index
      %c0_44 = arith.constant 0 : index
      %48 = vector.load %arg10[%c0_43, %c0_44] : memref<1x128xf32, #tpu.memory_space<vmem>>, vector<1x128xf32>
      %49 = vector.broadcast %48 : vector<1x128xf32> to vector<8x128xf32>
      %50 = arith.addf %47, %49 : vector<8x128xf32>
      %51 = vector.shape_cast %50 : vector<8x128xf32> to vector<1x8x128xf32>
      %c0_45 = arith.constant 0 : index
      %c0_46 = arith.constant 0 : index
      %c0_47 = arith.constant 0 : index
      %52 = vector.load %arg11[%c0_45, %c0_46, %c0_47] : memref<1x8x128xf32, #tpu.memory_space<vmem>>, vector<1x8x128xf32>
      tpu.vector_store %arg11[%c0_45, %c0_46, %c0_47], %51 {strides = array<i32>} : memref<1x8x128xf32, #tpu.memory_space<vmem>>, vector<1x8x128xf32>,
    } else {
    }
    return
  }
  func.func @transform_0(%arg0: i32, %arg1: i32, %arg2: i32) -> (i32, i32, i32) {
    %c0_i32 = arith.constant 0 : i32
    %c0_i32_0 = arith.constant 0 : i32
    return %arg0, %arg2, %c0_i32 : i32, i32, i32
  }
  func.func @transform_1(%arg0: i32, %arg1: i32, %arg2: i32) -> (i32, i32, i32) {
    %c0_i32 = arith.constant 0 : i32
    %c0_i32_0 = arith.constant 0 : i32
    return %arg0, %arg1, %c0_i32 : i32, i32, i32
  }
  func.func @transform_2(%arg0: i32, %arg1: i32, %arg2: i32) -> (i32, i32) {
    %c0_i32 = arith.constant 0 : i32
    %c0_i32_0 = arith.constant 0 : i32
    %c0_i32_1 = arith.constant 0 : i32
    return %c0_i32, %c0_i32_0 : i32, i32
  }
  func.func @transform_3(%arg0: i32, %arg1: i32, %arg2: i32) -> (i32, i32) {
    %c0_i32 = arith.constant 0 : i32
    %c0_i32_0 = arith.constant 0 : i32
    %c0_i32_1 = arith.constant 0 : i32
    return %c0_i32, %c0_i32_0 : i32, i32
  }
  func.func @transform_4(%arg0: i32, %arg1: i32, %arg2: i32) -> (i32, i32) {
    %c0_i32 = arith.constant 0 : i32
    %c0_i32_0 = arith.constant 0 : i32
    %c0_i32_1 = arith.constant 0 : i32
    return %c0_i32, %c0_i32_0 : i32, i32
  }
  func.func @transform_5(%arg0: i32, %arg1: i32, %arg2: i32) -> (i32, i32) {
    %c0_i32 = arith.constant 0 : i32
    %c0_i32_0 = arith.constant 0 : i32
    %c0_i32_1 = arith.constant 0 : i32
    return %c0_i32, %c0_i32_0 : i32, i32
  }
  func.func @transform_6(%arg0: i32, %arg1: i32, %arg2: i32) -> (i32, i32) {
    %c0_i32 = arith.constant 0 : i32
    %c0_i32_0 = arith.constant 0 : i32
    %c0_i32_1 = arith.constant 0 : i32
    return %c0_i32, %c0_i32_0 : i32, i32
  }
  func.func @transform_7(%arg0: i32, %arg1: i32, %arg2: i32) -> (i32, i32) {
    %c0_i32 = arith.constant 0 : i32
    %c0_i32_0 = arith.constant 0 : i32
    %c0_i32_1 = arith.constant 0 : i32
    return %c0_i32, %c0_i32_0 : i32, i32
  }
  func.func @transform_8(%arg0: i32, %arg1: i32, %arg2: i32) -> (i32, i32, i32) {
    %c0_i32 = arith.constant 0 : i32
    %c0_i32_0 = arith.constant 0 : i32
    return %arg0, %arg1, %c0_i32 : i32, i32, i32
  }
}

</mosaic_0001>

<llo_original>
// kernel: tpu_custom_call.1
$region0: #{tpu_custom_call.1}
  #allocation0 [shape = 'u32[]', space=smem, size = 0x4, offset = 0x4, fixed_abs, tag = 'smem constant byte address 0x4 - core index']
  #allocation1 [shape = 'u32[144,128]{1,0:T(1,128)}', space=vmem, size = 0x12000, scoped, tag = 'internal scratch']
  #allocation2 [shape = 'f32[1,8,128]{2,1,0:T(8,128)}', space=vmem, size = 0x1000, scoped, tag = 'scratch operand']
  #allocation3 [shape = 'f32[1,8,1]{2,1,0:T(8,128)}', space=vmem, size = 0x1000, scoped, tag = 'scratch operand']
  #allocation4 [shape = 'f32[1,8,1]{2,1,0:T(8,128)}', space=vmem, size = 0x1000, scoped, tag = 'scratch operand']
  #allocation5 [shape = 'f32[1,8,128]{2,1,0:T(8,128)}', space=vmem, size = 0x1000, scoped, tag = 'scratch operand']
  %s0 = inlined_call_operand.hbm [shape: f32[2,8,128], index: 0, kind: input, shape index: {}]
  %s1 = inlined_call_operand.hbm [shape: f32[2,8,128], index: 1, kind: input, shape index: {}]
  %s2 = inlined_call_operand.hbm [shape: f32[128,256], index: 2, kind: input, shape index: {}]
  %s3 = inlined_call_operand.vmem [shape: f32[1,256], index: 3, kind: input, shape index: {}]
  %s4 = inlined_call_operand.hbm [shape: f32[128,128], index: 4, kind: input, shape index: {}]
  %s5 = inlined_call_operand.vmem [shape: f32[1,128], index: 5, kind: input, shape index: {}]
  %s6 = inlined_call_operand.hbm [shape: f32[128,128], index: 6, kind: input, shape index: {}]
  %s7 = inlined_call_operand.vmem [shape: f32[1,128], index: 7, kind: input, shape index: {}]
  %s8 = inlined_call_operand.hbm [shape: f32[2,8,128], index: 8, kind: output, shape index: {}]
  %s9 = sld [smem:[#allocation0]]
  $region93: #{tpu_custom_call.1} parent=0
    _
  %s11 = ssub.s32 1, %s9
  %s12 = scalar_select 0, %s11, %s9
  $region1: #{tpu_custom_call.1} parent=0
    #allocation6 [shape = 'u8[8192]{0}', space=vmem, size = 0x2000, scoped, tag = 'input window, operand 0']
    #allocation7 [shape = 's32[2]{0}', space=sflag, size = 0x8, scoped, tag = 'scoped memory for tpu_custom_call.1']
    #allocation8 [shape = 's32[2]{0}', space=sflag, size = 0x8, scoped, tag = 'scoped memory for tpu_custom_call.1']
    #allocation9 [shape = 'u8[8192]{0}', space=vmem, size = 0x2000, scoped, tag = 'input window, operand 1']
    #allocation10 [shape = 's32[2]{0}', space=sflag, size = 0x8, scoped, tag = 'scoped memory for tpu_custom_call.1']
    #allocation11 [shape = 'u8[131072]{0}', space=vmem, size = 0x20000, scoped, tag = 'input window, operand 2, single buffered']
    #allocation12 [shape = 'u8[65536]{0}', space=vmem, size = 0x10000, scoped, tag = 'input window, operand 4, single buffered']
    #allocation13 [shape = 's32[1]{0}', space=sflag, size = 0x4, scoped, tag = 'scoped memory for tpu_custom_call.1']
    #allocation14 [shape = 'u8[65536]{0}', space=vmem, size = 0x10000, scoped, tag = 'input window, operand 6, single buffered']
    #allocation15 [shape = 'u8[8192]{0}', space=vmem, size = 0x2000, scoped, tag = 'output window, operand 0']
    %13 = vsyncpa [#allocation7], 0
    %s14 = scalar_lea.sflag [#allocation7], 1
    %15 = vsyncpa %s14, 0
    %16 = vsyncpa [#allocation10], 0
    %s17 = scalar_lea.sflag [#allocation10], 1
    %18 = vsyncpa %s17, 0
    %19 = vsyncpa [#allocation13], 0
    %20 = vsyncpa [#allocation8], 0
    %s21 = scalar_lea.sflag [#allocation8], 1
    %22 = vsyncpa %s21, 0
    loop: start=0, step=1, limit=4
    $region2: #{tpu_custom_call.1} parent=1 // loop_pre_header
      _
    $region3: #{tpu_custom_call.1} parent=1 // loop_header
      %s24 = sphi 0, %s28
      %p25 = scmp.ge.s32.totalorder %s24, 4
      %s31 = sphi 0, %s50
      %s32 = sphi 0, %s46
      %s33 = sphi 0, %s42
      %s34 = sphi 0, %s31
      %s35 = sphi 0, %s32
      %s36 = sphi 0, %s33
      %s37 = sphi 0, %s34
      %s38 = sphi 0, %s35
      %s39 = sphi 0, %s36
      %s55 = sphi 0, %s57
      %s58 = sphi 0, %s55
      %s59 = sphi 0, %s58
      %s75 = sphi 0, %s59
      %s83 = sphi 0, %s85
      %s86 = sphi 0, %s83
      %s87 = sphi 0, %s86
      %s103 = sphi 0, %s87
      %s107 = sphi 0, %s107
      %s109 = sphi 0, %s107
      %s110 = sphi 0, %s109
      %s124 = sphi 0, %s110
      %s128 = sphi 0, %s128
      %s130 = sphi 0, %s128
      %s131 = sphi 0, %s130
      %s145 = sphi 0, %s131
      %s149 = sphi 0, %s149
      %s151 = sphi 0, %s149
      %s152 = sphi 0, %s151
      %s166 = sphi 0, %s152
      %s170 = sphi 0, %s170
      %s172 = sphi 0, %s170
      %s173 = sphi 0, %s172
      %s187 = sphi 0, %s173
      %s191 = sphi 0, %s191
      %s193 = sphi 0, %s191
      %s194 = sphi 0, %s193
      %s208 = sphi 0, %s194
      %s212 = sphi 0, %s212
      %s214 = sphi 0, %s212
      %s215 = sphi 0, %s214
      %s229 = sphi 0, %s215
      %s237 = sphi 0, %s239
      %s240 = sphi 0, %s237
      %s241 = sphi 0, %s240
      %s257 = sphi 0, %s241
    $region4: #{tpu_custom_call.1} parent=1 // loop_header_branch
      %27 = sbr.rel (%p25) target = $region8
    $region5: #{tpu_custom_call.1} parent=1 // loop_body
      %s29 = ssub.s32 %s24, 1
      %s30 = ssub.s32 %s24, 2
      %s40 = sadd.s32 1, %s33
      %p41 = scmp.ge.s32.totalorder %s40, 1
      %s42 = scalar_select %p41, 0, %s40
      %s43 = sadd.s32 1, %s32
      %s44 = scalar_select %p41, %s43, %s32
      %p45 = scmp.ge.s32.totalorder %s44, 1
      %s46 = scalar_select %p45, 0, %s44
      %s47 = sadd.s32 1, %s31
      %s48 = scalar_select %p45, %s47, %s31
      %p49 = scmp.ge.s32.totalorder %s48, 2
      %s50 = scalar_select %p49, 0, %s48
      %s51 = ssub.s32 %s31, %s50
      %s52 = ssub.s32 %s33, %s42
      %s53 = sor.u32 %s51, %s52
      %p54 = scmp.eq.s32.totalorder %s53, 0
      %s56 = sadd.s32 %s55, 1
      %s57 = scalar_select %p54, %s55, %s56
      %p60 = pneg %p54
      %p61 = scmp.eq.s32.totalorder %s24, 1
      %p62 = por %p60, %p61
      %p63 = scmp.ne.s32.totalorder %s55, %s58
      %p64 = scmp.eq.s32.totalorder %s24, 0
      %p65 = por %p63, %p64
      %p66 = scmp.ne.s32.totalorder %s55, %s58
      %p67 = scmp.eq.s32.totalorder %s29, 1
      %p68 = por %p66, %p67
      %p69 = scmp.ne.s32.totalorder %s58, %s59
      %p70 = scmp.eq.s32.totalorder %s29, 0
      %p71 = por %p69, %p70
      %p72 = scmp.ne.s32.totalorder %s58, %s59
      %p73 = scmp.eq.s32.totalorder %s30, 1
      %p74 = por %p72, %p73
      %p76 = scmp.ne.s32.totalorder %s59, %s75
      %p77 = scmp.eq.s32.totalorder %s30, 0
      %p78 = por %p76, %p77
      %s79 = ssub.s32 %s31, %s50
      %s80 = ssub.s32 %s32, %s46
      %s81 = sor.u32 %s79, %s80
      %p82 = scmp.eq.s32.totalorder %s81, 0
      %s84 = sadd.s32 %s83, 1
      %s85 = scalar_select %p82, %s83, %s84
      %p88 = pneg %p82
      %p89 = scmp.eq.s32.totalorder %s24, 1
      %p90 = por %p88, %p89
      %p91 = scmp.ne.s32.totalorder %s83, %s86
      %p92 = scmp.eq.s32.totalorder %s24, 0
      %p93 = por %p91, %p92
      %p94 = scmp.ne.s32.totalorder %s83, %s86
      %p95 = scmp.eq.s32.totalorder %s29, 1
      %p96 = por %p94, %p95
      %p97 = scmp.ne.s32.totalorder %s86, %s87
      %p98 = scmp.eq.s32.totalorder %s29, 0
      %p99 = por %p97, %p98
      %p100 = scmp.ne.s32.totalorder %s86, %s87
      %p101 = scmp.eq.s32.totalorder %s30, 1
      %p102 = por %p100, %p101
      %p104 = scmp.ne.s32.totalorder %s87, %s103
      %p105 = scmp.eq.s32.totalorder %s30, 0
      %p106 = por %p104, %p105
      %s108 = sadd.s32 %s107, 1
      %p111 = scmp.eq.s32.totalorder %s24, 1
      %p112 = scmp.ne.s32.totalorder %s107, %s109
      %p113 = scmp.eq.s32.totalorder %s24, 0
      %p114 = por %p112, %p113
      %p115 = scmp.ne.s32.totalorder %s107, %s109
      %p116 = scmp.eq.s32.totalorder %s29, 1
      %p117 = por %p115, %p116
      %p118 = scmp.ne.s32.totalorder %s109, %s110
      %p119 = scmp.eq.s32.totalorder %s29, 0
      %p120 = por %p118, %p119
      %p121 = scmp.ne.s32.totalorder %s109, %s110
      %p122 = scmp.eq.s32.totalorder %s30, 1
      %p123 = por %p121, %p122
      %p125 = scmp.ne.s32.totalorder %s110, %s124
      %p126 = scmp.eq.s32.totalorder %s30, 0
      %p127 = por %p125, %p126
      %s129 = sadd.s32 %s128, 1
      %p132 = scmp.eq.s32.totalorder %s24, 1
      %p133 = scmp.ne.s32.totalorder %s128, %s130
      %p134 = scmp.eq.s32.totalorder %s24, 0
      %p135 = por %p133, %p134
      %p136 = scmp.ne.s32.totalorder %s128, %s130
      %p137 = scmp.eq.s32.totalorder %s29, 1
      %p138 = por %p136, %p137
      %p139 = scmp.ne.s32.totalorder %s130, %s131
      %p140 = scmp.eq.s32.totalorder %s29, 0
      %p141 = por %p139, %p140
      %p142 = scmp.ne.s32.totalorder %s130, %s131
      %p143 = scmp.eq.s32.totalorder %s30, 1
      %p144 = por %p142, %p143
      %p146 = scmp.ne.s32.totalorder %s131, %s145
      %p147 = scmp.eq.s32.totalorder %s30, 0
      %p148 = por %p146, %p147
      %s150 = sadd.s32 %s149, 1
      %p153 = scmp.eq.s32.totalorder %s24, 1
      %p154 = scmp.ne.s32.totalorder %s149, %s151
      %p155 = scmp.eq.s32.totalorder %s24, 0
      %p156 = por %p154, %p155
      %p157 = scmp.ne.s32.totalorder %s149, %s151
      %p158 = scmp.eq.s32.totalorder %s29, 1
      %p159 = por %p157, %p158
      %p160 = scmp.ne.s32.totalorder %s151, %s152
      %p161 = scmp.eq.s32.totalorder %s29, 0
      %p162 = por %p160, %p161
      %p163 = scmp.ne.s32.totalorder %s151, %s152
      %p164 = scmp.eq.s32.totalorder %s30, 1
      %p165 = por %p163, %p164
      %p167 = scmp.ne.s32.totalorder %s152, %s166
      %p168 = scmp.eq.s32.totalorder %s30, 0
      %p169 = por %p167, %p168
      %s171 = sadd.s32 %s170, 1
      %p174 = scmp.eq.s32.totalorder %s24, 1
      %p175 = scmp.ne.s32.totalorder %s170, %s172
      %p176 = scmp.eq.s32.totalorder %s24, 0
      %p177 = por %p175, %p176
      %p178 = scmp.ne.s32.totalorder %s170, %s172
      %p179 = scmp.eq.s32.totalorder %s29, 1
      %p180 = por %p178, %p179
      %p181 = scmp.ne.s32.totalorder %s172, %s173
      %p182 = scmp.eq.s32.totalorder %s29, 0
      %p183 = por %p181, %p182
      %p184 = scmp.ne.s32.totalorder %s172, %s173
      %p185 = scmp.eq.s32.totalorder %s30, 1
      %p186 = por %p184, %p185
      %p188 = scmp.ne.s32.totalorder %s173, %s187
      %p189 = scmp.eq.s32.totalorder %s30, 0
      %p190 = por %p188, %p189
      %s192 = sadd.s32 %s191, 1
      %p195 = scmp.eq.s32.totalorder %s24, 1
      %p196 = scmp.ne.s32.totalorder %s191, %s193
      %p197 = scmp.eq.s32.totalorder %s24, 0
      %p198 = por %p196, %p197
      %p199 = scmp.ne.s32.totalorder %s191, %s193
      %p200 = scmp.eq.s32.totalorder %s29, 1
      %p201 = por %p199, %p200
      %p202 = scmp.ne.s32.totalorder %s193, %s194
      %p203 = scmp.eq.s32.totalorder %s29, 0
      %p204 = por %p202, %p203
      %p205 = scmp.ne.s32.totalorder %s193, %s194
      %p206 = scmp.eq.s32.totalorder %s30, 1
      %p207 = por %p205, %p206
      %p209 = scmp.ne.s32.totalorder %s194, %s208
      %p210 = scmp.eq.s32.totalorder %s30, 0
      %p211 = por %p209, %p210
      %s213 = sadd.s32 %s212, 1
      %p216 = scmp.eq.s32.totalorder %s24, 1
      %p217 = scmp.ne.s32.totalorder %s212, %s214
      %p218 = scmp.eq.s32.totalorder %s24, 0
      %p219 = por %p217, %p218
      %p220 = scmp.ne.s32.totalorder %s212, %s214
      %p221 = scmp.eq.s32.totalorder %s29, 1
      %p222 = por %p220, %p221
      %p223 = scmp.ne.s32.totalorder %s214, %s215
      %p224 = scmp.eq.s32.totalorder %s29, 0
      %p225 = por %p223, %p224
      %p226 = scmp.ne.s32.totalorder %s214, %s215
      %p227 = scmp.eq.s32.totalorder %s30, 1
      %p228 = por %p226, %p227
      %p230 = scmp.ne.s32.totalorder %s215, %s229
      %p231 = scmp.eq.s32.totalorder %s30, 0
      %p232 = por %p230, %p231
      %s233 = ssub.s32 %s31, %s50
      %s234 = ssub.s32 %s32, %s46
      %s235 = sor.u32 %s233, %s234
      %p236 = scmp.eq.s32.totalorder %s235, 0
      %s238 = sadd.s32 %s237, 1
      %s239 = scalar_select %p236, %s237, %s238
      %p242 = pneg %p236
      %p243 = scmp.eq.s32.totalorder %s24, 1
      %p244 = por %p242, %p243
      %p245 = scmp.ne.s32.totalorder %s237, %s240
      %p246 = scmp.eq.s32.totalorder %s24, 0
      %p247 = por %p245, %p246
      %p248 = scmp.ne.s32.totalorder %s237, %s240
      %p249 = scmp.eq.s32.totalorder %s29, 1
      %p250 = por %p248, %p249
      %p251 = scmp.ne.s32.totalorder %s240, %s241
      %p252 = scmp.eq.s32.totalorder %s29, 0
      %p253 = por %p251, %p252
      %p254 = scmp.ne.s32.totalorder %s240, %s241
      %p255 = scmp.eq.s32.totalorder %s30, 1
      %p256 = por %p254, %p255
      %p258 = scmp.ne.s32.totalorder %s241, %s257
      %p259 = scmp.eq.s32.totalorder %s30, 0
      %p260 = por %p258, %p259
      %p261 = scmp.le.s32.totalorder 1, %s24
      %p262 = scmp.lt.s32.totalorder %s24, 3
      %p263 = pnand %p261, %p262
      %p264 = pneg %p263
      // Predicated region
      $region9: #{tpu_custom_call.1} parent=5 // pred_check
        _
      $region10: #{tpu_custom_call.1} parent=5 // pred_check_branch
        %266 = sbr.rel (%p263) target = $region12
      $region11: #{tpu_custom_call.1} parent=5 // pred_region
        %s267 = ssub.s32 %s24, 1
        // Predicated region
        $region13: #{tpu_custom_call.1} parent=11 // pred_check
          %p268 = pneg %p120
        $region14: #{tpu_custom_call.1} parent=11 // pred_check_branch
          %270 = sbr.rel (%p268) target = $region16
        $region15: #{tpu_custom_call.1} parent=11 // pred_region
          %s272 = ssub.s32 4096, 4096
          %273 = vsyncadd [#allocation10], %s272
          %s274 = sshll.u32 [#allocation11], 4
          %s275 = int_to_ptr.vmem [resolvable:$true] %s274
          %280 = dma.hbm_to_vmem [thread:$0]  %s2, 4096, %s275, [#allocation10], 256, 256, 16
        $region16: #{tpu_custom_call.1} parent=11 // pred_fallthru
          _
        // Predicated region
        $region17: #{tpu_custom_call.1} parent=11 // pred_check
          %p281 = pneg %p141
        $region18: #{tpu_custom_call.1} parent=11 // pred_check_branch
          %283 = sbr.rel (%p281) target = $region20
        $region19: #{tpu_custom_call.1} parent=11 // pred_region
          _
        $region20: #{tpu_custom_call.1} parent=11 // pred_fallthru
          _
        // Predicated region
        $region21: #{tpu_custom_call.1} parent=11 // pred_check
          %p284 = pneg %p162
        $region22: #{tpu_custom_call.1} parent=11 // pred_check_branch
          %286 = sbr.rel (%p284) target = $region24
        $region23: #{tpu_custom_call.1} parent=11 // pred_region
          %s288 = ssub.s32 2048, 2048
          %289 = vsyncadd [#allocation13], %s288
          %s290 = sshll.u32 [#allocation12], 4
          %s291 = int_to_ptr.vmem [resolvable:$true] %s290
          %296 = dma.hbm_to_vmem [thread:$0]  %s4, 2048, %s291, [#allocation13], 128, 128, 8
        $region24: #{tpu_custom_call.1} parent=11 // pred_fallthru
          _
        // Predicated region
        $region25: #{tpu_custom_call.1} parent=11 // pred_check
          %p297 = pneg %p183
        $region26: #{tpu_custom_call.1} parent=11 // pred_check_branch
          %299 = sbr.rel (%p297) target = $region28
        $region27: #{tpu_custom_call.1} parent=11 // pred_region
          _
        $region28: #{tpu_custom_call.1} parent=11 // pred_fallthru
          _
        // Predicated region
        $region29: #{tpu_custom_call.1} parent=11 // pred_check
          %p300 = pneg %p204
        $region30: #{tpu_custom_call.1} parent=11 // pred_check_branch
          %302 = sbr.rel (%p300) target = $region32
        $region31: #{tpu_custom_call.1} parent=11 // pred_region
          %s304 = ssub.s32 2048, 2048
          %305 = vsyncadd [#allocation13], %s304
          %s306 = sshll.u32 [#allocation14], 4
          %s307 = int_to_ptr.vmem [resolvable:$true] %s306
          %312 = dma.hbm_to_vmem [thread:$0]  %s6, 2048, %s307, [#allocation13], 128, 128, 8
        $region32: #{tpu_custom_call.1} parent=11 // pred_fallthru
          _
        // Predicated region
        $region33: #{tpu_custom_call.1} parent=11 // pred_check
          %p313 = pneg %p225
        $region34: #{tpu_custom_call.1} parent=11 // pred_check_branch
          %315 = sbr.rel (%p313) target = $region36
        $region35: #{tpu_custom_call.1} parent=11 // pred_region
          _
        $region36: #{tpu_custom_call.1} parent=11 // pred_fallthru
          _
      $region12: #{tpu_custom_call.1} parent=5 // pred_fallthru
        _
      %p316 = scmp.lt.s32.totalorder %s24, 2
      // Predicated region
      $region37: #{tpu_custom_call.1} parent=5 // pred_check
        %p317 = pneg %p316
      $region38: #{tpu_custom_call.1} parent=5 // pred_check_branch
        %319 = sbr.rel (%p317) target = $region40
      $region39: #{tpu_custom_call.1} parent=5 // pred_region
        // Predicated region
        $region41: #{tpu_custom_call.1} parent=39 // pred_check
          %p320 = pneg %p65
        $region42: #{tpu_custom_call.1} parent=39 // pred_check_branch
          %322 = sbr.rel (%p320) target = $region44
        $region43: #{tpu_custom_call.1} parent=39 // pred_region
          %s323 = sand.u32 %s55, 1
          %s324 = scalar_lea.sflag [#allocation7], %s323
          %s325 = sand.u32 %s55, 1
          %s326 = smul.addr %s325, 8
          %s327 = scalar_lea.vmem [#allocation6], %s326
          %s329 = ssub.s32 128, 128
          %330 = vsyncadd %s324, %s329
          %s331 = sadd.s32 %s33, %s31
          %s332 = smul.addr %s331, 128
          %s333 = scalar_lea.hbm %s0, %s332
          %s335 = sshll.u32 %s327, 4
          %s336 = int_to_ptr.vmem [resolvable:$true] %s335
          %338 = dma.hbm_to_vmem [thread:$0]  %s333, 128, %s336, %s324
        $region44: #{tpu_custom_call.1} parent=39 // pred_fallthru
          _
        // Predicated region
        $region45: #{tpu_custom_call.1} parent=39 // pred_check
          %p339 = pneg %p93
        $region46: #{tpu_custom_call.1} parent=39 // pred_check_branch
          %341 = sbr.rel (%p339) target = $region48
        $region47: #{tpu_custom_call.1} parent=39 // pred_region
          %s342 = sand.u32 %s24, 1
          %s343 = scalar_lea.sflag [#allocation10], %s342
          %s344 = sand.u32 %s83, 1
          %s345 = smul.addr %s344, 8
          %s346 = scalar_lea.vmem [#allocation9], %s345
          %s348 = ssub.s32 128, 128
          %349 = vsyncadd %s343, %s348
          %s350 = sadd.s32 %s32, %s31
          %s351 = smul.addr %s350, 128
          %s352 = scalar_lea.hbm %s1, %s351
          %s354 = sshll.u32 %s346, 4
          %s355 = int_to_ptr.vmem [resolvable:$true] %s354
          %357 = dma.hbm_to_vmem [thread:$0]  %s352, 128, %s355, %s343
        $region48: #{tpu_custom_call.1} parent=39 // pred_fallthru
          _
      $region40: #{tpu_custom_call.1} parent=5 // pred_fallthru
        _
      %p358 = scmp.le.s32.totalorder 1, %s24
      %p359 = scmp.lt.s32.totalorder %s24, 3
      %p360 = pnand %p358, %p359
      %p361 = pneg %p360
      // Predicated region
      $region49: #{tpu_custom_call.1} parent=5 // pred_check
        _
      $region50: #{tpu_custom_call.1} parent=5 // pred_check_branch
        %363 = sbr.rel (%p360) target = $region52
      $region51: #{tpu_custom_call.1} parent=5 // pred_region
        %s364 = ssub.s32 %s24, 1
        %s365 = sand.u32 %s58, 1
        %s366 = scalar_lea.sflag [#allocation7], %s365
        %s367 = sand.u32 %s58, 1
        %s368 = smul.addr %s367, 8
        %s369 = scalar_lea.vmem [#allocation6], %s368
        // Predicated region
        $region53: #{tpu_custom_call.1} parent=51 // pred_check
          %p370 = pneg %p71
        $region54: #{tpu_custom_call.1} parent=51 // pred_check_branch
          %372 = sbr.rel (%p370) target = $region56
        $region55: #{tpu_custom_call.1} parent=51 // pred_region
          %373 = dma.done %s366, 128
        $region56: #{tpu_custom_call.1} parent=51 // pred_fallthru
          _
        %s374 = sand.u32 %s29, 1
        %s375 = scalar_lea.sflag [#allocation10], %s374
        %s376 = sand.u32 %s86, 1
        %s377 = smul.addr %s376, 8
        %s378 = scalar_lea.vmem [#allocation9], %s377
        // Predicated region
        $region57: #{tpu_custom_call.1} parent=51 // pred_check
          %p379 = pneg %p99
        $region58: #{tpu_custom_call.1} parent=51 // pred_check_branch
          %381 = sbr.rel (%p379) target = $region60
        $region59: #{tpu_custom_call.1} parent=51 // pred_region
          %382 = dma.done %s375, 128
        $region60: #{tpu_custom_call.1} parent=51 // pred_fallthru
          _
        // Predicated region
        $region61: #{tpu_custom_call.1} parent=51 // pred_check
          %p383 = pneg %p120
        $region62: #{tpu_custom_call.1} parent=51 // pred_check_branch
          %385 = sbr.rel (%p383) target = $region64
        $region63: #{tpu_custom_call.1} parent=51 // pred_region
          %386 = dma.done [#allocation10], 4096
        $region64: #{tpu_custom_call.1} parent=51 // pred_fallthru
          _
        // Predicated region
        $region65: #{tpu_custom_call.1} parent=51 // pred_check
          %p387 = pneg %p162
        $region66: #{tpu_custom_call.1} parent=51 // pred_check_branch
          %389 = sbr.rel (%p387) target = $region68
        $region67: #{tpu_custom_call.1} parent=51 // pred_region
          %390 = dma.done [#allocation13], 2048
        $region68: #{tpu_custom_call.1} parent=51 // pred_fallthru
          _
        // Predicated region
        $region69: #{tpu_custom_call.1} parent=51 // pred_check
          %p391 = pneg %p204
        $region70: #{tpu_custom_call.1} parent=51 // pred_check_branch
          %393 = sbr.rel (%p391) target = $region72
        $region71: #{tpu_custom_call.1} parent=51 // pred_region
          %394 = dma.done [#allocation13], 2048
        $region72: #{tpu_custom_call.1} parent=51 // pred_fallthru
          _
        %s395 = sand.u32 %s58, 1
        %s396 = scalar_lea.sflag [#allocation7], %s395
        %s397 = sand.u32 %s58, 1
        %s398 = smul.addr %s397, 8
        %s399 = scalar_lea.vmem [#allocation6], %s398
        %p400 = pneg %p71
        %p401 = pneg %p68
        %s402 = sand.u32 %s29, 1
        %s403 = scalar_lea.sflag [#allocation10], %s402
        %s404 = sand.u32 %s86, 1
        %s405 = smul.addr %s404, 8
        %s406 = scalar_lea.vmem [#allocation9], %s405
        %p407 = pneg %p99
        %p408 = pneg %p96
        %p409 = pneg %p120
        %p410 = pneg %p117
        %p411 = pneg %p141
        %p412 = pneg %p138
        %p413 = pneg %p162
        %p414 = pneg %p159
        %p415 = pneg %p183
        %p416 = pneg %p180
        %p417 = pneg %p204
        %p418 = pneg %p201
        %p419 = pneg %p225
        %p420 = pneg %p222
        %p421 = pneg %p253
        %p422 = pneg %p250
        %s423 = sand.u32 %s240, 1
        %s424 = scalar_lea.sflag [#allocation8], %s423
        %s425 = sand.u32 %s240, 1
        %s426 = smul.addr %s425, 8
        %s427 = scalar_lea.vmem [#allocation15], %s426
        %p428 = scmp.eq.s32.totalorder %s36, 0
        // Predicated region
        $region73: #{tpu_custom_call.1} parent=51 // pred_check
          %p429 = pneg %p428
        $region74: #{tpu_custom_call.1} parent=51 // pred_check_branch
          %431 = sbr.rel (%p429) target = $region76
        $region75: #{tpu_custom_call.1} parent=51 // pred_region
          %v432 = vld [vmem:[%s378] sm:$0xff]
          %v433 = vld [vmem:[#allocation12] sm:$0xff]
          %v434 = vld [vmem:[#allocation12 + $0x8] sm:$0xff]
          %v435 = vld [vmem:[#allocation12 + $0x10] sm:$0xff]
          %v436 = vld [vmem:[#allocation12 + $0x18] sm:$0xff]
          %v437 = vld [vmem:[#allocation12 + $0x20] sm:$0xff]
          %v438 = vld [vmem:[#allocation12 + $0x28] sm:$0xff]
          %v439 = vld [vmem:[#allocation12 + $0x30] sm:$0xff]
          %v440 = vld [vmem:[#allocation12 + $0x38] sm:$0xff]
          %v441 = vld [vmem:[#allocation12 + $0x40] sm:$0xff]
          %v442 = vld [vmem:[#allocation12 + $0x48] sm:$0xff]
          %v443 = vld [vmem:[#allocation12 + $0x50] sm:$0xff]
          %v444 = vld [vmem:[#allocation12 + $0x58] sm:$0xff]
          %v445 = vld [vmem:[#allocation12 + $0x60] sm:$0xff]
          %v446 = vld [vmem:[#allocation12 + $0x68] sm:$0xff]
          %v447 = vld [vmem:[#allocation12 + $0x70] sm:$0xff]
          %v448 = vld [vmem:[#allocation12 + $0x78] sm:$0xff]
          %v449 = vld [vmem:[%s5] sm:$0x1]
          %v451 = vlaneseq
          %v452 = vshrl.u32 %v451, 7
          %v453 = vsub.s32 0, %v452
          %v454 = vrot.slane %v449, %v453
          %456 = vmatprep.subr.mxu0 0.0
          %v457 = vand.u32 %v448, 4294901760
          %458 = vmatpush1.msra.mxu0 %v457
          %459 = vmatprep.subr.mxu0 0.0
          %v460 = vand.u32 %v447, 4294901760
          %461 = vmatpush1.msra.mxu0 %v460
          %462 = vmatprep.subr.mxu0 0.0
          %v463 = vand.u32 %v446, 4294901760
          %464 = vmatpush1.msra.mxu0 %v463
          %465 = vmatprep.subr.mxu0 0.0
          %v466 = vand.u32 %v445, 4294901760
          %467 = vmatpush1.msra.mxu0 %v466
          %468 = vmatprep.subr.mxu0 0.0
          %v469 = vand.u32 %v444, 4294901760
          %470 = vmatpush1.msra.mxu0 %v469
          %471 = vmatprep.subr.mxu0 0.0
          %v472 = vand.u32 %v443, 4294901760
          %473 = vmatpush1.msra.mxu0 %v472
          %474 = vmatprep.subr.mxu0 0.0
          %v475 = vand.u32 %v442, 4294901760
          %476 = vmatpush1.msra.mxu0 %v475
          %477 = vmatprep.subr.mxu0 0.0
          %v478 = vand.u32 %v441, 4294901760
          %479 = vmatpush1.msra.mxu0 %v478
          %480 = vmatprep.subr.mxu0 0.0
          %v481 = vand.u32 %v440, 4294901760
          %482 = vmatpush1.msra.mxu0 %v481
          %483 = vmatprep.subr.mxu0 0.0
          %v484 = vand.u32 %v439, 4294901760
          %485 = vmatpush1.msra.mxu0 %v484
          %486 = vmatprep.subr.mxu0 0.0
          %v487 = vand.u32 %v438, 4294901760
          %488 = vmatpush1.msra.mxu0 %v487
          %489 = vmatprep.subr.mxu0 0.0
          %v490 = vand.u32 %v437, 4294901760
          %491 = vmatpush1.msra.mxu0 %v490
          %492 = vmatprep.subr.mxu0 0.0
          %v493 = vand.u32 %v436, 4294901760
          %494 = vmatpush1.msra.mxu0 %v493
          %495 = vmatprep.subr.mxu0 0.0
          %v496 = vand.u32 %v435, 4294901760
          %497 = vmatpush1.msra.mxu0 %v496
          %498 = vmatprep.subr.mxu0 0.0
          %v499 = vand.u32 %v434, 4294901760
          %500 = vmatpush1.msra.mxu0 %v499
          %501 = vmatprep.subr.mxu0 0.0
          %v502 = vand.u32 %v433, 4294901760
          %503 = vmatpush1.msra.mxu0 %v502
          %504 = vmatprep.subr.mxu0 0.0
          %505 = vmatpush2.msra.mxu0 0.0
          %506 = vmatprep.subr.mxu0 0.0
          %507 = vmatpush2.msra.mxu0 0.0
          %508 = vmatprep.subr.mxu0 0.0
          %509 = vmatpush2.msra.mxu0 0.0
          %510 = vmatprep.subr.mxu0 0.0
          %511 = vmatpush2.msra.mxu0 0.0
          %512 = vmatprep.subr.mxu0 0.0
          %513 = vmatpush2.msra.mxu0 0.0
          %514 = vmatprep.subr.mxu0 0.0
          %515 = vmatpush2.msra.mxu0 0.0
          %516 = vmatprep.subr.mxu0 0.0
          %517 = vmatpush2.msra.mxu0 0.0
          %518 = vmatprep.subr.mxu0 0.0
          %519 = vmatpush2.msra.mxu0 0.0
          %520 = vmatprep.subr.mxu0 0.0
          %521 = vmatpush2.msra.mxu0 0.0
          %522 = vmatprep.subr.mxu0 0.0
          %523 = vmatpush2.msra.mxu0 0.0
          %524 = vmatprep.subr.mxu0 0.0
          %525 = vmatpush2.msra.mxu0 0.0
          %526 = vmatprep.subr.mxu0 0.0
          %527 = vmatpush2.msra.mxu0 0.0
          %528 = vmatprep.subr.mxu0 0.0
          %529 = vmatpush2.msra.mxu0 0.0
          %530 = vmatprep.subr.mxu0 0.0
          %531 = vmatpush2.msra.mxu0 0.0
          %532 = vmatprep.subr.mxu0 0.0
          %533 = vmatpush2.msra.mxu0 0.0
          %534 = vmatprep.subr.mxu0 0.0
          %535 = vmatpush2.msra.mxu0 0.0
          %536 = vmatprep.mubr.f32.mxu0 0.0
          %v537 = vand.u32 %v432, 4294901760
          %v538 = vsub.f32 %v432, %v537
          %v539 = vand.u32 %v538, 4294901760
          %v540 = vsub.f32 %v538, %v539
          %v541 = vand.u32 %v540, 4294901760
          %542 = vmatmul.mubr.f32.gmra.mxu0 %v541
          %v543 = vpop.f32.mrf.mxu0
          %v544 = vadd.f32 %v454, %v543
          %v545 = vpop.f32.mrf.mxu0
          %546 = vdwg.mxu0
          %547 = vmatprep.subr.mxu0 0.0
          %v548 = vand.u32 %v448, 4294901760
          %v549 = vsub.f32 %v448, %v548
          %v550 = vand.u32 %v549, 4294901760
          %v551 = vsub.f32 %v549, %v550
          %v552 = vand.u32 %v551, 4294901760
          %553 = vmatpush1.msra.mxu0 %v552
          %554 = vmatprep.subr.mxu0 0.0
          %v555 = vand.u32 %v447, 4294901760
          %v556 = vsub.f32 %v447, %v555
          %v557 = vand.u32 %v556, 4294901760
          %v558 = vsub.f32 %v556, %v557
          %v559 = vand.u32 %v558, 4294901760
          %560 = vmatpush1.msra.mxu0 %v559
          %561 = vmatprep.subr.mxu0 0.0
          %v562 = vand.u32 %v446, 4294901760
          %v563 = vsub.f32 %v446, %v562
          %v564 = vand.u32 %v563, 4294901760
          %v565 = vsub.f32 %v563, %v564
          %v566 = vand.u32 %v565, 4294901760
          %567 = vmatpush1.msra.mxu0 %v566
          %568 = vmatprep.subr.mxu0 0.0
          %v569 = vand.u32 %v445, 4294901760
          %v570 = vsub.f32 %v445, %v569
          %v571 = vand.u32 %v570, 4294901760
          %v572 = vsub.f32 %v570, %v571
          %v573 = vand.u32 %v572, 4294901760
          %574 = vmatpush1.msra.mxu0 %v573
          %575 = vmatprep.subr.mxu0 0.0
          %v576 = vand.u32 %v444, 4294901760
          %v577 = vsub.f32 %v444, %v576
          %v578 = vand.u32 %v577, 4294901760
          %v579 = vsub.f32 %v577, %v578
          %v580 = vand.u32 %v579, 4294901760
          %581 = vmatpush1.msra.mxu0 %v580
          %582 = vmatprep.subr.mxu0 0.0
          %v583 = vand.u32 %v443, 4294901760
          %v584 = vsub.f32 %v443, %v583
          %v585 = vand.u32 %v584, 4294901760
          %v586 = vsub.f32 %v584, %v585
          %v587 = vand.u32 %v586, 4294901760
          %588 = vmatpush1.msra.mxu0 %v587
          %589 = vmatprep.subr.mxu0 0.0
          %v590 = vand.u32 %v442, 4294901760
          %v591 = vsub.f32 %v442, %v590
          %v592 = vand.u32 %v591, 4294901760
          %v593 = vsub.f32 %v591, %v592
          %v594 = vand.u32 %v593, 4294901760
          %595 = vmatpush1.msra.mxu0 %v594
          %596 = vmatprep.subr.mxu0 0.0
          %v597 = vand.u32 %v441, 4294901760
          %v598 = vsub.f32 %v441, %v597
          %v599 = vand.u32 %v598, 4294901760
          %v600 = vsub.f32 %v598, %v599
          %v601 = vand.u32 %v600, 4294901760
          %602 = vmatpush1.msra.mxu0 %v601
          %603 = vmatprep.subr.mxu0 0.0
          %v604 = vand.u32 %v440, 4294901760
          %v605 = vsub.f32 %v440, %v604
          %v606 = vand.u32 %v605, 4294901760
          %v607 = vsub.f32 %v605, %v606
          %v608 = vand.u32 %v607, 4294901760
          %609 = vmatpush1.msra.mxu0 %v608
          %610 = vmatprep.subr.mxu0 0.0
          %v611 = vand.u32 %v439, 4294901760
          %v612 = vsub.f32 %v439, %v611
          %v613 = vand.u32 %v612, 4294901760
          %v614 = vsub.f32 %v612, %v613
          %v615 = vand.u32 %v614, 4294901760
          %616 = vmatpush1.msra.mxu0 %v615
          %617 = vmatprep.subr.mxu0 0.0
          %v618 = vand.u32 %v438, 4294901760
          %v619 = vsub.f32 %v438, %v618
          %v620 = vand.u32 %v619, 4294901760
          %v621 = vsub.f32 %v619, %v620
          %v622 = vand.u32 %v621, 4294901760
          %623 = vmatpush1.msra.mxu0 %v622
          %624 = vmatprep.subr.mxu0 0.0
          %v625 = vand.u32 %v437, 4294901760
          %v626 = vsub.f32 %v437, %v625
          %v627 = vand.u32 %v626, 4294901760
          %v628 = vsub.f32 %v626, %v627
          %v629 = vand.u32 %v628, 4294901760
          %630 = vmatpush1.msra.mxu0 %v629
          %631 = vmatprep.subr.mxu0 0.0
          %v632 = vand.u32 %v436, 4294901760
          %v633 = vsub.f32 %v436, %v632
          %v634 = vand.u32 %v633, 4294901760
          %v635 = vsub.f32 %v633, %v634
          %v636 = vand.u32 %v635, 4294901760
          %637 = vmatpush1.msra.mxu0 %v636
          %638 = vmatprep.subr.mxu0 0.0
          %v639 = vand.u32 %v435, 4294901760
          %v640 = vsub.f32 %v435, %v639
          %v641 = vand.u32 %v640, 4294901760
          %v642 = vsub.f32 %v640, %v641
          %v643 = vand.u32 %v642, 4294901760
          %644 = vmatpush1.msra.mxu0 %v643
          %645 = vmatprep.subr.mxu0 0.0
          %v646 = vand.u32 %v434, 4294901760
          %v647 = vsub.f32 %v434, %v646
          %v648 = vand.u32 %v647, 4294901760
          %v649 = vsub.f32 %v647, %v648
          %v650 = vand.u32 %v649, 4294901760
          %651 = vmatpush1.msra.mxu0 %v650
          %652 = vmatprep.subr.mxu0 0.0
          %v653 = vand.u32 %v433, 4294901760
          %v654 = vsub.f32 %v433, %v653
          %v655 = vand.u32 %v654, 4294901760
          %v656 = vsub.f32 %v654, %v655
          %v657 = vand.u32 %v656, 4294901760
          %658 = vmatpush1.msra.mxu0 %v657
          %659 = vmatprep.subr.mxu0 0.0
          %660 = vmatpush2.msra.mxu0 0.0
          %661 = vmatprep.subr.mxu0 0.0
          %662 = vmatpush2.msra.mxu0 0.0
          %663 = vmatprep.subr.mxu0 0.0
          %664 = vmatpush2.msra.mxu0 0.0
          %665 = vmatprep.subr.mxu0 0.0
          %666 = vmatpush2.msra.mxu0 0.0
          %667 = vmatprep.subr.mxu0 0.0
          %668 = vmatpush2.msra.mxu0 0.0
          %669 = vmatprep.subr.mxu0 0.0
          %670 = vmatpush2.msra.mxu0 0.0
          %671 = vmatprep.subr.mxu0 0.0
          %672 = vmatpush2.msra.mxu0 0.0
          %673 = vmatprep.subr.mxu0 0.0
          %674 = vmatpush2.msra.mxu0 0.0
          %675 = vmatprep.subr.mxu0 0.0
          %676 = vmatpush2.msra.mxu0 0.0
          %677 = vmatprep.subr.mxu0 0.0
          %678 = vmatpush2.msra.mxu0 0.0
          %679 = vmatprep.subr.mxu0 0.0
          %680 = vmatpush2.msra.mxu0 0.0
          %681 = vmatprep.subr.mxu0 0.0
          %682 = vmatpush2.msra.mxu0 0.0
          %683 = vmatprep.subr.mxu0 0.0
          %684 = vmatpush2.msra.mxu0 0.0
          %685 = vmatprep.subr.mxu0 0.0
          %686 = vmatpush2.msra.mxu0 0.0
          %687 = vmatprep.subr.mxu0 0.0
          %688 = vmatpush2.msra.mxu0 0.0
          %689 = vmatprep.subr.mxu0 0.0
          %690 = vmatpush2.msra.mxu0 0.0
          %691 = vmatprep.mubr.f32.mxu0 0.0
          %v692 = vand.u32 %v432, 4294901760
          %693 = vmatmul.mubr.f32.gmra.mxu0 %v692
          %v694 = vpop.f32.mrf.mxu0
          %v695 = vadd.f32 %v544, %v694
          %v696 = vpop.f32.mrf.mxu0
          %697 = vdwg.mxu0
          %698 = vmatprep.subr.mxu0 0.0
          %v699 = vand.u32 %v448, 4294901760
          %v700 = vsub.f32 %v448, %v699
          %701 = vmatpush1.msra.mxu0 %v700
          %702 = vmatprep.subr.mxu0 0.0
          %v703 = vand.u32 %v447, 4294901760
          %v704 = vsub.f32 %v447, %v703
          %705 = vmatpush1.msra.mxu0 %v704
          %706 = vmatprep.subr.mxu0 0.0
          %v707 = vand.u32 %v446, 4294901760
          %v708 = vsub.f32 %v446, %v707
          %709 = vmatpush1.msra.mxu0 %v708
          %710 = vmatprep.subr.mxu0 0.0
          %v711 = vand.u32 %v445, 4294901760
          %v712 = vsub.f32 %v445, %v711
          %713 = vmatpush1.msra.mxu0 %v712
          %714 = vmatprep.subr.mxu0 0.0
          %v715 = vand.u32 %v444, 4294901760
          %v716 = vsub.f32 %v444, %v715
          %717 = vmatpush1.msra.mxu0 %v716
          %718 = vmatprep.subr.mxu0 0.0
          %v719 = vand.u32 %v443, 4294901760
          %v720 = vsub.f32 %v443, %v719
          %721 = vmatpush1.msra.mxu0 %v720
          %722 = vmatprep.subr.mxu0 0.0
          %v723 = vand.u32 %v442, 4294901760
          %v724 = vsub.f32 %v442, %v723
          %725 = vmatpush1.msra.mxu0 %v724
          %726 = vmatprep.subr.mxu0 0.0
          %v727 = vand.u32 %v441, 4294901760
          %v728 = vsub.f32 %v441, %v727
          %729 = vmatpush1.msra.mxu0 %v728
          %730 = vmatprep.subr.mxu0 0.0
          %v731 = vand.u32 %v440, 4294901760
          %v732 = vsub.f32 %v440, %v731
          %733 = vmatpush1.msra.mxu0 %v732
          %734 = vmatprep.subr.mxu0 0.0
          %v735 = vand.u32 %v439, 4294901760
          %v736 = vsub.f32 %v439, %v735
          %737 = vmatpush1.msra.mxu0 %v736
          %738 = vmatprep.subr.mxu0 0.0
          %v739 = vand.u32 %v438, 4294901760
          %v740 = vsub.f32 %v438, %v739
          %741 = vmatpush1.msra.mxu0 %v740
          %742 = vmatprep.subr.mxu0 0.0
          %v743 = vand.u32 %v437, 4294901760
          %v744 = vsub.f32 %v437, %v743
          %745 = vmatpush1.msra.mxu0 %v744
          %746 = vmatprep.subr.mxu0 0.0
          %v747 = vand.u32 %v436, 4294901760
          %v748 = vsub.f32 %v436, %v747
          %749 = vmatpush1.msra.mxu0 %v748
          %750 = vmatprep.subr.mxu0 0.0
          %v751 = vand.u32 %v435, 4294901760
          %v752 = vsub.f32 %v435, %v751
          %753 = vmatpush1.msra.mxu0 %v752
          %754 = vmatprep.subr.mxu0 0.0
          %v755 = vand.u32 %v434, 4294901760
          %v756 = vsub.f32 %v434, %v755
          %757 = vmatpush1.msra.mxu0 %v756
          %758 = vmatprep.subr.mxu0 0.0
          %v759 = vand.u32 %v433, 4294901760
          %v760 = vsub.f32 %v433, %v759
          %761 = vmatpush1.msra.mxu0 %v760
          %762 = vmatprep.subr.mxu0 0.0
          %763 = vmatpush2.msra.mxu0 0.0
          %764 = vmatprep.subr.mxu0 0.0
          %765 = vmatpush2.msra.mxu0 0.0
          %766 = vmatprep.subr.mxu0 0.0
          %767 = vmatpush2.msra.mxu0 0.0
          %768 = vmatprep.subr.mxu0 0.0
          %769 = vmatpush2.msra.mxu0 0.0
          %770 = vmatprep.subr.mxu0 0.0
          %771 = vmatpush2.msra.mxu0 0.0
          %772 = vmatprep.subr.mxu0 0.0
          %773 = vmatpush2.msra.mxu0 0.0
          %774 = vmatprep.subr.mxu0 0.0
          %775 = vmatpush2.msra.mxu0 0.0
          %776 = vmatprep.subr.mxu0 0.0
          %777 = vmatpush2.msra.mxu0 0.0
          %778 = vmatprep.subr.mxu0 0.0
          %779 = vmatpush2.msra.mxu0 0.0
          %780 = vmatprep.subr.mxu0 0.0
          %781 = vmatpush2.msra.mxu0 0.0
          %782 = vmatprep.subr.mxu0 0.0
          %783 = vmatpush2.msra.mxu0 0.0
          %784 = vmatprep.subr.mxu0 0.0
          %785 = vmatpush2.msra.mxu0 0.0
          %786 = vmatprep.subr.mxu0 0.0
          %787 = vmatpush2.msra.mxu0 0.0
          %788 = vmatprep.subr.mxu0 0.0
          %789 = vmatpush2.msra.mxu0 0.0
          %790 = vmatprep.subr.mxu0 0.0
          %791 = vmatpush2.msra.mxu0 0.0
          %792 = vmatprep.subr.mxu0 0.0
          %793 = vmatpush2.msra.mxu0 0.0
          %794 = vmatprep.mubr.f32.mxu0 0.0
          %v795 = vand.u32 %v432, 4294901760
          %v796 = vsub.f32 %v432, %v795
          %797 = vmatmul.mubr.f32.gmra.mxu0 %v796
          %v798 = vpop.f32.mrf.mxu0
          %v799 = vadd.f32 %v695, %v798
          %v800 = vpop.f32.mrf.mxu0
          %801 = vdwg.mxu0
          %802 = vmatprep.subr.mxu0 0.0
          %v803 = vand.u32 %v448, 4294901760
          %804 = vmatpush1.msra.mxu0 %v803
          %805 = vmatprep.subr.mxu0 0.0
          %v806 = vand.u32 %v447, 4294901760
          %807 = vmatpush1.msra.mxu0 %v806
          %808 = vmatprep.subr.mxu0 0.0
          %v809 = vand.u32 %v446, 4294901760
          %810 = vmatpush1.msra.mxu0 %v809
          %811 = vmatprep.subr.mxu0 0.0
          %v812 = vand.u32 %v445, 4294901760
          %813 = vmatpush1.msra.mxu0 %v812
          %814 = vmatprep.subr.mxu0 0.0
          %v815 = vand.u32 %v444, 4294901760
          %816 = vmatpush1.msra.mxu0 %v815
          %817 = vmatprep.subr.mxu0 0.0
          %v818 = vand.u32 %v443, 4294901760
          %819 = vmatpush1.msra.mxu0 %v818
          %820 = vmatprep.subr.mxu0 0.0
          %v821 = vand.u32 %v442, 4294901760
          %822 = vmatpush1.msra.mxu0 %v821
          %823 = vmatprep.subr.mxu0 0.0
          %v824 = vand.u32 %v441, 4294901760
          %825 = vmatpush1.msra.mxu0 %v824
          %826 = vmatprep.subr.mxu0 0.0
          %v827 = vand.u32 %v440, 4294901760
          %828 = vmatpush1.msra.mxu0 %v827
          %829 = vmatprep.subr.mxu0 0.0
          %v830 = vand.u32 %v439, 4294901760
          %831 = vmatpush1.msra.mxu0 %v830
          %832 = vmatprep.subr.mxu0 0.0
          %v833 = vand.u32 %v438, 4294901760
          %834 = vmatpush1.msra.mxu0 %v833
          %835 = vmatprep.subr.mxu0 0.0
          %v836 = vand.u32 %v437, 4294901760
          %837 = vmatpush1.msra.mxu0 %v836
          %838 = vmatprep.subr.mxu0 0.0
          %v839 = vand.u32 %v436, 4294901760
          %840 = vmatpush1.msra.mxu0 %v839
          %841 = vmatprep.subr.mxu0 0.0
          %v842 = vand.u32 %v435, 4294901760
          %843 = vmatpush1.msra.mxu0 %v842
          %844 = vmatprep.subr.mxu0 0.0
          %v845 = vand.u32 %v434, 4294901760
          %846 = vmatpush1.msra.mxu0 %v845
          %847 = vmatprep.subr.mxu0 0.0
          %v848 = vand.u32 %v433, 4294901760
          %849 = vmatpush1.msra.mxu0 %v848
          %850 = vmatprep.subr.mxu0 0.0
          %851 = vmatpush2.msra.mxu0 0.0
          %852 = vmatprep.subr.mxu0 0.0
          %853 = vmatpush2.msra.mxu0 0.0
          %854 = vmatprep.subr.mxu0 0.0
          %855 = vmatpush2.msra.mxu0 0.0
          %856 = vmatprep.subr.mxu0 0.0
          %857 = vmatpush2.msra.mxu0 0.0
          %858 = vmatprep.subr.mxu0 0.0
          %859 = vmatpush2.msra.mxu0 0.0
          %860 = vmatprep.subr.mxu0 0.0
          %861 = vmatpush2.msra.mxu0 0.0
          %862 = vmatprep.subr.mxu0 0.0
          %863 = vmatpush2.msra.mxu0 0.0
          %864 = vmatprep.subr.mxu0 0.0
          %865 = vmatpush2.msra.mxu0 0.0
          %866 = vmatprep.subr.mxu0 0.0
          %867 = vmatpush2.msra.mxu0 0.0
          %868 = vmatprep.subr.mxu0 0.0
          %869 = vmatpush2.msra.mxu0 0.0
          %870 = vmatprep.subr.mxu0 0.0
          %871 = vmatpush2.msra.mxu0 0.0
          %872 = vmatprep.subr.mxu0 0.0
          %873 = vmatpush2.msra.mxu0 0.0
          %874 = vmatprep.subr.mxu0 0.0
          %875 = vmatpush2.msra.mxu0 0.0
          %876 = vmatprep.subr.mxu0 0.0
          %877 = vmatpush2.msra.mxu0 0.0
          %878 = vmatprep.subr.mxu0 0.0
          %879 = vmatpush2.msra.mxu0 0.0
          %880 = vmatprep.subr.mxu0 0.0
          %881 = vmatpush2.msra.mxu0 0.0
          %882 = vmatprep.mubr.f32.mxu0 0.0
          %v883 = vand.u32 %v432, 4294901760
          %v884 = vsub.f32 %v432, %v883
          %v885 = vand.u32 %v884, 4294901760
          %886 = vmatmul.mubr.f32.gmra.mxu0 %v885
          %v887 = vpop.f32.mrf.mxu0
          %v888 = vadd.f32 %v799, %v887
          %v889 = vpop.f32.mrf.mxu0
          %890 = vdwg.mxu0
          %891 = vmatprep.subr.mxu0 0.0
          %v892 = vand.u32 %v448, 4294901760
          %v893 = vsub.f32 %v448, %v892
          %v894 = vand.u32 %v893, 4294901760
          %895 = vmatpush1.msra.mxu0 %v894
          %896 = vmatprep.subr.mxu0 0.0
          %v897 = vand.u32 %v447, 4294901760
          %v898 = vsub.f32 %v447, %v897
          %v899 = vand.u32 %v898, 4294901760
          %900 = vmatpush1.msra.mxu0 %v899
          %901 = vmatprep.subr.mxu0 0.0
          %v902 = vand.u32 %v446, 4294901760
          %v903 = vsub.f32 %v446, %v902
          %v904 = vand.u32 %v903, 4294901760
          %905 = vmatpush1.msra.mxu0 %v904
          %906 = vmatprep.subr.mxu0 0.0
          %v907 = vand.u32 %v445, 4294901760
          %v908 = vsub.f32 %v445, %v907
          %v909 = vand.u32 %v908, 4294901760
          %910 = vmatpush1.msra.mxu0 %v909
          %911 = vmatprep.subr.mxu0 0.0
          %v912 = vand.u32 %v444, 4294901760
          %v913 = vsub.f32 %v444, %v912
          %v914 = vand.u32 %v913, 4294901760
          %915 = vmatpush1.msra.mxu0 %v914
          %916 = vmatprep.subr.mxu0 0.0
          %v917 = vand.u32 %v443, 4294901760
          %v918 = vsub.f32 %v443, %v917
          %v919 = vand.u32 %v918, 4294901760
          %920 = vmatpush1.msra.mxu0 %v919
          %921 = vmatprep.subr.mxu0 0.0
          %v922 = vand.u32 %v442, 4294901760
          %v923 = vsub.f32 %v442, %v922
          %v924 = vand.u32 %v923, 4294901760
          %925 = vmatpush1.msra.mxu0 %v924
          %926 = vmatprep.subr.mxu0 0.0
          %v927 = vand.u32 %v441, 4294901760
          %v928 = vsub.f32 %v441, %v927
          %v929 = vand.u32 %v928, 4294901760
          %930 = vmatpush1.msra.mxu0 %v929
          %931 = vmatprep.subr.mxu0 0.0
          %v932 = vand.u32 %v440, 4294901760
          %v933 = vsub.f32 %v440, %v932
          %v934 = vand.u32 %v933, 4294901760
          %935 = vmatpush1.msra.mxu0 %v934
          %936 = vmatprep.subr.mxu0 0.0
          %v937 = vand.u32 %v439, 4294901760
          %v938 = vsub.f32 %v439, %v937
          %v939 = vand.u32 %v938, 4294901760
          %940 = vmatpush1.msra.mxu0 %v939
          %941 = vmatprep.subr.mxu0 0.0
          %v942 = vand.u32 %v438, 4294901760
          %v943 = vsub.f32 %v438, %v942
          %v944 = vand.u32 %v943, 4294901760
          %945 = vmatpush1.msra.mxu0 %v944
          %946 = vmatprep.subr.mxu0 0.0
          %v947 = vand.u32 %v437, 4294901760
          %v948 = vsub.f32 %v437, %v947
          %v949 = vand.u32 %v948, 4294901760
          %950 = vmatpush1.msra.mxu0 %v949
          %951 = vmatprep.subr.mxu0 0.0
          %v952 = vand.u32 %v436, 4294901760
          %v953 = vsub.f32 %v436, %v952
          %v954 = vand.u32 %v953, 4294901760
          %955 = vmatpush1.msra.mxu0 %v954
          %956 = vmatprep.subr.mxu0 0.0
          %v957 = vand.u32 %v435, 4294901760
          %v958 = vsub.f32 %v435, %v957
          %v959 = vand.u32 %v958, 4294901760
          %960 = vmatpush1.msra.mxu0 %v959
          %961 = vmatprep.subr.mxu0 0.0
          %v962 = vand.u32 %v434, 4294901760
          %v963 = vsub.f32 %v434, %v962
          %v964 = vand.u32 %v963, 4294901760
          %965 = vmatpush1.msra.mxu0 %v964
          %966 = vmatprep.subr.mxu0 0.0
          %v967 = vand.u32 %v433, 4294901760
          %v968 = vsub.f32 %v433, %v967
          %v969 = vand.u32 %v968, 4294901760
          %970 = vmatpush1.msra.mxu0 %v969
          %971 = vmatprep.subr.mxu0 0.0
          %972 = vmatpush2.msra.mxu0 0.0
          %973 = vmatprep.subr.mxu0 0.0
          %974 = vmatpush2.msra.mxu0 0.0
          %975 = vmatprep.subr.mxu0 0.0
          %976 = vmatpush2.msra.mxu0 0.0
          %977 = vmatprep.subr.mxu0 0.0
          %978 = vmatpush2.msra.mxu0 0.0
          %979 = vmatprep.subr.mxu0 0.0
          %980 = vmatpush2.msra.mxu0 0.0
          %981 = vmatprep.subr.mxu0 0.0
          %982 = vmatpush2.msra.mxu0 0.0
          %983 = vmatprep.subr.mxu0 0.0
          %984 = vmatpush2.msra.mxu0 0.0
          %985 = vmatprep.subr.mxu0 0.0
          %986 = vmatpush2.msra.mxu0 0.0
          %987 = vmatprep.subr.mxu0 0.0
          %988 = vmatpush2.msra.mxu0 0.0
          %989 = vmatprep.subr.mxu0 0.0
          %990 = vmatpush2.msra.mxu0 0.0
          %991 = vmatprep.subr.mxu0 0.0
          %992 = vmatpush2.msra.mxu0 0.0
          %993 = vmatprep.subr.mxu0 0.0
          %994 = vmatpush2.msra.mxu0 0.0
          %995 = vmatprep.subr.mxu0 0.0
          %996 = vmatpush2.msra.mxu0 0.0
          %997 = vmatprep.subr.mxu0 0.0
          %998 = vmatpush2.msra.mxu0 0.0
          %999 = vmatprep.subr.mxu0 0.0
          %1000 = vmatpush2.msra.mxu0 0.0
          %1001 = vmatprep.subr.mxu0 0.0
          %1002 = vmatpush2.msra.mxu0 0.0
          %1003 = vmatprep.mubr.f32.mxu0 0.0
          %v1004 = vand.u32 %v432, 4294901760
          %1005 = vmatmul.mubr.f32.gmra.mxu0 %v1004
          %v1006 = vpop.f32.mrf.mxu0
          %v1007 = vadd.f32 %v888, %v1006
          %v1008 = vpop.f32.mrf.mxu0
          %1009 = vdwg.mxu0
          %1010 = vmatprep.subr.mxu0 0.0
          %v1011 = vand.u32 %v448, 4294901760
          %1012 = vmatpush1.msra.mxu0 %v1011
          %1013 = vmatprep.subr.mxu0 0.0
          %v1014 = vand.u32 %v447, 4294901760
          %1015 = vmatpush1.msra.mxu0 %v1014
          %1016 = vmatprep.subr.mxu0 0.0
          %v1017 = vand.u32 %v446, 4294901760
          %1018 = vmatpush1.msra.mxu0 %v1017
          %1019 = vmatprep.subr.mxu0 0.0
          %v1020 = vand.u32 %v445, 4294901760
          %1021 = vmatpush1.msra.mxu0 %v1020
          %1022 = vmatprep.subr.mxu0 0.0
          %v1023 = vand.u32 %v444, 4294901760
          %1024 = vmatpush1.msra.mxu0 %v1023
          %1025 = vmatprep.subr.mxu0 0.0
          %v1026 = vand.u32 %v443, 4294901760
          %1027 = vmatpush1.msra.mxu0 %v1026
          %1028 = vmatprep.subr.mxu0 0.0
          %v1029 = vand.u32 %v442, 4294901760
          %1030 = vmatpush1.msra.mxu0 %v1029
          %1031 = vmatprep.subr.mxu0 0.0
          %v1032 = vand.u32 %v441, 4294901760
          %1033 = vmatpush1.msra.mxu0 %v1032
          %1034 = vmatprep.subr.mxu0 0.0
          %v1035 = vand.u32 %v440, 4294901760
          %1036 = vmatpush1.msra.mxu0 %v1035
          %1037 = vmatprep.subr.mxu0 0.0
          %v1038 = vand.u32 %v439, 4294901760
          %1039 = vmatpush1.msra.mxu0 %v1038
          %1040 = vmatprep.subr.mxu0 0.0
          %v1041 = vand.u32 %v438, 4294901760
          %1042 = vmatpush1.msra.mxu0 %v1041
          %1043 = vmatprep.subr.mxu0 0.0
          %v1044 = vand.u32 %v437, 4294901760
          %1045 = vmatpush1.msra.mxu0 %v1044
          %1046 = vmatprep.subr.mxu0 0.0
          %v1047 = vand.u32 %v436, 4294901760
          %1048 = vmatpush1.msra.mxu0 %v1047
          %1049 = vmatprep.subr.mxu0 0.0
          %v1050 = vand.u32 %v435, 4294901760
          %1051 = vmatpush1.msra.mxu0 %v1050
          %1052 = vmatprep.subr.mxu0 0.0
          %v1053 = vand.u32 %v434, 4294901760
          %1054 = vmatpush1.msra.mxu0 %v1053
          %1055 = vmatprep.subr.mxu0 0.0
          %v1056 = vand.u32 %v433, 4294901760
          %1057 = vmatpush1.msra.mxu0 %v1056
          %1058 = vmatprep.subr.mxu0 0.0
          %1059 = vmatpush2.msra.mxu0 0.0
          %1060 = vmatprep.subr.mxu0 0.0
          %1061 = vmatpush2.msra.mxu0 0.0
          %1062 = vmatprep.subr.mxu0 0.0
          %1063 = vmatpush2.msra.mxu0 0.0
          %1064 = vmatprep.subr.mxu0 0.0
          %1065 = vmatpush2.msra.mxu0 0.0
          %1066 = vmatprep.subr.mxu0 0.0
          %1067 = vmatpush2.msra.mxu0 0.0
          %1068 = vmatprep.subr.mxu0 0.0
          %1069 = vmatpush2.msra.mxu0 0.0
          %1070 = vmatprep.subr.mxu0 0.0
          %1071 = vmatpush2.msra.mxu0 0.0
          %1072 = vmatprep.subr.mxu0 0.0
          %1073 = vmatpush2.msra.mxu0 0.0
          %1074 = vmatprep.subr.mxu0 0.0
          %1075 = vmatpush2.msra.mxu0 0.0
          %1076 = vmatprep.subr.mxu0 0.0
          %1077 = vmatpush2.msra.mxu0 0.0
          %1078 = vmatprep.subr.mxu0 0.0
          %1079 = vmatpush2.msra.mxu0 0.0
          %1080 = vmatprep.subr.mxu0 0.0
          %1081 = vmatpush2.msra.mxu0 0.0
          %1082 = vmatprep.subr.mxu0 0.0
          %1083 = vmatpush2.msra.mxu0 0.0
          %1084 = vmatprep.subr.mxu0 0.0
          %1085 = vmatpush2.msra.mxu0 0.0
          %1086 = vmatprep.subr.mxu0 0.0
          %1087 = vmatpush2.msra.mxu0 0.0
          %1088 = vmatprep.subr.mxu0 0.0
          %1089 = vmatpush2.msra.mxu0 0.0
          %1090 = vmatprep.mubr.f32.mxu0 0.0
          %v1091 = vand.u32 %v432, 4294901760
          %1092 = vmatmul.mubr.f32.gmra.mxu0 %v1091
          %v1093 = vpop.f32.mrf.mxu0
          %v1094 = vadd.f32 %v1007, %v1093
          %v1095 = vpop.f32.mrf.mxu0
          %1096 = vdwg.mxu0
          %1097 = vst [vmem:[#allocation2] sm:$0xff] %v1094
          %vm1098 = vcmask 7168
          %1099 = vst.msk [vmem:[#allocation3] sm:$0xff] %vm1098, -inf
          %1100 = vst.msk [vmem:[#allocation4] sm:$0xff] %vm1098, 0.0
          %1101 = vst [vmem:[#allocation5] sm:$0xff] 0.0
        $region76: #{tpu_custom_call.1} parent=51 // pred_fallthru
          _
        %v1102 = vld [vmem:[%s369] sm:$0xff]
        %v1103 = vld [vmem:[#allocation11] sm:$0xff]
        %v1104 = vld [vmem:[#allocation11 + $0x8] sm:$0xff]
        %v1105 = vld [vmem:[#allocation11 + $0x10] sm:$0xff]
        %v1106 = vld [vmem:[#allocation11 + $0x18] sm:$0xff]
        %v1107 = vld [vmem:[#allocation11 + $0x20] sm:$0xff]
        %v1108 = vld [vmem:[#allocation11 + $0x28] sm:$0xff]
        %v1109 = vld [vmem:[#allocation11 + $0x30] sm:$0xff]
        %v1110 = vld [vmem:[#allocation11 + $0x38] sm:$0xff]
        %v1111 = vld [vmem:[#allocation11 + $0x40] sm:$0xff]
        %v1112 = vld [vmem:[#allocation11 + $0x48] sm:$0xff]
        %v1113 = vld [vmem:[#allocation11 + $0x50] sm:$0xff]
        %v1114 = vld [vmem:[#allocation11 + $0x58] sm:$0xff]
        %v1115 = vld [vmem:[#allocation11 + $0x60] sm:$0xff]
        %v1116 = vld [vmem:[#allocation11 + $0x68] sm:$0xff]
        %v1117 = vld [vmem:[#allocation11 + $0x70] sm:$0xff]
        %v1118 = vld [vmem:[#allocation11 + $0x78] sm:$0xff]
        %v1119 = vld [vmem:[#allocation11 + $0x80] sm:$0xff]
        %v1120 = vld [vmem:[#allocation11 + $0x88] sm:$0xff]
        %v1121 = vld [vmem:[#allocation11 + $0x90] sm:$0xff]
        %v1122 = vld [vmem:[#allocation11 + $0x98] sm:$0xff]
        %v1123 = vld [vmem:[#allocation11 + $0xa0] sm:$0xff]
        %v1124 = vld [vmem:[#allocation11 + $0xa8] sm:$0xff]
        %v1125 = vld [vmem:[#allocation11 + $0xb0] sm:$0xff]
        %v1126 = vld [vmem:[#allocation11 + $0xb8] sm:$0xff]
        %v1127 = vld [vmem:[#allocation11 + $0xc0] sm:$0xff]
        %v1128 = vld [vmem:[#allocation11 + $0xc8] sm:$0xff]
        %v1129 = vld [vmem:[#allocation11 + $0xd0] sm:$0xff]
        %v1130 = vld [vmem:[#allocation11 + $0xd8] sm:$0xff]
        %v1131 = vld [vmem:[#allocation11 + $0xe0] sm:$0xff]
        %v1132 = vld [vmem:[#allocation11 + $0xe8] sm:$0xff]
        %v1133 = vld [vmem:[#allocation11 + $0xf0] sm:$0xff]
        %v1134 = vld [vmem:[#allocation11 + $0xf8] sm:$0xff]
        %v1135 = vld [vmem:[%s3] sm:$0x3]
        %v1137 = vlaneseq
        %v1138 = vshrl.u32 %v1137, 7
        %v1139 = vsub.s32 0, %v1138
        %v1140 = vrot.slane %v1135, %v1139
        %v1141 = vlaneseq
        %v1142 = vshrl.u32 %v1141, 7
        %v1143 = vsub.s32 1, %v1142
        %v1144 = vrot.slane %v1135, %v1143
        %v1147 = vand.u32 %v1134, 4294901760
        %1148 = vmatprep.subr.mxu0 %v1147
        %v1149 = vand.u32 %v1133, 4294901760
        %1150 = vmatpush1.msra.mxu0 %v1149
        %v1151 = vand.u32 %v1132, 4294901760
        %1152 = vmatprep.subr.mxu0 %v1151
        %v1153 = vand.u32 %v1131, 4294901760
        %1154 = vmatpush1.msra.mxu0 %v1153
        %v1155 = vand.u32 %v1130, 4294901760
        %1156 = vmatprep.subr.mxu0 %v1155
        %v1157 = vand.u32 %v1129, 4294901760
        %1158 = vmatpush1.msra.mxu0 %v1157
        %v1159 = vand.u32 %v1128, 4294901760
        %1160 = vmatprep.subr.mxu0 %v1159
        %v1161 = vand.u32 %v1127, 4294901760
        %1162 = vmatpush1.msra.mxu0 %v1161
        %v1163 = vand.u32 %v1126, 4294901760
        %1164 = vmatprep.subr.mxu0 %v1163
        %v1165 = vand.u32 %v1125, 4294901760
        %1166 = vmatpush1.msra.mxu0 %v1165
        %v1167 = vand.u32 %v1124, 4294901760
        %1168 = vmatprep.subr.mxu0 %v1167
        %v1169 = vand.u32 %v1123, 4294901760
        %1170 = vmatpush1.msra.mxu0 %v1169
        %v1171 = vand.u32 %v1122, 4294901760
        %1172 = vmatprep.subr.mxu0 %v1171
        %v1173 = vand.u32 %v1121, 4294901760
        %1174 = vmatpush1.msra.mxu0 %v1173
        %v1175 = vand.u32 %v1120, 4294901760
        %1176 = vmatprep.subr.mxu0 %v1175
        %v1177 = vand.u32 %v1119, 4294901760
        %1178 = vmatpush1.msra.mxu0 %v1177
        %v1179 = vand.u32 %v1118, 4294901760
        %1180 = vmatprep.subr.mxu0 %v1179
        %v1181 = vand.u32 %v1117, 4294901760
        %1182 = vmatpush1.msra.mxu0 %v1181
        %v1183 = vand.u32 %v1116, 4294901760
        %1184 = vmatprep.subr.mxu0 %v1183
        %v1185 = vand.u32 %v1115, 4294901760
        %1186 = vmatpush1.msra.mxu0 %v1185
        %v1187 = vand.u32 %v1114, 4294901760
        %1188 = vmatprep.subr.mxu0 %v1187
        %v1189 = vand.u32 %v1113, 4294901760
        %1190 = vmatpush1.msra.mxu0 %v1189
        %v1191 = vand.u32 %v1112, 4294901760
        %1192 = vmatprep.subr.mxu0 %v1191
        %v1193 = vand.u32 %v1111, 4294901760
        %1194 = vmatpush1.msra.mxu0 %v1193
        %v1195 = vand.u32 %v1110, 4294901760
        %1196 = vmatprep.subr.mxu0 %v1195
        %v1197 = vand.u32 %v1109, 4294901760
        %1198 = vmatpush1.msra.mxu0 %v1197
        %v1199 = vand.u32 %v1108, 4294901760
        %1200 = vmatprep.subr.mxu0 %v1199
        %v1201 = vand.u32 %v1107, 4294901760
        %1202 = vmatpush1.msra.mxu0 %v1201
        %v1203 = vand.u32 %v1106, 4294901760
        %1204 = vmatprep.subr.mxu0 %v1203
        %v1205 = vand.u32 %v1105, 4294901760
        %1206 = vmatpush1.msra.mxu0 %v1205
        %v1207 = vand.u32 %v1104, 4294901760
        %1208 = vmatprep.subr.mxu0 %v1207
        %v1209 = vand.u32 %v1103, 4294901760
        %1210 = vmatpush1.msra.mxu0 %v1209
        %1211 = vmatprep.subr.mxu0 0.0
        %1212 = vmatpush2.msra.mxu0 0.0
        %1213 = vmatprep.subr.mxu0 0.0
        %1214 = vmatpush2.msra.mxu0 0.0
        %1215 = vmatprep.subr.mxu0 0.0
        %1216 = vmatpush2.msra.mxu0 0.0
        %1217 = vmatprep.subr.mxu0 0.0
        %1218 = vmatpush2.msra.mxu0 0.0
        %1219 = vmatprep.subr.mxu0 0.0
        %1220 = vmatpush2.msra.mxu0 0.0
        %1221 = vmatprep.subr.mxu0 0.0
        %1222 = vmatpush2.msra.mxu0 0.0
        %1223 = vmatprep.subr.mxu0 0.0
        %1224 = vmatpush2.msra.mxu0 0.0
        %1225 = vmatprep.subr.mxu0 0.0
        %1226 = vmatpush2.msra.mxu0 0.0
        %1227 = vmatprep.subr.mxu0 0.0
        %1228 = vmatpush2.msra.mxu0 0.0
        %1229 = vmatprep.subr.mxu0 0.0
        %1230 = vmatpush2.msra.mxu0 0.0
        %1231 = vmatprep.subr.mxu0 0.0
        %1232 = vmatpush2.msra.mxu0 0.0
        %1233 = vmatprep.subr.mxu0 0.0
        %1234 = vmatpush2.msra.mxu0 0.0
        %1235 = vmatprep.subr.mxu0 0.0
        %1236 = vmatpush2.msra.mxu0 0.0
        %1237 = vmatprep.subr.mxu0 0.0
        %1238 = vmatpush2.msra.mxu0 0.0
        %1239 = vmatprep.subr.mxu0 0.0
        %1240 = vmatpush2.msra.mxu0 0.0
        %1241 = vmatprep.subr.mxu0 0.0
        %1242 = vmatpush2.msra.mxu0 0.0
        %1243 = vmatprep.mubr.f32.mxu0 0.0
        %v1244 = vand.u32 %v1102, 4294901760
        %v1245 = vsub.f32 %v1102, %v1244
        %v1246 = vand.u32 %v1245, 4294901760
        %v1247 = vsub.f32 %v1245, %v1246
        %v1248 = vand.u32 %v1247, 4294901760
        %1249 = vmatmul.mubr.f32.gmra.mxu0 %v1248
        %v1250 = vpop.f32.mrf.mxu0
        %v1251 = vadd.f32 %v1140, %v1250
        %v1252 = vpop.f32.mrf.mxu0
        %v1253 = vadd.f32 %v1144, %v1252
        %1254 = vdwg.mxu0
        %v1255 = vand.u32 %v1134, 4294901760
        %v1256 = vsub.f32 %v1134, %v1255
        %v1257 = vand.u32 %v1256, 4294901760
        %v1258 = vsub.f32 %v1256, %v1257
        %v1259 = vand.u32 %v1258, 4294901760
        %1260 = vmatprep.subr.mxu0 %v1259
        %v1261 = vand.u32 %v1133, 4294901760
        %v1262 = vsub.f32 %v1133, %v1261
        %v1263 = vand.u32 %v1262, 4294901760
        %v1264 = vsub.f32 %v1262, %v1263
        %v1265 = vand.u32 %v1264, 4294901760
        %1266 = vmatpush1.msra.mxu0 %v1265
        %v1267 = vand.u32 %v1132, 4294901760
        %v1268 = vsub.f32 %v1132, %v1267
        %v1269 = vand.u32 %v1268, 4294901760
        %v1270 = vsub.f32 %v1268, %v1269
        %v1271 = vand.u32 %v1270, 4294901760
        %1272 = vmatprep.subr.mxu0 %v1271
        %v1273 = vand.u32 %v1131, 4294901760
        %v1274 = vsub.f32 %v1131, %v1273
        %v1275 = vand.u32 %v1274, 4294901760
        %v1276 = vsub.f32 %v1274, %v1275
        %v1277 = vand.u32 %v1276, 4294901760
        %1278 = vmatpush1.msra.mxu0 %v1277
        %v1279 = vand.u32 %v1130, 4294901760
        %v1280 = vsub.f32 %v1130, %v1279
        %v1281 = vand.u32 %v1280, 4294901760
        %v1282 = vsub.f32 %v1280, %v1281
        %v1283 = vand.u32 %v1282, 4294901760
        %1284 = vmatprep.subr.mxu0 %v1283
        %v1285 = vand.u32 %v1129, 4294901760
        %v1286 = vsub.f32 %v1129, %v1285
        %v1287 = vand.u32 %v1286, 4294901760
        %v1288 = vsub.f32 %v1286, %v1287
        %v1289 = vand.u32 %v1288, 4294901760
        %1290 = vmatpush1.msra.mxu0 %v1289
        %v1291 = vand.u32 %v1128, 4294901760
        %v1292 = vsub.f32 %v1128, %v1291
        %v1293 = vand.u32 %v1292, 4294901760
        %v1294 = vsub.f32 %v1292, %v1293
        %v1295 = vand.u32 %v1294, 4294901760
        %1296 = vmatprep.subr.mxu0 %v1295
        %v1297 = vand.u32 %v1127, 4294901760
        %v1298 = vsub.f32 %v1127, %v1297
        %v1299 = vand.u32 %v1298, 4294901760
        %v1300 = vsub.f32 %v1298, %v1299
        %v1301 = vand.u32 %v1300, 4294901760
        %1302 = vmatpush1.msra.mxu0 %v1301
        %v1303 = vand.u32 %v1126, 4294901760
        %v1304 = vsub.f32 %v1126, %v1303
        %v1305 = vand.u32 %v1304, 4294901760
        %v1306 = vsub.f32 %v1304, %v1305
        %v1307 = vand.u32 %v1306, 4294901760
        %1308 = vmatprep.subr.mxu0 %v1307
        %v1309 = vand.u32 %v1125, 4294901760
        %v1310 = vsub.f32 %v1125, %v1309
        %v1311 = vand.u32 %v1310, 4294901760
        %v1312 = vsub.f32 %v1310, %v1311
        %v1313 = vand.u32 %v1312, 4294901760
        %1314 = vmatpush1.msra.mxu0 %v1313
        %v1315 = vand.u32 %v1124, 4294901760
        %v1316 = vsub.f32 %v1124, %v1315
        %v1317 = vand.u32 %v1316, 4294901760
        %v1318 = vsub.f32 %v1316, %v1317
        %v1319 = vand.u32 %v1318, 4294901760
        %1320 = vmatprep.subr.mxu0 %v1319
        %v1321 = vand.u32 %v1123, 4294901760
        %v1322 = vsub.f32 %v1123, %v1321
        %v1323 = vand.u32 %v1322, 4294901760
        %v1324 = vsub.f32 %v1322, %v1323
        %v1325 = vand.u32 %v1324, 4294901760
        %1326 = vmatpush1.msra.mxu0 %v1325
        %v1327 = vand.u32 %v1122, 4294901760
        %v1328 = vsub.f32 %v1122, %v1327
        %v1329 = vand.u32 %v1328, 4294901760
        %v1330 = vsub.f32 %v1328, %v1329
        %v1331 = vand.u32 %v1330, 4294901760
        %1332 = vmatprep.subr.mxu0 %v1331
        %v1333 = vand.u32 %v1121, 4294901760
        %v1334 = vsub.f32 %v1121, %v1333
        %v1335 = vand.u32 %v1334, 4294901760
        %v1336 = vsub.f32 %v1334, %v1335
        %v1337 = vand.u32 %v1336, 4294901760
        %1338 = vmatpush1.msra.mxu0 %v1337
        %v1339 = vand.u32 %v1120, 4294901760
        %v1340 = vsub.f32 %v1120, %v1339
        %v1341 = vand.u32 %v1340, 4294901760
        %v1342 = vsub.f32 %v1340, %v1341
        %v1343 = vand.u32 %v1342, 4294901760
        %1344 = vmatprep.subr.mxu0 %v1343
        %v1345 = vand.u32 %v1119, 4294901760
        %v1346 = vsub.f32 %v1119, %v1345
        %v1347 = vand.u32 %v1346, 4294901760
        %v1348 = vsub.f32 %v1346, %v1347
        %v1349 = vand.u32 %v1348, 4294901760
        %1350 = vmatpush1.msra.mxu0 %v1349
        %v1351 = vand.u32 %v1118, 4294901760
        %v1352 = vsub.f32 %v1118, %v1351
        %v1353 = vand.u32 %v1352, 4294901760
        %v1354 = vsub.f32 %v1352, %v1353
        %v1355 = vand.u32 %v1354, 4294901760
        %1356 = vmatprep.subr.mxu0 %v1355
        %v1357 = vand.u32 %v1117, 4294901760
        %v1358 = vsub.f32 %v1117, %v1357
        %v1359 = vand.u32 %v1358, 4294901760
        %v1360 = vsub.f32 %v1358, %v1359
        %v1361 = vand.u32 %v1360, 4294901760
        %1362 = vmatpush1.msra.mxu0 %v1361
        %v1363 = vand.u32 %v1116, 4294901760
        %v1364 = vsub.f32 %v1116, %v1363
        %v1365 = vand.u32 %v1364, 4294901760
        %v1366 = vsub.f32 %v1364, %v1365
        %v1367 = vand.u32 %v1366, 4294901760
        %1368 = vmatprep.subr.mxu0 %v1367
        %v1369 = vand.u32 %v1115, 4294901760
        %v1370 = vsub.f32 %v1115, %v1369
        %v1371 = vand.u32 %v1370, 4294901760
        %v1372 = vsub.f32 %v1370, %v1371
        %v1373 = vand.u32 %v1372, 4294901760
        %1374 = vmatpush1.msra.mxu0 %v1373
        %v1375 = vand.u32 %v1114, 4294901760
        %v1376 = vsub.f32 %v1114, %v1375
        %v1377 = vand.u32 %v1376, 4294901760
        %v1378 = vsub.f32 %v1376, %v1377
        %v1379 = vand.u32 %v1378, 4294901760
        %1380 = vmatprep.subr.mxu0 %v1379
        %v1381 = vand.u32 %v1113, 4294901760
        %v1382 = vsub.f32 %v1113, %v1381
        %v1383 = vand.u32 %v1382, 4294901760
        %v1384 = vsub.f32 %v1382, %v1383
        %v1385 = vand.u32 %v1384, 4294901760
        %1386 = vmatpush1.msra.mxu0 %v1385
        %v1387 = vand.u32 %v1112, 4294901760
        %v1388 = vsub.f32 %v1112, %v1387
        %v1389 = vand.u32 %v1388, 4294901760
        %v1390 = vsub.f32 %v1388, %v1389
        %v1391 = vand.u32 %v1390, 4294901760
        %1392 = vmatprep.subr.mxu0 %v1391
        %v1393 = vand.u32 %v1111, 4294901760
        %v1394 = vsub.f32 %v1111, %v1393
        %v1395 = vand.u32 %v1394, 4294901760
        %v1396 = vsub.f32 %v1394, %v1395
        %v1397 = vand.u32 %v1396, 4294901760
        %1398 = vmatpush1.msra.mxu0 %v1397
        %v1399 = vand.u32 %v1110, 4294901760
        %v1400 = vsub.f32 %v1110, %v1399
        %v1401 = vand.u32 %v1400, 4294901760
        %v1402 = vsub.f32 %v1400, %v1401
        %v1403 = vand.u32 %v1402, 4294901760
        %1404 = vmatprep.subr.mxu0 %v1403
        %v1405 = vand.u32 %v1109, 4294901760
        %v1406 = vsub.f32 %v1109, %v1405
        %v1407 = vand.u32 %v1406, 4294901760
        %v1408 = vsub.f32 %v1406, %v1407
        %v1409 = vand.u32 %v1408, 4294901760
        %1410 = vmatpush1.msra.mxu0 %v1409
        %v1411 = vand.u32 %v1108, 4294901760
        %v1412 = vsub.f32 %v1108, %v1411
        %v1413 = vand.u32 %v1412, 4294901760
        %v1414 = vsub.f32 %v1412, %v1413
        %v1415 = vand.u32 %v1414, 4294901760
        %1416 = vmatprep.subr.mxu0 %v1415
        %v1417 = vand.u32 %v1107, 4294901760
        %v1418 = vsub.f32 %v1107, %v1417
        %v1419 = vand.u32 %v1418, 4294901760
        %v1420 = vsub.f32 %v1418, %v1419
        %v1421 = vand.u32 %v1420, 4294901760
        %1422 = vmatpush1.msra.mxu0 %v1421
        %v1423 = vand.u32 %v1106, 4294901760
        %v1424 = vsub.f32 %v1106, %v1423
        %v1425 = vand.u32 %v1424, 4294901760
        %v1426 = vsub.f32 %v1424, %v1425
        %v1427 = vand.u32 %v1426, 4294901760
        %1428 = vmatprep.subr.mxu0 %v1427
        %v1429 = vand.u32 %v1105, 4294901760
        %v1430 = vsub.f32 %v1105, %v1429
        %v1431 = vand.u32 %v1430, 4294901760
        %v1432 = vsub.f32 %v1430, %v1431
        %v1433 = vand.u32 %v1432, 4294901760
        %1434 = vmatpush1.msra.mxu0 %v1433
        %v1435 = vand.u32 %v1104, 4294901760
        %v1436 = vsub.f32 %v1104, %v1435
        %v1437 = vand.u32 %v1436, 4294901760
        %v1438 = vsub.f32 %v1436, %v1437
        %v1439 = vand.u32 %v1438, 4294901760
        %1440 = vmatprep.subr.mxu0 %v1439
        %v1441 = vand.u32 %v1103, 4294901760
        %v1442 = vsub.f32 %v1103, %v1441
        %v1443 = vand.u32 %v1442, 4294901760
        %v1444 = vsub.f32 %v1442, %v1443
        %v1445 = vand.u32 %v1444, 4294901760
        %1446 = vmatpush1.msra.mxu0 %v1445
        %1447 = vmatprep.subr.mxu0 0.0
        %1448 = vmatpush2.msra.mxu0 0.0
        %1449 = vmatprep.subr.mxu0 0.0
        %1450 = vmatpush2.msra.mxu0 0.0
        %1451 = vmatprep.subr.mxu0 0.0
        %1452 = vmatpush2.msra.mxu0 0.0
        %1453 = vmatprep.subr.mxu0 0.0
        %1454 = vmatpush2.msra.mxu0 0.0
        %1455 = vmatprep.subr.mxu0 0.0
        %1456 = vmatpush2.msra.mxu0 0.0
        %1457 = vmatprep.subr.mxu0 0.0
        %1458 = vmatpush2.msra.mxu0 0.0
        %1459 = vmatprep.subr.mxu0 0.0
        %1460 = vmatpush2.msra.mxu0 0.0
        %1461 = vmatprep.subr.mxu0 0.0
        %1462 = vmatpush2.msra.mxu0 0.0
        %1463 = vmatprep.subr.mxu0 0.0
        %1464 = vmatpush2.msra.mxu0 0.0
        %1465 = vmatprep.subr.mxu0 0.0
        %1466 = vmatpush2.msra.mxu0 0.0
        %1467 = vmatprep.subr.mxu0 0.0
        %1468 = vmatpush2.msra.mxu0 0.0
        %1469 = vmatprep.subr.mxu0 0.0
        %1470 = vmatpush2.msra.mxu0 0.0
        %1471 = vmatprep.subr.mxu0 0.0
        %1472 = vmatpush2.msra.mxu0 0.0
        %1473 = vmatprep.subr.mxu0 0.0
        %1474 = vmatpush2.msra.mxu0 0.0
        %1475 = vmatprep.subr.mxu0 0.0
        %1476 = vmatpush2.msra.mxu0 0.0
        %1477 = vmatprep.subr.mxu0 0.0
        %1478 = vmatpush2.msra.mxu0 0.0
        %1479 = vmatprep.mubr.f32.mxu0 0.0
        %v1480 = vand.u32 %v1102, 4294901760
        %1481 = vmatmul.mubr.f32.gmra.mxu0 %v1480
        %v1482 = vpop.f32.mrf.mxu0
        %v1483 = vadd.f32 %v1251, %v1482
        %v1484 = vpop.f32.mrf.mxu0
        %v1485 = vadd.f32 %v1253, %v1484
        %1486 = vdwg.mxu0
        %v1487 = vand.u32 %v1134, 4294901760
        %v1488 = vsub.f32 %v1134, %v1487
        %1489 = vmatprep.subr.mxu0 %v1488
        %v1490 = vand.u32 %v1133, 4294901760
        %v1491 = vsub.f32 %v1133, %v1490
        %1492 = vmatpush1.msra.mxu0 %v1491
        %v1493 = vand.u32 %v1132, 4294901760
        %v1494 = vsub.f32 %v1132, %v1493
        %1495 = vmatprep.subr.mxu0 %v1494
        %v1496 = vand.u32 %v1131, 4294901760
        %v1497 = vsub.f32 %v1131, %v1496
        %1498 = vmatpush1.msra.mxu0 %v1497
        %v1499 = vand.u32 %v1130, 4294901760
        %v1500 = vsub.f32 %v1130, %v1499
        %1501 = vmatprep.subr.mxu0 %v1500
        %v1502 = vand.u32 %v1129, 4294901760
        %v1503 = vsub.f32 %v1129, %v1502
        %1504 = vmatpush1.msra.mxu0 %v1503
        %v1505 = vand.u32 %v1128, 4294901760
        %v1506 = vsub.f32 %v1128, %v1505
        %1507 = vmatprep.subr.mxu0 %v1506
        %v1508 = vand.u32 %v1127, 4294901760
        %v1509 = vsub.f32 %v1127, %v1508
        %1510 = vmatpush1.msra.mxu0 %v1509
        %v1511 = vand.u32 %v1126, 4294901760
        %v1512 = vsub.f32 %v1126, %v1511
        %1513 = vmatprep.subr.mxu0 %v1512
        %v1514 = vand.u32 %v1125, 4294901760
        %v1515 = vsub.f32 %v1125, %v1514
        %1516 = vmatpush1.msra.mxu0 %v1515
        %v1517 = vand.u32 %v1124, 4294901760
        %v1518 = vsub.f32 %v1124, %v1517
        %1519 = vmatprep.subr.mxu0 %v1518
        %v1520 = vand.u32 %v1123, 4294901760
        %v1521 = vsub.f32 %v1123, %v1520
        %1522 = vmatpush1.msra.mxu0 %v1521
        %v1523 = vand.u32 %v1122, 4294901760
        %v1524 = vsub.f32 %v1122, %v1523
        %1525 = vmatprep.subr.mxu0 %v1524
        %v1526 = vand.u32 %v1121, 4294901760
        %v1527 = vsub.f32 %v1121, %v1526
        %1528 = vmatpush1.msra.mxu0 %v1527
        %v1529 = vand.u32 %v1120, 4294901760
        %v1530 = vsub.f32 %v1120, %v1529
        %1531 = vmatprep.subr.mxu0 %v1530
        %v1532 = vand.u32 %v1119, 4294901760
        %v1533 = vsub.f32 %v1119, %v1532
        %1534 = vmatpush1.msra.mxu0 %v1533
        %v1535 = vand.u32 %v1118, 4294901760
        %v1536 = vsub.f32 %v1118, %v1535
        %1537 = vmatprep.subr.mxu0 %v1536
        %v1538 = vand.u32 %v1117, 4294901760
        %v1539 = vsub.f32 %v1117, %v1538
        %1540 = vmatpush1.msra.mxu0 %v1539
        %v1541 = vand.u32 %v1116, 4294901760
        %v1542 = vsub.f32 %v1116, %v1541
        %1543 = vmatprep.subr.mxu0 %v1542
        %v1544 = vand.u32 %v1115, 4294901760
        %v1545 = vsub.f32 %v1115, %v1544
        %1546 = vmatpush1.msra.mxu0 %v1545
        %v1547 = vand.u32 %v1114, 4294901760
        %v1548 = vsub.f32 %v1114, %v1547
        %1549 = vmatprep.subr.mxu0 %v1548
        %v1550 = vand.u32 %v1113, 4294901760
        %v1551 = vsub.f32 %v1113, %v1550
        %1552 = vmatpush1.msra.mxu0 %v1551
        %v1553 = vand.u32 %v1112, 4294901760
        %v1554 = vsub.f32 %v1112, %v1553
        %1555 = vmatprep.subr.mxu0 %v1554
        %v1556 = vand.u32 %v1111, 4294901760
        %v1557 = vsub.f32 %v1111, %v1556
        %1558 = vmatpush1.msra.mxu0 %v1557
        %v1559 = vand.u32 %v1110, 4294901760
        %v1560 = vsub.f32 %v1110, %v1559
        %1561 = vmatprep.subr.mxu0 %v1560
        %v1562 = vand.u32 %v1109, 4294901760
        %v1563 = vsub.f32 %v1109, %v1562
        %1564 = vmatpush1.msra.mxu0 %v1563
        %v1565 = vand.u32 %v1108, 4294901760
        %v1566 = vsub.f32 %v1108, %v1565
        %1567 = vmatprep.subr.mxu0 %v1566
        %v1568 = vand.u32 %v1107, 4294901760
        %v1569 = vsub.f32 %v1107, %v1568
        %1570 = vmatpush1.msra.mxu0 %v1569
        %v1571 = vand.u32 %v1106, 4294901760
        %v1572 = vsub.f32 %v1106, %v1571
        %1573 = vmatprep.subr.mxu0 %v1572
        %v1574 = vand.u32 %v1105, 4294901760
        %v1575 = vsub.f32 %v1105, %v1574
        %1576 = vmatpush1.msra.mxu0 %v1575
        %v1577 = vand.u32 %v1104, 4294901760
        %v1578 = vsub.f32 %v1104, %v1577
        %1579 = vmatprep.subr.mxu0 %v1578
        %v1580 = vand.u32 %v1103, 4294901760
        %v1581 = vsub.f32 %v1103, %v1580
        %1582 = vmatpush1.msra.mxu0 %v1581
        %1583 = vmatprep.subr.mxu0 0.0
        %1584 = vmatpush2.msra.mxu0 0.0
        %1585 = vmatprep.subr.mxu0 0.0
        %1586 = vmatpush2.msra.mxu0 0.0
        %1587 = vmatprep.subr.mxu0 0.0
        %1588 = vmatpush2.msra.mxu0 0.0
        %1589 = vmatprep.subr.mxu0 0.0
        %1590 = vmatpush2.msra.mxu0 0.0
        %1591 = vmatprep.subr.mxu0 0.0
        %1592 = vmatpush2.msra.mxu0 0.0
        %1593 = vmatprep.subr.mxu0 0.0
        %1594 = vmatpush2.msra.mxu0 0.0
        %1595 = vmatprep.subr.mxu0 0.0
        %1596 = vmatpush2.msra.mxu0 0.0
        %1597 = vmatprep.subr.mxu0 0.0
        %1598 = vmatpush2.msra.mxu0 0.0
        %1599 = vmatprep.subr.mxu0 0.0
        %1600 = vmatpush2.msra.mxu0 0.0
        %1601 = vmatprep.subr.mxu0 0.0
        %1602 = vmatpush2.msra.mxu0 0.0
        %1603 = vmatprep.subr.mxu0 0.0
        %1604 = vmatpush2.msra.mxu0 0.0
        %1605 = vmatprep.subr.mxu0 0.0
        %1606 = vmatpush2.msra.mxu0 0.0
        %1607 = vmatprep.subr.mxu0 0.0
        %1608 = vmatpush2.msra.mxu0 0.0
        %1609 = vmatprep.subr.mxu0 0.0
        %1610 = vmatpush2.msra.mxu0 0.0
        %1611 = vmatprep.subr.mxu0 0.0
        %1612 = vmatpush2.msra.mxu0 0.0
        %1613 = vmatprep.subr.mxu0 0.0
        %1614 = vmatpush2.msra.mxu0 0.0
        %1615 = vmatprep.mubr.f32.mxu0 0.0
        %v1616 = vand.u32 %v1102, 4294901760
        %v1617 = vsub.f32 %v1102, %v1616
        %1618 = vmatmul.mubr.f32.gmra.mxu0 %v1617
        %v1619 = vpop.f32.mrf.mxu0
        %v1620 = vadd.f32 %v1483, %v1619
        %v1621 = vpop.f32.mrf.mxu0
        %v1622 = vadd.f32 %v1485, %v1621
        %1623 = vdwg.mxu0
        %v1624 = vand.u32 %v1134, 4294901760
        %1625 = vmatprep.subr.mxu0 %v1624
        %v1626 = vand.u32 %v1133, 4294901760
        %1627 = vmatpush1.msra.mxu0 %v1626
        %v1628 = vand.u32 %v1132, 4294901760
        %1629 = vmatprep.subr.mxu0 %v1628
        %v1630 = vand.u32 %v1131, 4294901760
        %1631 = vmatpush1.msra.mxu0 %v1630
        %v1632 = vand.u32 %v1130, 4294901760
        %1633 = vmatprep.subr.mxu0 %v1632
        %v1634 = vand.u32 %v1129, 4294901760
        %1635 = vmatpush1.msra.mxu0 %v1634
        %v1636 = vand.u32 %v1128, 4294901760
        %1637 = vmatprep.subr.mxu0 %v1636
        %v1638 = vand.u32 %v1127, 4294901760
        %1639 = vmatpush1.msra.mxu0 %v1638
        %v1640 = vand.u32 %v1126, 4294901760
        %1641 = vmatprep.subr.mxu0 %v1640
        %v1642 = vand.u32 %v1125, 4294901760
        %1643 = vmatpush1.msra.mxu0 %v1642
        %v1644 = vand.u32 %v1124, 4294901760
        %1645 = vmatprep.subr.mxu0 %v1644
        %v1646 = vand.u32 %v1123, 4294901760
        %1647 = vmatpush1.msra.mxu0 %v1646
        %v1648 = vand.u32 %v1122, 4294901760
        %1649 = vmatprep.subr.mxu0 %v1648
        %v1650 = vand.u32 %v1121, 4294901760
        %1651 = vmatpush1.msra.mxu0 %v1650
        %v1652 = vand.u32 %v1120, 4294901760
        %1653 = vmatprep.subr.mxu0 %v1652
        %v1654 = vand.u32 %v1119, 4294901760
        %1655 = vmatpush1.msra.mxu0 %v1654
        %v1656 = vand.u32 %v1118, 4294901760
        %1657 = vmatprep.subr.mxu0 %v1656
        %v1658 = vand.u32 %v1117, 4294901760
        %1659 = vmatpush1.msra.mxu0 %v1658
        %v1660 = vand.u32 %v1116, 4294901760
        %1661 = vmatprep.subr.mxu0 %v1660
        %v1662 = vand.u32 %v1115, 4294901760
        %1663 = vmatpush1.msra.mxu0 %v1662
        %v1664 = vand.u32 %v1114, 4294901760
        %1665 = vmatprep.subr.mxu0 %v1664
        %v1666 = vand.u32 %v1113, 4294901760
        %1667 = vmatpush1.msra.mxu0 %v1666
        %v1668 = vand.u32 %v1112, 4294901760
        %1669 = vmatprep.subr.mxu0 %v1668
        %v1670 = vand.u32 %v1111, 4294901760
        %1671 = vmatpush1.msra.mxu0 %v1670
        %v1672 = vand.u32 %v1110, 4294901760
        %1673 = vmatprep.subr.mxu0 %v1672
        %v1674 = vand.u32 %v1109, 4294901760
        %1675 = vmatpush1.msra.mxu0 %v1674
        %v1676 = vand.u32 %v1108, 4294901760
        %1677 = vmatprep.subr.mxu0 %v1676
        %v1678 = vand.u32 %v1107, 4294901760
        %1679 = vmatpush1.msra.mxu0 %v1678
        %v1680 = vand.u32 %v1106, 4294901760
        %1681 = vmatprep.subr.mxu0 %v1680
        %v1682 = vand.u32 %v1105, 4294901760
        %1683 = vmatpush1.msra.mxu0 %v1682
        %v1684 = vand.u32 %v1104, 4294901760
        %1685 = vmatprep.subr.mxu0 %v1684
        %v1686 = vand.u32 %v1103, 4294901760
        %1687 = vmatpush1.msra.mxu0 %v1686
        %1688 = vmatprep.subr.mxu0 0.0
        %1689 = vmatpush2.msra.mxu0 0.0
        %1690 = vmatprep.subr.mxu0 0.0
        %1691 = vmatpush2.msra.mxu0 0.0
        %1692 = vmatprep.subr.mxu0 0.0
        %1693 = vmatpush2.msra.mxu0 0.0
        %1694 = vmatprep.subr.mxu0 0.0
        %1695 = vmatpush2.msra.mxu0 0.0
        %1696 = vmatprep.subr.mxu0 0.0
        %1697 = vmatpush2.msra.mxu0 0.0
        %1698 = vmatprep.subr.mxu0 0.0
        %1699 = vmatpush2.msra.mxu0 0.0
        %1700 = vmatprep.subr.mxu0 0.0
        %1701 = vmatpush2.msra.mxu0 0.0
        %1702 = vmatprep.subr.mxu0 0.0
        %1703 = vmatpush2.msra.mxu0 0.0
        %1704 = vmatprep.subr.mxu0 0.0
        %1705 = vmatpush2.msra.mxu0 0.0
        %1706 = vmatprep.subr.mxu0 0.0
        %1707 = vmatpush2.msra.mxu0 0.0
        %1708 = vmatprep.subr.mxu0 0.0
        %1709 = vmatpush2.msra.mxu0 0.0
        %1710 = vmatprep.subr.mxu0 0.0
        %1711 = vmatpush2.msra.mxu0 0.0
        %1712 = vmatprep.subr.mxu0 0.0
        %1713 = vmatpush2.msra.mxu0 0.0
        %1714 = vmatprep.subr.mxu0 0.0
        %1715 = vmatpush2.msra.mxu0 0.0
        %1716 = vmatprep.subr.mxu0 0.0
        %1717 = vmatpush2.msra.mxu0 0.0
        %1718 = vmatprep.subr.mxu0 0.0
        %1719 = vmatpush2.msra.mxu0 0.0
        %1720 = vmatprep.mubr.f32.mxu0 0.0
        %v1721 = vand.u32 %v1102, 4294901760
        %v1722 = vsub.f32 %v1102, %v1721
        %v1723 = vand.u32 %v1722, 4294901760
        %1724 = vmatmul.mubr.f32.gmra.mxu0 %v1723
        %v1725 = vpop.f32.mrf.mxu0
        %v1726 = vadd.f32 %v1620, %v1725
        %v1727 = vpop.f32.mrf.mxu0
        %v1728 = vadd.f32 %v1622, %v1727
        %1729 = vdwg.mxu0
        %v1730 = vand.u32 %v1134, 4294901760
        %v1731 = vsub.f32 %v1134, %v1730
        %v1732 = vand.u32 %v1731, 4294901760
        %1733 = vmatprep.subr.mxu0 %v1732
        %v1734 = vand.u32 %v1133, 4294901760
        %v1735 = vsub.f32 %v1133, %v1734
        %v1736 = vand.u32 %v1735, 4294901760
        %1737 = vmatpush1.msra.mxu0 %v1736
        %v1738 = vand.u32 %v1132, 4294901760
        %v1739 = vsub.f32 %v1132, %v1738
        %v1740 = vand.u32 %v1739, 4294901760
        %1741 = vmatprep.subr.mxu0 %v1740
        %v1742 = vand.u32 %v1131, 4294901760
        %v1743 = vsub.f32 %v1131, %v1742
        %v1744 = vand.u32 %v1743, 4294901760
        %1745 = vmatpush1.msra.mxu0 %v1744
        %v1746 = vand.u32 %v1130, 4294901760
        %v1747 = vsub.f32 %v1130, %v1746
        %v1748 = vand.u32 %v1747, 4294901760
        %1749 = vmatprep.subr.mxu0 %v1748
        %v1750 = vand.u32 %v1129, 4294901760
        %v1751 = vsub.f32 %v1129, %v1750
        %v1752 = vand.u32 %v1751, 4294901760
        %1753 = vmatpush1.msra.mxu0 %v1752
        %v1754 = vand.u32 %v1128, 4294901760
        %v1755 = vsub.f32 %v1128, %v1754
        %v1756 = vand.u32 %v1755, 4294901760
        %1757 = vmatprep.subr.mxu0 %v1756
        %v1758 = vand.u32 %v1127, 4294901760
        %v1759 = vsub.f32 %v1127, %v1758
        %v1760 = vand.u32 %v1759, 4294901760
        %1761 = vmatpush1.msra.mxu0 %v1760
        %v1762 = vand.u32 %v1126, 4294901760
        %v1763 = vsub.f32 %v1126, %v1762
        %v1764 = vand.u32 %v1763, 4294901760
        %1765 = vmatprep.subr.mxu0 %v1764
        %v1766 = vand.u32 %v1125, 4294901760
        %v1767 = vsub.f32 %v1125, %v1766
        %v1768 = vand.u32 %v1767, 4294901760
        %1769 = vmatpush1.msra.mxu0 %v1768
        %v1770 = vand.u32 %v1124, 4294901760
        %v1771 = vsub.f32 %v1124, %v1770
        %v1772 = vand.u32 %v1771, 4294901760
        %1773 = vmatprep.subr.mxu0 %v1772
        %v1774 = vand.u32 %v1123, 4294901760
        %v1775 = vsub.f32 %v1123, %v1774
        %v1776 = vand.u32 %v1775, 4294901760
        %1777 = vmatpush1.msra.mxu0 %v1776
        %v1778 = vand.u32 %v1122, 4294901760
        %v1779 = vsub.f32 %v1122, %v1778
        %v1780 = vand.u32 %v1779, 4294901760
        %1781 = vmatprep.subr.mxu0 %v1780
        %v1782 = vand.u32 %v1121, 4294901760
        %v1783 = vsub.f32 %v1121, %v1782
        %v1784 = vand.u32 %v1783, 4294901760
        %1785 = vmatpush1.msra.mxu0 %v1784
        %v1786 = vand.u32 %v1120, 4294901760
        %v1787 = vsub.f32 %v1120, %v1786
        %v1788 = vand.u32 %v1787, 4294901760
        %1789 = vmatprep.subr.mxu0 %v1788
        %v1790 = vand.u32 %v1119, 4294901760
        %v1791 = vsub.f32 %v1119, %v1790
        %v1792 = vand.u32 %v1791, 4294901760
        %1793 = vmatpush1.msra.mxu0 %v1792
        %v1794 = vand.u32 %v1118, 4294901760
        %v1795 = vsub.f32 %v1118, %v1794
        %v1796 = vand.u32 %v1795, 4294901760
        %1797 = vmatprep.subr.mxu0 %v1796
        %v1798 = vand.u32 %v1117, 4294901760
        %v1799 = vsub.f32 %v1117, %v1798
        %v1800 = vand.u32 %v1799, 4294901760
        %1801 = vmatpush1.msra.mxu0 %v1800
        %v1802 = vand.u32 %v1116, 4294901760
        %v1803 = vsub.f32 %v1116, %v1802
        %v1804 = vand.u32 %v1803, 4294901760
        %1805 = vmatprep.subr.mxu0 %v1804
        %v1806 = vand.u32 %v1115, 4294901760
        %v1807 = vsub.f32 %v1115, %v1806
        %v1808 = vand.u32 %v1807, 4294901760
        %1809 = vmatpush1.msra.mxu0 %v1808
        %v1810 = vand.u32 %v1114, 4294901760
        %v1811 = vsub.f32 %v1114, %v1810
        %v1812 = vand.u32 %v1811, 4294901760
        %1813 = vmatprep.subr.mxu0 %v1812
        %v1814 = vand.u32 %v1113, 4294901760
        %v1815 = vsub.f32 %v1113, %v1814
        %v1816 = vand.u32 %v1815, 4294901760
        %1817 = vmatpush1.msra.mxu0 %v1816
        %v1818 = vand.u32 %v1112, 4294901760
        %v1819 = vsub.f32 %v1112, %v1818
        %v1820 = vand.u32 %v1819, 4294901760
        %1821 = vmatprep.subr.mxu0 %v1820
        %v1822 = vand.u32 %v1111, 4294901760
        %v1823 = vsub.f32 %v1111, %v1822
        %v1824 = vand.u32 %v1823, 4294901760
        %1825 = vmatpush1.msra.mxu0 %v1824
        %v1826 = vand.u32 %v1110, 4294901760
        %v1827 = vsub.f32 %v1110, %v1826
        %v1828 = vand.u32 %v1827, 4294901760
        %1829 = vmatprep.subr.mxu0 %v1828
        %v1830 = vand.u32 %v1109, 4294901760
        %v1831 = vsub.f32 %v1109, %v1830
        %v1832 = vand.u32 %v1831, 4294901760
        %1833 = vmatpush1.msra.mxu0 %v1832
        %v1834 = vand.u32 %v1108, 4294901760
        %v1835 = vsub.f32 %v1108, %v1834
        %v1836 = vand.u32 %v1835, 4294901760
        %1837 = vmatprep.subr.mxu0 %v1836
        %v1838 = vand.u32 %v1107, 4294901760
        %v1839 = vsub.f32 %v1107, %v1838
        %v1840 = vand.u32 %v1839, 4294901760
        %1841 = vmatpush1.msra.mxu0 %v1840
        %v1842 = vand.u32 %v1106, 4294901760
        %v1843 = vsub.f32 %v1106, %v1842
        %v1844 = vand.u32 %v1843, 4294901760
        %1845 = vmatprep.subr.mxu0 %v1844
        %v1846 = vand.u32 %v1105, 4294901760
        %v1847 = vsub.f32 %v1105, %v1846
        %v1848 = vand.u32 %v1847, 4294901760
        %1849 = vmatpush1.msra.mxu0 %v1848
        %v1850 = vand.u32 %v1104, 4294901760
        %v1851 = vsub.f32 %v1104, %v1850
        %v1852 = vand.u32 %v1851, 4294901760
        %1853 = vmatprep.subr.mxu0 %v1852
        %v1854 = vand.u32 %v1103, 4294901760
        %v1855 = vsub.f32 %v1103, %v1854
        %v1856 = vand.u32 %v1855, 4294901760
        %1857 = vmatpush1.msra.mxu0 %v1856
        %1858 = vmatprep.subr.mxu0 0.0
        %1859 = vmatpush2.msra.mxu0 0.0
        %1860 = vmatprep.subr.mxu0 0.0
        %1861 = vmatpush2.msra.mxu0 0.0
        %1862 = vmatprep.subr.mxu0 0.0
        %1863 = vmatpush2.msra.mxu0 0.0
        %1864 = vmatprep.subr.mxu0 0.0
        %1865 = vmatpush2.msra.mxu0 0.0
        %1866 = vmatprep.subr.mxu0 0.0
        %1867 = vmatpush2.msra.mxu0 0.0
        %1868 = vmatprep.subr.mxu0 0.0
        %1869 = vmatpush2.msra.mxu0 0.0
        %1870 = vmatprep.subr.mxu0 0.0
        %1871 = vmatpush2.msra.mxu0 0.0
        %1872 = vmatprep.subr.mxu0 0.0
        %1873 = vmatpush2.msra.mxu0 0.0
        %1874 = vmatprep.subr.mxu0 0.0
        %1875 = vmatpush2.msra.mxu0 0.0
        %1876 = vmatprep.subr.mxu0 0.0
        %1877 = vmatpush2.msra.mxu0 0.0
        %1878 = vmatprep.subr.mxu0 0.0
        %1879 = vmatpush2.msra.mxu0 0.0
        %1880 = vmatprep.subr.mxu0 0.0
        %1881 = vmatpush2.msra.mxu0 0.0
        %1882 = vmatprep.subr.mxu0 0.0
        %1883 = vmatpush2.msra.mxu0 0.0
        %1884 = vmatprep.subr.mxu0 0.0
        %1885 = vmatpush2.msra.mxu0 0.0
        %1886 = vmatprep.subr.mxu0 0.0
        %1887 = vmatpush2.msra.mxu0 0.0
        %1888 = vmatprep.subr.mxu0 0.0
        %1889 = vmatpush2.msra.mxu0 0.0
        %1890 = vmatprep.mubr.f32.mxu0 0.0
        %v1891 = vand.u32 %v1102, 4294901760
        %1892 = vmatmul.mubr.f32.gmra.mxu0 %v1891
        %v1893 = vpop.f32.mrf.mxu0
        %v1894 = vadd.f32 %v1726, %v1893
        %v1895 = vpop.f32.mrf.mxu0
        %v1896 = vadd.f32 %v1728, %v1895
        %1897 = vdwg.mxu0
        %v1898 = vand.u32 %v1134, 4294901760
        %1899 = vmatprep.subr.mxu0 %v1898
        %v1900 = vand.u32 %v1133, 4294901760
        %1901 = vmatpush1.msra.mxu0 %v1900
        %v1902 = vand.u32 %v1132, 4294901760
        %1903 = vmatprep.subr.mxu0 %v1902
        %v1904 = vand.u32 %v1131, 4294901760
        %1905 = vmatpush1.msra.mxu0 %v1904
        %v1906 = vand.u32 %v1130, 4294901760
        %1907 = vmatprep.subr.mxu0 %v1906
        %v1908 = vand.u32 %v1129, 4294901760
        %1909 = vmatpush1.msra.mxu0 %v1908
        %v1910 = vand.u32 %v1128, 4294901760
        %1911 = vmatprep.subr.mxu0 %v1910
        %v1912 = vand.u32 %v1127, 4294901760
        %1913 = vmatpush1.msra.mxu0 %v1912
        %v1914 = vand.u32 %v1126, 4294901760
        %1915 = vmatprep.subr.mxu0 %v1914
        %v1916 = vand.u32 %v1125, 4294901760
        %1917 = vmatpush1.msra.mxu0 %v1916
        %v1918 = vand.u32 %v1124, 4294901760
        %1919 = vmatprep.subr.mxu0 %v1918
        %v1920 = vand.u32 %v1123, 4294901760
        %1921 = vmatpush1.msra.mxu0 %v1920
        %v1922 = vand.u32 %v1122, 4294901760
        %1923 = vmatprep.subr.mxu0 %v1922
        %v1924 = vand.u32 %v1121, 4294901760
        %1925 = vmatpush1.msra.mxu0 %v1924
        %v1926 = vand.u32 %v1120, 4294901760
        %1927 = vmatprep.subr.mxu0 %v1926
        %v1928 = vand.u32 %v1119, 4294901760
        %1929 = vmatpush1.msra.mxu0 %v1928
        %v1930 = vand.u32 %v1118, 4294901760
        %1931 = vmatprep.subr.mxu0 %v1930
        %v1932 = vand.u32 %v1117, 4294901760
        %1933 = vmatpush1.msra.mxu0 %v1932
        %v1934 = vand.u32 %v1116, 4294901760
        %1935 = vmatprep.subr.mxu0 %v1934
        %v1936 = vand.u32 %v1115, 4294901760
        %1937 = vmatpush1.msra.mxu0 %v1936
        %v1938 = vand.u32 %v1114, 4294901760
        %1939 = vmatprep.subr.mxu0 %v1938
        %v1940 = vand.u32 %v1113, 4294901760
        %1941 = vmatpush1.msra.mxu0 %v1940
        %v1942 = vand.u32 %v1112, 4294901760
        %1943 = vmatprep.subr.mxu0 %v1942
        %v1944 = vand.u32 %v1111, 4294901760
        %1945 = vmatpush1.msra.mxu0 %v1944
        %v1946 = vand.u32 %v1110, 4294901760
        %1947 = vmatprep.subr.mxu0 %v1946
        %v1948 = vand.u32 %v1109, 4294901760
        %1949 = vmatpush1.msra.mxu0 %v1948
        %v1950 = vand.u32 %v1108, 4294901760
        %1951 = vmatprep.subr.mxu0 %v1950
        %v1952 = vand.u32 %v1107, 4294901760
        %1953 = vmatpush1.msra.mxu0 %v1952
        %v1954 = vand.u32 %v1106, 4294901760
        %1955 = vmatprep.subr.mxu0 %v1954
        %v1956 = vand.u32 %v1105, 4294901760
        %1957 = vmatpush1.msra.mxu0 %v1956
        %v1958 = vand.u32 %v1104, 4294901760
        %1959 = vmatprep.subr.mxu0 %v1958
        %v1960 = vand.u32 %v1103, 4294901760
        %1961 = vmatpush1.msra.mxu0 %v1960
        %1962 = vmatprep.subr.mxu0 0.0
        %1963 = vmatpush2.msra.mxu0 0.0
        %1964 = vmatprep.subr.mxu0 0.0
        %1965 = vmatpush2.msra.mxu0 0.0
        %1966 = vmatprep.subr.mxu0 0.0
        %1967 = vmatpush2.msra.mxu0 0.0
        %1968 = vmatprep.subr.mxu0 0.0
        %1969 = vmatpush2.msra.mxu0 0.0
        %1970 = vmatprep.subr.mxu0 0.0
        %1971 = vmatpush2.msra.mxu0 0.0
        %1972 = vmatprep.subr.mxu0 0.0
        %1973 = vmatpush2.msra.mxu0 0.0
        %1974 = vmatprep.subr.mxu0 0.0
        %1975 = vmatpush2.msra.mxu0 0.0
        %1976 = vmatprep.subr.mxu0 0.0
        %1977 = vmatpush2.msra.mxu0 0.0
        %1978 = vmatprep.subr.mxu0 0.0
        %1979 = vmatpush2.msra.mxu0 0.0
        %1980 = vmatprep.subr.mxu0 0.0
        %1981 = vmatpush2.msra.mxu0 0.0
        %1982 = vmatprep.subr.mxu0 0.0
        %1983 = vmatpush2.msra.mxu0 0.0
        %1984 = vmatprep.subr.mxu0 0.0
        %1985 = vmatpush2.msra.mxu0 0.0
        %1986 = vmatprep.subr.mxu0 0.0
        %1987 = vmatpush2.msra.mxu0 0.0
        %1988 = vmatprep.subr.mxu0 0.0
        %1989 = vmatpush2.msra.mxu0 0.0
        %1990 = vmatprep.subr.mxu0 0.0
        %1991 = vmatpush2.msra.mxu0 0.0
        %1992 = vmatprep.subr.mxu0 0.0
        %1993 = vmatpush2.msra.mxu0 0.0
        %1994 = vmatprep.mubr.f32.mxu0 0.0
        %v1995 = vand.u32 %v1102, 4294901760
        %1996 = vmatmul.mubr.f32.gmra.mxu0 %v1995
        %v1997 = vpop.f32.mrf.mxu0
        %v1998 = vadd.f32 %v1894, %v1997
        %v1999 = vpop.f32.mrf.mxu0
        %v2000 = vadd.f32 %v1896, %v1999
        %2001 = vdwg.mxu0
        %v2002 = vld [vmem:[#allocation2] sm:$0xff]
        %2003 = vmatprep.subr.mxu0 0.0
        %2004 = vmatpush1.xpose.msra.mxu0 0.0
        %2005 = vmatprep.subr.mxu0 0.0
        %2006 = vmatpush1.xpose.msra.mxu0 0.0
        %2007 = vmatprep.subr.mxu0 0.0
        %2008 = vmatpush1.xpose.msra.mxu0 0.0
        %2009 = vmatprep.subr.mxu0 0.0
        %2010 = vmatpush1.xpose.msra.mxu0 0.0
        %2011 = vmatprep.subr.mxu0 0.0
        %2012 = vmatpush1.xpose.msra.mxu0 0.0
        %2013 = vmatprep.subr.mxu0 0.0
        %2014 = vmatpush1.xpose.msra.mxu0 0.0
        %2015 = vmatprep.subr.mxu0 0.0
        %2016 = vmatpush1.xpose.msra.mxu0 0.0
        %2017 = vmatprep.subr.mxu0 0.0
        %2018 = vmatpush1.xpose.msra.mxu0 0.0
        %2019 = vmatprep.subr.mxu0 0.0
        %2020 = vmatpush1.xpose.msra.mxu0 0.0
        %2021 = vmatprep.subr.mxu0 0.0
        %2022 = vmatpush1.xpose.msra.mxu0 0.0
        %2023 = vmatprep.subr.mxu0 0.0
        %2024 = vmatpush1.xpose.msra.mxu0 0.0
        %2025 = vmatprep.subr.mxu0 0.0
        %2026 = vmatpush1.xpose.msra.mxu0 0.0
        %2027 = vmatprep.subr.mxu0 0.0
        %2028 = vmatpush1.xpose.msra.mxu0 0.0
        %2029 = vmatprep.subr.mxu0 0.0
        %2030 = vmatpush1.xpose.msra.mxu0 0.0
        %2031 = vmatprep.subr.mxu0 0.0
        %2032 = vmatpush1.xpose.msra.mxu0 0.0
        %2033 = vmatprep.subr.mxu0 0.0
        %v2034 = vand.u32 %v1998, 4294901760
        %2035 = vmatpush1.xpose.msra.mxu0 %v2034
        %2036 = vmatprep.subr.mxu0 0.0
        %2037 = vmatpush2.xpose.msra.mxu0 0.0
        %2038 = vmatprep.subr.mxu0 0.0
        %2039 = vmatpush2.xpose.msra.mxu0 0.0
        %2040 = vmatprep.subr.mxu0 0.0
        %2041 = vmatpush2.xpose.msra.mxu0 0.0
        %2042 = vmatprep.subr.mxu0 0.0
        %2043 = vmatpush2.xpose.msra.mxu0 0.0
        %2044 = vmatprep.subr.mxu0 0.0
        %2045 = vmatpush2.xpose.msra.mxu0 0.0
        %2046 = vmatprep.subr.mxu0 0.0
        %2047 = vmatpush2.xpose.msra.mxu0 0.0
        %2048 = vmatprep.subr.mxu0 0.0
        %2049 = vmatpush2.xpose.msra.mxu0 0.0
        %2050 = vmatprep.subr.mxu0 0.0
        %2051 = vmatpush2.xpose.msra.mxu0 0.0
        %2052 = vmatprep.subr.mxu0 0.0
        %2053 = vmatpush2.xpose.msra.mxu0 0.0
        %2054 = vmatprep.subr.mxu0 0.0
        %2055 = vmatpush2.xpose.msra.mxu0 0.0
        %2056 = vmatprep.subr.mxu0 0.0
        %2057 = vmatpush2.xpose.msra.mxu0 0.0
        %2058 = vmatprep.subr.mxu0 0.0
        %2059 = vmatpush2.xpose.msra.mxu0 0.0
        %2060 = vmatprep.subr.mxu0 0.0
        %2061 = vmatpush2.xpose.msra.mxu0 0.0
        %2062 = vmatprep.subr.mxu0 0.0
        %2063 = vmatpush2.xpose.msra.mxu0 0.0
        %2064 = vmatprep.subr.mxu0 0.0
        %2065 = vmatpush2.xpose.msra.mxu0 0.0
        %2066 = vmatprep.subr.mxu0 0.0
        %2067 = vmatpush2.xpose.msra.mxu0 0.0
        %2068 = vmatprep.mubr.f32.mxu0 0.0
        %v2069 = vand.u32 %v2002, 4294901760
        %v2070 = vsub.f32 %v2002, %v2069
        %v2071 = vand.u32 %v2070, 4294901760
        %v2072 = vsub.f32 %v2070, %v2071
        %v2073 = vand.u32 %v2072, 4294901760
        %2074 = vmatmul.mubr.f32.gmra.mxu0 %v2073
        %v2075 = vpop.f32.mrf.mxu0
        %v2076 = vadd.f32 0.0, %v2075
        %v2077 = vpop.f32.mrf.mxu0
        %2078 = vdwg.mxu0
        %2079 = vmatprep.subr.mxu0 0.0
        %2080 = vmatpush1.xpose.msra.mxu0 0.0
        %2081 = vmatprep.subr.mxu0 0.0
        %2082 = vmatpush1.xpose.msra.mxu0 0.0
        %2083 = vmatprep.subr.mxu0 0.0
        %2084 = vmatpush1.xpose.msra.mxu0 0.0
        %2085 = vmatprep.subr.mxu0 0.0
        %2086 = vmatpush1.xpose.msra.mxu0 0.0
        %2087 = vmatprep.subr.mxu0 0.0
        %2088 = vmatpush1.xpose.msra.mxu0 0.0
        %2089 = vmatprep.subr.mxu0 0.0
        %2090 = vmatpush1.xpose.msra.mxu0 0.0
        %2091 = vmatprep.subr.mxu0 0.0
        %2092 = vmatpush1.xpose.msra.mxu0 0.0
        %2093 = vmatprep.subr.mxu0 0.0
        %2094 = vmatpush1.xpose.msra.mxu0 0.0
        %2095 = vmatprep.subr.mxu0 0.0
        %2096 = vmatpush1.xpose.msra.mxu0 0.0
        %2097 = vmatprep.subr.mxu0 0.0
        %2098 = vmatpush1.xpose.msra.mxu0 0.0
        %2099 = vmatprep.subr.mxu0 0.0
        %2100 = vmatpush1.xpose.msra.mxu0 0.0
        %2101 = vmatprep.subr.mxu0 0.0
        %2102 = vmatpush1.xpose.msra.mxu0 0.0
        %2103 = vmatprep.subr.mxu0 0.0
        %2104 = vmatpush1.xpose.msra.mxu0 0.0
        %2105 = vmatprep.subr.mxu0 0.0
        %2106 = vmatpush1.xpose.msra.mxu0 0.0
        %2107 = vmatprep.subr.mxu0 0.0
        %2108 = vmatpush1.xpose.msra.mxu0 0.0
        %2109 = vmatprep.subr.mxu0 0.0
        %v2110 = vand.u32 %v1998, 4294901760
        %v2111 = vsub.f32 %v1998, %v2110
        %v2112 = vand.u32 %v2111, 4294901760
        %v2113 = vsub.f32 %v2111, %v2112
        %v2114 = vand.u32 %v2113, 4294901760
        %2115 = vmatpush1.xpose.msra.mxu0 %v2114
        %2116 = vmatprep.subr.mxu0 0.0
        %2117 = vmatpush2.xpose.msra.mxu0 0.0
        %2118 = vmatprep.subr.mxu0 0.0
        %2119 = vmatpush2.xpose.msra.mxu0 0.0
        %2120 = vmatprep.subr.mxu0 0.0
        %2121 = vmatpush2.xpose.msra.mxu0 0.0
        %2122 = vmatprep.subr.mxu0 0.0
        %2123 = vmatpush2.xpose.msra.mxu0 0.0
        %2124 = vmatprep.subr.mxu0 0.0
        %2125 = vmatpush2.xpose.msra.mxu0 0.0
        %2126 = vmatprep.subr.mxu0 0.0
        %2127 = vmatpush2.xpose.msra.mxu0 0.0
        %2128 = vmatprep.subr.mxu0 0.0
        %2129 = vmatpush2.xpose.msra.mxu0 0.0
        %2130 = vmatprep.subr.mxu0 0.0
        %2131 = vmatpush2.xpose.msra.mxu0 0.0
        %2132 = vmatprep.subr.mxu0 0.0
        %2133 = vmatpush2.xpose.msra.mxu0 0.0
        %2134 = vmatprep.subr.mxu0 0.0
        %2135 = vmatpush2.xpose.msra.mxu0 0.0
        %2136 = vmatprep.subr.mxu0 0.0
        %2137 = vmatpush2.xpose.msra.mxu0 0.0
        %2138 = vmatprep.subr.mxu0 0.0
        %2139 = vmatpush2.xpose.msra.mxu0 0.0
        %2140 = vmatprep.subr.mxu0 0.0
        %2141 = vmatpush2.xpose.msra.mxu0 0.0
        %2142 = vmatprep.subr.mxu0 0.0
        %2143 = vmatpush2.xpose.msra.mxu0 0.0
        %2144 = vmatprep.subr.mxu0 0.0
        %2145 = vmatpush2.xpose.msra.mxu0 0.0
        %2146 = vmatprep.subr.mxu0 0.0
        %2147 = vmatpush2.xpose.msra.mxu0 0.0
        %2148 = vmatprep.mubr.f32.mxu0 0.0
        %v2149 = vand.u32 %v2002, 4294901760
        %2150 = vmatmul.mubr.f32.gmra.mxu0 %v2149
        %v2151 = vpop.f32.mrf.mxu0
        %v2152 = vadd.f32 %v2076, %v2151
        %v2153 = vpop.f32.mrf.mxu0
        %2154 = vdwg.mxu0
        %2155 = vmatprep.subr.mxu0 0.0
        %2156 = vmatpush1.xpose.msra.mxu0 0.0
        %2157 = vmatprep.subr.mxu0 0.0
        %2158 = vmatpush1.xpose.msra.mxu0 0.0
        %2159 = vmatprep.subr.mxu0 0.0
        %2160 = vmatpush1.xpose.msra.mxu0 0.0
        %2161 = vmatprep.subr.mxu0 0.0
        %2162 = vmatpush1.xpose.msra.mxu0 0.0
        %2163 = vmatprep.subr.mxu0 0.0
        %2164 = vmatpush1.xpose.msra.mxu0 0.0
        %2165 = vmatprep.subr.mxu0 0.0
        %2166 = vmatpush1.xpose.msra.mxu0 0.0
        %2167 = vmatprep.subr.mxu0 0.0
        %2168 = vmatpush1.xpose.msra.mxu0 0.0
        %2169 = vmatprep.subr.mxu0 0.0
        %2170 = vmatpush1.xpose.msra.mxu0 0.0
        %2171 = vmatprep.subr.mxu0 0.0
        %2172 = vmatpush1.xpose.msra.mxu0 0.0
        %2173 = vmatprep.subr.mxu0 0.0
        %2174 = vmatpush1.xpose.msra.mxu0 0.0
        %2175 = vmatprep.subr.mxu0 0.0
        %2176 = vmatpush1.xpose.msra.mxu0 0.0
        %2177 = vmatprep.subr.mxu0 0.0
        %2178 = vmatpush1.xpose.msra.mxu0 0.0
        %2179 = vmatprep.subr.mxu0 0.0
        %2180 = vmatpush1.xpose.msra.mxu0 0.0
        %2181 = vmatprep.subr.mxu0 0.0
        %2182 = vmatpush1.xpose.msra.mxu0 0.0
        %2183 = vmatprep.subr.mxu0 0.0
        %2184 = vmatpush1.xpose.msra.mxu0 0.0
        %2185 = vmatprep.subr.mxu0 0.0
        %v2186 = vand.u32 %v1998, 4294901760
        %v2187 = vsub.f32 %v1998, %v2186
        %2188 = vmatpush1.xpose.msra.mxu0 %v2187
        %2189 = vmatprep.subr.mxu0 0.0
        %2190 = vmatpush2.xpose.msra.mxu0 0.0
        %2191 = vmatprep.subr.mxu0 0.0
        %2192 = vmatpush2.xpose.msra.mxu0 0.0
        %2193 = vmatprep.subr.mxu0 0.0
        %2194 = vmatpush2.xpose.msra.mxu0 0.0
        %2195 = vmatprep.subr.mxu0 0.0
        %2196 = vmatpush2.xpose.msra.mxu0 0.0
        %2197 = vmatprep.subr.mxu0 0.0
        %2198 = vmatpush2.xpose.msra.mxu0 0.0
        %2199 = vmatprep.subr.mxu0 0.0
        %2200 = vmatpush2.xpose.msra.mxu0 0.0
        %2201 = vmatprep.subr.mxu0 0.0
        %2202 = vmatpush2.xpose.msra.mxu0 0.0
        %2203 = vmatprep.subr.mxu0 0.0
        %2204 = vmatpush2.xpose.msra.mxu0 0.0
        %2205 = vmatprep.subr.mxu0 0.0
        %2206 = vmatpush2.xpose.msra.mxu0 0.0
        %2207 = vmatprep.subr.mxu0 0.0
        %2208 = vmatpush2.xpose.msra.mxu0 0.0
        %2209 = vmatprep.subr.mxu0 0.0
        %2210 = vmatpush2.xpose.msra.mxu0 0.0
        %2211 = vmatprep.subr.mxu0 0.0
        %2212 = vmatpush2.xpose.msra.mxu0 0.0
        %2213 = vmatprep.subr.mxu0 0.0
        %2214 = vmatpush2.xpose.msra.mxu0 0.0
        %2215 = vmatprep.subr.mxu0 0.0
        %2216 = vmatpush2.xpose.msra.mxu0 0.0
        %2217 = vmatprep.subr.mxu0 0.0
        %2218 = vmatpush2.xpose.msra.mxu0 0.0
        %2219 = vmatprep.subr.mxu0 0.0
        %2220 = vmatpush2.xpose.msra.mxu0 0.0
        %2221 = vmatprep.mubr.f32.mxu0 0.0
        %v2222 = vand.u32 %v2002, 4294901760
        %v2223 = vsub.f32 %v2002, %v2222
        %2224 = vmatmul.mubr.f32.gmra.mxu0 %v2223
        %v2225 = vpop.f32.mrf.mxu0
        %v2226 = vadd.f32 %v2152, %v2225
        %v2227 = vpop.f32.mrf.mxu0
        %2228 = vdwg.mxu0
        %2229 = vmatprep.subr.mxu0 0.0
        %2230 = vmatpush1.xpose.msra.mxu0 0.0
        %2231 = vmatprep.subr.mxu0 0.0
        %2232 = vmatpush1.xpose.msra.mxu0 0.0
        %2233 = vmatprep.subr.mxu0 0.0
        %2234 = vmatpush1.xpose.msra.mxu0 0.0
        %2235 = vmatprep.subr.mxu0 0.0
        %2236 = vmatpush1.xpose.msra.mxu0 0.0
        %2237 = vmatprep.subr.mxu0 0.0
        %2238 = vmatpush1.xpose.msra.mxu0 0.0
        %2239 = vmatprep.subr.mxu0 0.0
        %2240 = vmatpush1.xpose.msra.mxu0 0.0
        %2241 = vmatprep.subr.mxu0 0.0
        %2242 = vmatpush1.xpose.msra.mxu0 0.0
        %2243 = vmatprep.subr.mxu0 0.0
        %2244 = vmatpush1.xpose.msra.mxu0 0.0
        %2245 = vmatprep.subr.mxu0 0.0
        %2246 = vmatpush1.xpose.msra.mxu0 0.0
        %2247 = vmatprep.subr.mxu0 0.0
        %2248 = vmatpush1.xpose.msra.mxu0 0.0
        %2249 = vmatprep.subr.mxu0 0.0
        %2250 = vmatpush1.xpose.msra.mxu0 0.0
        %2251 = vmatprep.subr.mxu0 0.0
        %2252 = vmatpush1.xpose.msra.mxu0 0.0
        %2253 = vmatprep.subr.mxu0 0.0
        %2254 = vmatpush1.xpose.msra.mxu0 0.0
        %2255 = vmatprep.subr.mxu0 0.0
        %2256 = vmatpush1.xpose.msra.mxu0 0.0
        %2257 = vmatprep.subr.mxu0 0.0
        %2258 = vmatpush1.xpose.msra.mxu0 0.0
        %2259 = vmatprep.subr.mxu0 0.0
        %v2260 = vand.u32 %v1998, 4294901760
        %2261 = vmatpush1.xpose.msra.mxu0 %v2260
        %2262 = vmatprep.subr.mxu0 0.0
        %2263 = vmatpush2.xpose.msra.mxu0 0.0
        %2264 = vmatprep.subr.mxu0 0.0
        %2265 = vmatpush2.xpose.msra.mxu0 0.0
        %2266 = vmatprep.subr.mxu0 0.0
        %2267 = vmatpush2.xpose.msra.mxu0 0.0
        %2268 = vmatprep.subr.mxu0 0.0
        %2269 = vmatpush2.xpose.msra.mxu0 0.0
        %2270 = vmatprep.subr.mxu0 0.0
        %2271 = vmatpush2.xpose.msra.mxu0 0.0
        %2272 = vmatprep.subr.mxu0 0.0
        %2273 = vmatpush2.xpose.msra.mxu0 0.0
        %2274 = vmatprep.subr.mxu0 0.0
        %2275 = vmatpush2.xpose.msra.mxu0 0.0
        %2276 = vmatprep.subr.mxu0 0.0
        %2277 = vmatpush2.xpose.msra.mxu0 0.0
        %2278 = vmatprep.subr.mxu0 0.0
        %2279 = vmatpush2.xpose.msra.mxu0 0.0
        %2280 = vmatprep.subr.mxu0 0.0
        %2281 = vmatpush2.xpose.msra.mxu0 0.0
        %2282 = vmatprep.subr.mxu0 0.0
        %2283 = vmatpush2.xpose.msra.mxu0 0.0
        %2284 = vmatprep.subr.mxu0 0.0
        %2285 = vmatpush2.xpose.msra.mxu0 0.0
        %2286 = vmatprep.subr.mxu0 0.0
        %2287 = vmatpush2.xpose.msra.mxu0 0.0
        %2288 = vmatprep.subr.mxu0 0.0
        %2289 = vmatpush2.xpose.msra.mxu0 0.0
        %2290 = vmatprep.subr.mxu0 0.0
        %2291 = vmatpush2.xpose.msra.mxu0 0.0
        %2292 = vmatprep.subr.mxu0 0.0
        %2293 = vmatpush2.xpose.msra.mxu0 0.0
        %2294 = vmatprep.mubr.f32.mxu0 0.0
        %v2295 = vand.u32 %v2002, 4294901760
        %v2296 = vsub.f32 %v2002, %v2295
        %v2297 = vand.u32 %v2296, 4294901760
        %2298 = vmatmul.mubr.f32.gmra.mxu0 %v2297
        %v2299 = vpop.f32.mrf.mxu0
        %v2300 = vadd.f32 %v2226, %v2299
        %v2301 = vpop.f32.mrf.mxu0
        %2302 = vdwg.mxu0
        %2303 = vmatprep.subr.mxu0 0.0
        %2304 = vmatpush1.xpose.msra.mxu0 0.0
        %2305 = vmatprep.subr.mxu0 0.0
        %2306 = vmatpush1.xpose.msra.mxu0 0.0
        %2307 = vmatprep.subr.mxu0 0.0
        %2308 = vmatpush1.xpose.msra.mxu0 0.0
        %2309 = vmatprep.subr.mxu0 0.0
        %2310 = vmatpush1.xpose.msra.mxu0 0.0
        %2311 = vmatprep.subr.mxu0 0.0
        %2312 = vmatpush1.xpose.msra.mxu0 0.0
        %2313 = vmatprep.subr.mxu0 0.0
        %2314 = vmatpush1.xpose.msra.mxu0 0.0
        %2315 = vmatprep.subr.mxu0 0.0
        %2316 = vmatpush1.xpose.msra.mxu0 0.0
        %2317 = vmatprep.subr.mxu0 0.0
        %2318 = vmatpush1.xpose.msra.mxu0 0.0
        %2319 = vmatprep.subr.mxu0 0.0
        %2320 = vmatpush1.xpose.msra.mxu0 0.0
        %2321 = vmatprep.subr.mxu0 0.0
        %2322 = vmatpush1.xpose.msra.mxu0 0.0
        %2323 = vmatprep.subr.mxu0 0.0
        %2324 = vmatpush1.xpose.msra.mxu0 0.0
        %2325 = vmatprep.subr.mxu0 0.0
        %2326 = vmatpush1.xpose.msra.mxu0 0.0
        %2327 = vmatprep.subr.mxu0 0.0
        %2328 = vmatpush1.xpose.msra.mxu0 0.0
        %2329 = vmatprep.subr.mxu0 0.0
        %2330 = vmatpush1.xpose.msra.mxu0 0.0
        %2331 = vmatprep.subr.mxu0 0.0
        %2332 = vmatpush1.xpose.msra.mxu0 0.0
        %2333 = vmatprep.subr.mxu0 0.0
        %v2334 = vand.u32 %v1998, 4294901760
        %v2335 = vsub.f32 %v1998, %v2334
        %v2336 = vand.u32 %v2335, 4294901760
        %2337 = vmatpush1.xpose.msra.mxu0 %v2336
        %2338 = vmatprep.subr.mxu0 0.0
        %2339 = vmatpush2.xpose.msra.mxu0 0.0
        %2340 = vmatprep.subr.mxu0 0.0
        %2341 = vmatpush2.xpose.msra.mxu0 0.0
        %2342 = vmatprep.subr.mxu0 0.0
        %2343 = vmatpush2.xpose.msra.mxu0 0.0
        %2344 = vmatprep.subr.mxu0 0.0
        %2345 = vmatpush2.xpose.msra.mxu0 0.0
        %2346 = vmatprep.subr.mxu0 0.0
        %2347 = vmatpush2.xpose.msra.mxu0 0.0
        %2348 = vmatprep.subr.mxu0 0.0
        %2349 = vmatpush2.xpose.msra.mxu0 0.0
        %2350 = vmatprep.subr.mxu0 0.0
        %2351 = vmatpush2.xpose.msra.mxu0 0.0
        %2352 = vmatprep.subr.mxu0 0.0
        %2353 = vmatpush2.xpose.msra.mxu0 0.0
        %2354 = vmatprep.subr.mxu0 0.0
        %2355 = vmatpush2.xpose.msra.mxu0 0.0
        %2356 = vmatprep.subr.mxu0 0.0
        %2357 = vmatpush2.xpose.msra.mxu0 0.0
        %2358 = vmatprep.subr.mxu0 0.0
        %2359 = vmatpush2.xpose.msra.mxu0 0.0
        %2360 = vmatprep.subr.mxu0 0.0
        %2361 = vmatpush2.xpose.msra.mxu0 0.0
        %2362 = vmatprep.subr.mxu0 0.0
        %2363 = vmatpush2.xpose.msra.mxu0 0.0
        %2364 = vmatprep.subr.mxu0 0.0
        %2365 = vmatpush2.xpose.msra.mxu0 0.0
        %2366 = vmatprep.subr.mxu0 0.0
        %2367 = vmatpush2.xpose.msra.mxu0 0.0
        %2368 = vmatprep.subr.mxu0 0.0
        %2369 = vmatpush2.xpose.msra.mxu0 0.0
        %2370 = vmatprep.mubr.f32.mxu0 0.0
        %v2371 = vand.u32 %v2002, 4294901760
        %2372 = vmatmul.mubr.f32.gmra.mxu0 %v2371
        %v2373 = vpop.f32.mrf.mxu0
        %v2374 = vadd.f32 %v2300, %v2373
        %v2375 = vpop.f32.mrf.mxu0
        %2376 = vdwg.mxu0
        %2377 = vmatprep.subr.mxu0 0.0
        %2378 = vmatpush1.xpose.msra.mxu0 0.0
        %2379 = vmatprep.subr.mxu0 0.0
        %2380 = vmatpush1.xpose.msra.mxu0 0.0
        %2381 = vmatprep.subr.mxu0 0.0
        %2382 = vmatpush1.xpose.msra.mxu0 0.0
        %2383 = vmatprep.subr.mxu0 0.0
        %2384 = vmatpush1.xpose.msra.mxu0 0.0
        %2385 = vmatprep.subr.mxu0 0.0
        %2386 = vmatpush1.xpose.msra.mxu0 0.0
        %2387 = vmatprep.subr.mxu0 0.0
        %2388 = vmatpush1.xpose.msra.mxu0 0.0
        %2389 = vmatprep.subr.mxu0 0.0
        %2390 = vmatpush1.xpose.msra.mxu0 0.0
        %2391 = vmatprep.subr.mxu0 0.0
        %2392 = vmatpush1.xpose.msra.mxu0 0.0
        %2393 = vmatprep.subr.mxu0 0.0
        %2394 = vmatpush1.xpose.msra.mxu0 0.0
        %2395 = vmatprep.subr.mxu0 0.0
        %2396 = vmatpush1.xpose.msra.mxu0 0.0
        %2397 = vmatprep.subr.mxu0 0.0
        %2398 = vmatpush1.xpose.msra.mxu0 0.0
        %2399 = vmatprep.subr.mxu0 0.0
        %2400 = vmatpush1.xpose.msra.mxu0 0.0
        %2401 = vmatprep.subr.mxu0 0.0
        %2402 = vmatpush1.xpose.msra.mxu0 0.0
        %2403 = vmatprep.subr.mxu0 0.0
        %2404 = vmatpush1.xpose.msra.mxu0 0.0
        %2405 = vmatprep.subr.mxu0 0.0
        %2406 = vmatpush1.xpose.msra.mxu0 0.0
        %2407 = vmatprep.subr.mxu0 0.0
        %v2408 = vand.u32 %v1998, 4294901760
        %2409 = vmatpush1.xpose.msra.mxu0 %v2408
        %2410 = vmatprep.subr.mxu0 0.0
        %2411 = vmatpush2.xpose.msra.mxu0 0.0
        %2412 = vmatprep.subr.mxu0 0.0
        %2413 = vmatpush2.xpose.msra.mxu0 0.0
        %2414 = vmatprep.subr.mxu0 0.0
        %2415 = vmatpush2.xpose.msra.mxu0 0.0
        %2416 = vmatprep.subr.mxu0 0.0
        %2417 = vmatpush2.xpose.msra.mxu0 0.0
        %2418 = vmatprep.subr.mxu0 0.0
        %2419 = vmatpush2.xpose.msra.mxu0 0.0
        %2420 = vmatprep.subr.mxu0 0.0
        %2421 = vmatpush2.xpose.msra.mxu0 0.0
        %2422 = vmatprep.subr.mxu0 0.0
        %2423 = vmatpush2.xpose.msra.mxu0 0.0
        %2424 = vmatprep.subr.mxu0 0.0
        %2425 = vmatpush2.xpose.msra.mxu0 0.0
        %2426 = vmatprep.subr.mxu0 0.0
        %2427 = vmatpush2.xpose.msra.mxu0 0.0
        %2428 = vmatprep.subr.mxu0 0.0
        %2429 = vmatpush2.xpose.msra.mxu0 0.0
        %2430 = vmatprep.subr.mxu0 0.0
        %2431 = vmatpush2.xpose.msra.mxu0 0.0
        %2432 = vmatprep.subr.mxu0 0.0
        %2433 = vmatpush2.xpose.msra.mxu0 0.0
        %2434 = vmatprep.subr.mxu0 0.0
        %2435 = vmatpush2.xpose.msra.mxu0 0.0
        %2436 = vmatprep.subr.mxu0 0.0
        %2437 = vmatpush2.xpose.msra.mxu0 0.0
        %2438 = vmatprep.subr.mxu0 0.0
        %2439 = vmatpush2.xpose.msra.mxu0 0.0
        %2440 = vmatprep.subr.mxu0 0.0
        %2441 = vmatpush2.xpose.msra.mxu0 0.0
        %2442 = vmatprep.mubr.f32.mxu0 0.0
        %v2443 = vand.u32 %v2002, 4294901760
        %2444 = vmatmul.mubr.f32.gmra.mxu0 %v2443
        %v2445 = vpop.f32.mrf.mxu0
        %v2446 = vadd.f32 %v2374, %v2445
        %v2447 = vpop.f32.mrf.mxu0
        %2448 = vdwg.mxu0
        %v2449 = vld [vmem:[#allocation3] sm:$0xff]
        %vm2450 = vcmask 64512
        %v2451 = vsel %vm2450, %v2446, -inf
        %2452 = vmax.xlane.f32.xlu0 %v2451
        %v2453 = vpop.xlane.xlu0 %2452
        %v2454 = vmax.f32 %v2449, %v2453
        %v2455 = vsub.f32 %v2449, %v2454
        %v2456 = vmul.f32 %v2455, 1.442695
        %v2457 = vpow.pop %v2456
        %2459 = vset.pattern.permute.xlu0 0
        %2460 = vperm.xlu0 %2459, %v2454
        %v2461 = vpop.permute.xlu0 %2460
        %v2463 = vsub.f32 %v2446, %v2461
        %v2464 = vmul.f32 %v2463, 1.442695
        %v2465 = vpow.pop %v2464
        %v2466 = vld [vmem:[#allocation4] sm:$0xff]
        %v2467 = vmul.f32 %v2457, %v2466
        %v2468 = vsel %vm2450, %v2465, 0.0
        %2469 = vadd.xlane.f32.xlu0 %v2468
        %v2470 = vpop.xlane.xlu0 %2469
        %v2471 = vadd.f32 %v2467, %v2470
        %vm2472 = vcmask 7168
        %2473 = vst.msk [vmem:[#allocation4] sm:$0xff] %vm2472, %v2471
        %v2474 = vld [vmem:[#allocation5] sm:$0xff]
        %2476 = vset.pattern.permute.xlu0 0
        %2477 = vperm.xlu0 %2476, %v2457
        %v2478 = vpop.permute.xlu0 %2477
        %v2480 = vmul.f32 %v2478, %v2474
        %v2482 = vsel %vm2450, %v2465, 0
        %2484 = vmatprep.subr.mxu0 0.0
        %2485 = vmatpush1.msra.mxu0 0.0
        %2486 = vmatprep.subr.mxu0 0.0
        %2487 = vmatpush1.msra.mxu0 0.0
        %2488 = vmatprep.subr.mxu0 0.0
        %2489 = vmatpush1.msra.mxu0 0.0
        %2490 = vmatprep.subr.mxu0 0.0
        %2491 = vmatpush1.msra.mxu0 0.0
        %2492 = vmatprep.subr.mxu0 0.0
        %2493 = vmatpush1.msra.mxu0 0.0
        %2494 = vmatprep.subr.mxu0 0.0
        %2495 = vmatpush1.msra.mxu0 0.0
        %2496 = vmatprep.subr.mxu0 0.0
        %2497 = vmatpush1.msra.mxu0 0.0
        %2498 = vmatprep.subr.mxu0 0.0
        %2499 = vmatpush1.msra.mxu0 0.0
        %2500 = vmatprep.subr.mxu0 0.0
        %2501 = vmatpush1.msra.mxu0 0.0
        %2502 = vmatprep.subr.mxu0 0.0
        %2503 = vmatpush1.msra.mxu0 0.0
        %2504 = vmatprep.subr.mxu0 0.0
        %2505 = vmatpush1.msra.mxu0 0.0
        %2506 = vmatprep.subr.mxu0 0.0
        %2507 = vmatpush1.msra.mxu0 0.0
        %2508 = vmatprep.subr.mxu0 0.0
        %2509 = vmatpush1.msra.mxu0 0.0
        %2510 = vmatprep.subr.mxu0 0.0
        %2511 = vmatpush1.msra.mxu0 0.0
        %2512 = vmatprep.subr.mxu0 0.0
        %2513 = vmatpush1.msra.mxu0 0.0
        %2514 = vmatprep.subr.mxu0 0.0
        %v2515 = vand.u32 %v2000, 4294901760
        %2516 = vmatpush1.msra.mxu0 %v2515
        %2517 = vmatprep.subr.mxu0 0.0
        %2518 = vmatpush2.msra.mxu0 0.0
        %2519 = vmatprep.subr.mxu0 0.0
        %2520 = vmatpush2.msra.mxu0 0.0
        %2521 = vmatprep.subr.mxu0 0.0
        %2522 = vmatpush2.msra.mxu0 0.0
        %2523 = vmatprep.subr.mxu0 0.0
        %2524 = vmatpush2.msra.mxu0 0.0
        %2525 = vmatprep.subr.mxu0 0.0
        %2526 = vmatpush2.msra.mxu0 0.0
        %2527 = vmatprep.subr.mxu0 0.0
        %2528 = vmatpush2.msra.mxu0 0.0
        %2529 = vmatprep.subr.mxu0 0.0
        %2530 = vmatpush2.msra.mxu0 0.0
        %2531 = vmatprep.subr.mxu0 0.0
        %2532 = vmatpush2.msra.mxu0 0.0
        %2533 = vmatprep.subr.mxu0 0.0
        %2534 = vmatpush2.msra.mxu0 0.0
        %2535 = vmatprep.subr.mxu0 0.0
        %2536 = vmatpush2.msra.mxu0 0.0
        %2537 = vmatprep.subr.mxu0 0.0
        %2538 = vmatpush2.msra.mxu0 0.0
        %2539 = vmatprep.subr.mxu0 0.0
        %2540 = vmatpush2.msra.mxu0 0.0
        %2541 = vmatprep.subr.mxu0 0.0
        %2542 = vmatpush2.msra.mxu0 0.0
        %2543 = vmatprep.subr.mxu0 0.0
        %2544 = vmatpush2.msra.mxu0 0.0
        %2545 = vmatprep.subr.mxu0 0.0
        %2546 = vmatpush2.msra.mxu0 0.0
        %2547 = vmatprep.subr.mxu0 0.0
        %2548 = vmatpush2.msra.mxu0 0.0
        %2549 = vmatprep.mubr.f32.mxu0 0.0
        %v2550 = vand.u32 %v2482, 4294901760
        %v2551 = vsub.f32 %v2482, %v2550
        %v2552 = vand.u32 %v2551, 4294901760
        %v2553 = vsub.f32 %v2551, %v2552
        %v2554 = vand.u32 %v2553, 4294901760
        %2555 = vmatmul.mubr.f32.gmra.mxu0 %v2554
        %v2556 = vpop.f32.mrf.mxu0
        %v2557 = vadd.f32 0.0, %v2556
        %v2558 = vpop.f32.mrf.mxu0
        %2559 = vdwg.mxu0
        %2560 = vmatprep.subr.mxu0 0.0
        %2561 = vmatpush1.msra.mxu0 0.0
        %2562 = vmatprep.subr.mxu0 0.0
        %2563 = vmatpush1.msra.mxu0 0.0
        %2564 = vmatprep.subr.mxu0 0.0
        %2565 = vmatpush1.msra.mxu0 0.0
        %2566 = vmatprep.subr.mxu0 0.0
        %2567 = vmatpush1.msra.mxu0 0.0
        %2568 = vmatprep.subr.mxu0 0.0
        %2569 = vmatpush1.msra.mxu0 0.0
        %2570 = vmatprep.subr.mxu0 0.0
        %2571 = vmatpush1.msra.mxu0 0.0
        %2572 = vmatprep.subr.mxu0 0.0
        %2573 = vmatpush1.msra.mxu0 0.0
        %2574 = vmatprep.subr.mxu0 0.0
        %2575 = vmatpush1.msra.mxu0 0.0
        %2576 = vmatprep.subr.mxu0 0.0
        %2577 = vmatpush1.msra.mxu0 0.0
        %2578 = vmatprep.subr.mxu0 0.0
        %2579 = vmatpush1.msra.mxu0 0.0
        %2580 = vmatprep.subr.mxu0 0.0
        %2581 = vmatpush1.msra.mxu0 0.0
        %2582 = vmatprep.subr.mxu0 0.0
        %2583 = vmatpush1.msra.mxu0 0.0
        %2584 = vmatprep.subr.mxu0 0.0
        %2585 = vmatpush1.msra.mxu0 0.0
        %2586 = vmatprep.subr.mxu0 0.0
        %2587 = vmatpush1.msra.mxu0 0.0
        %2588 = vmatprep.subr.mxu0 0.0
        %2589 = vmatpush1.msra.mxu0 0.0
        %2590 = vmatprep.subr.mxu0 0.0
        %v2591 = vand.u32 %v2000, 4294901760
        %v2592 = vsub.f32 %v2000, %v2591
        %v2593 = vand.u32 %v2592, 4294901760
        %v2594 = vsub.f32 %v2592, %v2593
        %v2595 = vand.u32 %v2594, 4294901760
        %2596 = vmatpush1.msra.mxu0 %v2595
        %2597 = vmatprep.subr.mxu0 0.0
        %2598 = vmatpush2.msra.mxu0 0.0
        %2599 = vmatprep.subr.mxu0 0.0
        %2600 = vmatpush2.msra.mxu0 0.0
        %2601 = vmatprep.subr.mxu0 0.0
        %2602 = vmatpush2.msra.mxu0 0.0
        %2603 = vmatprep.subr.mxu0 0.0
        %2604 = vmatpush2.msra.mxu0 0.0
        %2605 = vmatprep.subr.mxu0 0.0
        %2606 = vmatpush2.msra.mxu0 0.0
        %2607 = vmatprep.subr.mxu0 0.0
        %2608 = vmatpush2.msra.mxu0 0.0
        %2609 = vmatprep.subr.mxu0 0.0
        %2610 = vmatpush2.msra.mxu0 0.0
        %2611 = vmatprep.subr.mxu0 0.0
        %2612 = vmatpush2.msra.mxu0 0.0
        %2613 = vmatprep.subr.mxu0 0.0
        %2614 = vmatpush2.msra.mxu0 0.0
        %2615 = vmatprep.subr.mxu0 0.0
        %2616 = vmatpush2.msra.mxu0 0.0
        %2617 = vmatprep.subr.mxu0 0.0
        %2618 = vmatpush2.msra.mxu0 0.0
        %2619 = vmatprep.subr.mxu0 0.0
        %2620 = vmatpush2.msra.mxu0 0.0
        %2621 = vmatprep.subr.mxu0 0.0
        %2622 = vmatpush2.msra.mxu0 0.0
        %2623 = vmatprep.subr.mxu0 0.0
        %2624 = vmatpush2.msra.mxu0 0.0
        %2625 = vmatprep.subr.mxu0 0.0
        %2626 = vmatpush2.msra.mxu0 0.0
        %2627 = vmatprep.subr.mxu0 0.0
        %2628 = vmatpush2.msra.mxu0 0.0
        %2629 = vmatprep.mubr.f32.mxu0 0.0
        %v2630 = vand.u32 %v2482, 4294901760
        %2631 = vmatmul.mubr.f32.gmra.mxu0 %v2630
        %v2632 = vpop.f32.mrf.mxu0
        %v2633 = vadd.f32 %v2557, %v2632
        %v2634 = vpop.f32.mrf.mxu0
        %2635 = vdwg.mxu0
        %2636 = vmatprep.subr.mxu0 0.0
        %2637 = vmatpush1.msra.mxu0 0.0
        %2638 = vmatprep.subr.mxu0 0.0
        %2639 = vmatpush1.msra.mxu0 0.0
        %2640 = vmatprep.subr.mxu0 0.0
        %2641 = vmatpush1.msra.mxu0 0.0
        %2642 = vmatprep.subr.mxu0 0.0
        %2643 = vmatpush1.msra.mxu0 0.0
        %2644 = vmatprep.subr.mxu0 0.0
        %2645 = vmatpush1.msra.mxu0 0.0
        %2646 = vmatprep.subr.mxu0 0.0
        %2647 = vmatpush1.msra.mxu0 0.0
        %2648 = vmatprep.subr.mxu0 0.0
        %2649 = vmatpush1.msra.mxu0 0.0
        %2650 = vmatprep.subr.mxu0 0.0
        %2651 = vmatpush1.msra.mxu0 0.0
        %2652 = vmatprep.subr.mxu0 0.0
        %2653 = vmatpush1.msra.mxu0 0.0
        %2654 = vmatprep.subr.mxu0 0.0
        %2655 = vmatpush1.msra.mxu0 0.0
        %2656 = vmatprep.subr.mxu0 0.0
        %2657 = vmatpush1.msra.mxu0 0.0
        %2658 = vmatprep.subr.mxu0 0.0
        %2659 = vmatpush1.msra.mxu0 0.0
        %2660 = vmatprep.subr.mxu0 0.0
        %2661 = vmatpush1.msra.mxu0 0.0
        %2662 = vmatprep.subr.mxu0 0.0
        %2663 = vmatpush1.msra.mxu0 0.0
        %2664 = vmatprep.subr.mxu0 0.0
        %2665 = vmatpush1.msra.mxu0 0.0
        %2666 = vmatprep.subr.mxu0 0.0
        %v2667 = vand.u32 %v2000, 4294901760
        %v2668 = vsub.f32 %v2000, %v2667
        %2669 = vmatpush1.msra.mxu0 %v2668
        %2670 = vmatprep.subr.mxu0 0.0
        %2671 = vmatpush2.msra.mxu0 0.0
        %2672 = vmatprep.subr.mxu0 0.0
        %2673 = vmatpush2.msra.mxu0 0.0
        %2674 = vmatprep.subr.mxu0 0.0
        %2675 = vmatpush2.msra.mxu0 0.0
        %2676 = vmatprep.subr.mxu0 0.0
        %2677 = vmatpush2.msra.mxu0 0.0
        %2678 = vmatprep.subr.mxu0 0.0
        %2679 = vmatpush2.msra.mxu0 0.0
        %2680 = vmatprep.subr.mxu0 0.0
        %2681 = vmatpush2.msra.mxu0 0.0
        %2682 = vmatprep.subr.mxu0 0.0
        %2683 = vmatpush2.msra.mxu0 0.0
        %2684 = vmatprep.subr.mxu0 0.0
        %2685 = vmatpush2.msra.mxu0 0.0
        %2686 = vmatprep.subr.mxu0 0.0
        %2687 = vmatpush2.msra.mxu0 0.0
        %2688 = vmatprep.subr.mxu0 0.0
        %2689 = vmatpush2.msra.mxu0 0.0
        %2690 = vmatprep.subr.mxu0 0.0
        %2691 = vmatpush2.msra.mxu0 0.0
        %2692 = vmatprep.subr.mxu0 0.0
        %2693 = vmatpush2.msra.mxu0 0.0
        %2694 = vmatprep.subr.mxu0 0.0
        %2695 = vmatpush2.msra.mxu0 0.0
        %2696 = vmatprep.subr.mxu0 0.0
        %2697 = vmatpush2.msra.mxu0 0.0
        %2698 = vmatprep.subr.mxu0 0.0
        %2699 = vmatpush2.msra.mxu0 0.0
        %2700 = vmatprep.subr.mxu0 0.0
        %2701 = vmatpush2.msra.mxu0 0.0
        %2702 = vmatprep.mubr.f32.mxu0 0.0
        %v2703 = vand.u32 %v2482, 4294901760
        %v2704 = vsub.f32 %v2482, %v2703
        %2705 = vmatmul.mubr.f32.gmra.mxu0 %v2704
        %v2706 = vpop.f32.mrf.mxu0
        %v2707 = vadd.f32 %v2633, %v2706
        %v2708 = vpop.f32.mrf.mxu0
        %2709 = vdwg.mxu0
        %2710 = vmatprep.subr.mxu0 0.0
        %2711 = vmatpush1.msra.mxu0 0.0
        %2712 = vmatprep.subr.mxu0 0.0
        %2713 = vmatpush1.msra.mxu0 0.0
        %2714 = vmatprep.subr.mxu0 0.0
        %2715 = vmatpush1.msra.mxu0 0.0
        %2716 = vmatprep.subr.mxu0 0.0
        %2717 = vmatpush1.msra.mxu0 0.0
        %2718 = vmatprep.subr.mxu0 0.0
        %2719 = vmatpush1.msra.mxu0 0.0
        %2720 = vmatprep.subr.mxu0 0.0
        %2721 = vmatpush1.msra.mxu0 0.0
        %2722 = vmatprep.subr.mxu0 0.0
        %2723 = vmatpush1.msra.mxu0 0.0
        %2724 = vmatprep.subr.mxu0 0.0
        %2725 = vmatpush1.msra.mxu0 0.0
        %2726 = vmatprep.subr.mxu0 0.0
        %2727 = vmatpush1.msra.mxu0 0.0
        %2728 = vmatprep.subr.mxu0 0.0
        %2729 = vmatpush1.msra.mxu0 0.0
        %2730 = vmatprep.subr.mxu0 0.0
        %2731 = vmatpush1.msra.mxu0 0.0
        %2732 = vmatprep.subr.mxu0 0.0
        %2733 = vmatpush1.msra.mxu0 0.0
        %2734 = vmatprep.subr.mxu0 0.0
        %2735 = vmatpush1.msra.mxu0 0.0
        %2736 = vmatprep.subr.mxu0 0.0
        %2737 = vmatpush1.msra.mxu0 0.0
        %2738 = vmatprep.subr.mxu0 0.0
        %2739 = vmatpush1.msra.mxu0 0.0
        %2740 = vmatprep.subr.mxu0 0.0
        %v2741 = vand.u32 %v2000, 4294901760
        %2742 = vmatpush1.msra.mxu0 %v2741
        %2743 = vmatprep.subr.mxu0 0.0
        %2744 = vmatpush2.msra.mxu0 0.0
        %2745 = vmatprep.subr.mxu0 0.0
        %2746 = vmatpush2.msra.mxu0 0.0
        %2747 = vmatprep.subr.mxu0 0.0
        %2748 = vmatpush2.msra.mxu0 0.0
        %2749 = vmatprep.subr.mxu0 0.0
        %2750 = vmatpush2.msra.mxu0 0.0
        %2751 = vmatprep.subr.mxu0 0.0
        %2752 = vmatpush2.msra.mxu0 0.0
        %2753 = vmatprep.subr.mxu0 0.0
        %2754 = vmatpush2.msra.mxu0 0.0
        %2755 = vmatprep.subr.mxu0 0.0
        %2756 = vmatpush2.msra.mxu0 0.0
        %2757 = vmatprep.subr.mxu0 0.0
        %2758 = vmatpush2.msra.mxu0 0.0
        %2759 = vmatprep.subr.mxu0 0.0
        %2760 = vmatpush2.msra.mxu0 0.0
        %2761 = vmatprep.subr.mxu0 0.0
        %2762 = vmatpush2.msra.mxu0 0.0
        %2763 = vmatprep.subr.mxu0 0.0
        %2764 = vmatpush2.msra.mxu0 0.0
        %2765 = vmatprep.subr.mxu0 0.0
        %2766 = vmatpush2.msra.mxu0 0.0
        %2767 = vmatprep.subr.mxu0 0.0
        %2768 = vmatpush2.msra.mxu0 0.0
        %2769 = vmatprep.subr.mxu0 0.0
        %2770 = vmatpush2.msra.mxu0 0.0
        %2771 = vmatprep.subr.mxu0 0.0
        %2772 = vmatpush2.msra.mxu0 0.0
        %2773 = vmatprep.subr.mxu0 0.0
        %2774 = vmatpush2.msra.mxu0 0.0
        %2775 = vmatprep.mubr.f32.mxu0 0.0
        %v2776 = vand.u32 %v2482, 4294901760
        %v2777 = vsub.f32 %v2482, %v2776
        %v2778 = vand.u32 %v2777, 4294901760
        %2779 = vmatmul.mubr.f32.gmra.mxu0 %v2778
        %v2780 = vpop.f32.mrf.mxu0
        %v2781 = vadd.f32 %v2707, %v2780
        %v2782 = vpop.f32.mrf.mxu0
        %2783 = vdwg.mxu0
        %2784 = vmatprep.subr.mxu0 0.0
        %2785 = vmatpush1.msra.mxu0 0.0
        %2786 = vmatprep.subr.mxu0 0.0
        %2787 = vmatpush1.msra.mxu0 0.0
        %2788 = vmatprep.subr.mxu0 0.0
        %2789 = vmatpush1.msra.mxu0 0.0
        %2790 = vmatprep.subr.mxu0 0.0
        %2791 = vmatpush1.msra.mxu0 0.0
        %2792 = vmatprep.subr.mxu0 0.0
        %2793 = vmatpush1.msra.mxu0 0.0
        %2794 = vmatprep.subr.mxu0 0.0
        %2795 = vmatpush1.msra.mxu0 0.0
        %2796 = vmatprep.subr.mxu0 0.0
        %2797 = vmatpush1.msra.mxu0 0.0
        %2798 = vmatprep.subr.mxu0 0.0
        %2799 = vmatpush1.msra.mxu0 0.0
        %2800 = vmatprep.subr.mxu0 0.0
        %2801 = vmatpush1.msra.mxu0 0.0
        %2802 = vmatprep.subr.mxu0 0.0
        %2803 = vmatpush1.msra.mxu0 0.0
        %2804 = vmatprep.subr.mxu0 0.0
        %2805 = vmatpush1.msra.mxu0 0.0
        %2806 = vmatprep.subr.mxu0 0.0
        %2807 = vmatpush1.msra.mxu0 0.0
        %2808 = vmatprep.subr.mxu0 0.0
        %2809 = vmatpush1.msra.mxu0 0.0
        %2810 = vmatprep.subr.mxu0 0.0
        %2811 = vmatpush1.msra.mxu0 0.0
        %2812 = vmatprep.subr.mxu0 0.0
        %2813 = vmatpush1.msra.mxu0 0.0
        %2814 = vmatprep.subr.mxu0 0.0
        %v2815 = vand.u32 %v2000, 4294901760
        %v2816 = vsub.f32 %v2000, %v2815
        %v2817 = vand.u32 %v2816, 4294901760
        %2818 = vmatpush1.msra.mxu0 %v2817
        %2819 = vmatprep.subr.mxu0 0.0
        %2820 = vmatpush2.msra.mxu0 0.0
        %2821 = vmatprep.subr.mxu0 0.0
        %2822 = vmatpush2.msra.mxu0 0.0
        %2823 = vmatprep.subr.mxu0 0.0
        %2824 = vmatpush2.msra.mxu0 0.0
        %2825 = vmatprep.subr.mxu0 0.0
        %2826 = vmatpush2.msra.mxu0 0.0
        %2827 = vmatprep.subr.mxu0 0.0
        %2828 = vmatpush2.msra.mxu0 0.0
        %2829 = vmatprep.subr.mxu0 0.0
        %2830 = vmatpush2.msra.mxu0 0.0
        %2831 = vmatprep.subr.mxu0 0.0
        %2832 = vmatpush2.msra.mxu0 0.0
        %2833 = vmatprep.subr.mxu0 0.0
        %2834 = vmatpush2.msra.mxu0 0.0
        %2835 = vmatprep.subr.mxu0 0.0
        %2836 = vmatpush2.msra.mxu0 0.0
        %2837 = vmatprep.subr.mxu0 0.0
        %2838 = vmatpush2.msra.mxu0 0.0
        %2839 = vmatprep.subr.mxu0 0.0
        %2840 = vmatpush2.msra.mxu0 0.0
        %2841 = vmatprep.subr.mxu0 0.0
        %2842 = vmatpush2.msra.mxu0 0.0
        %2843 = vmatprep.subr.mxu0 0.0
        %2844 = vmatpush2.msra.mxu0 0.0
        %2845 = vmatprep.subr.mxu0 0.0
        %2846 = vmatpush2.msra.mxu0 0.0
        %2847 = vmatprep.subr.mxu0 0.0
        %2848 = vmatpush2.msra.mxu0 0.0
        %2849 = vmatprep.subr.mxu0 0.0
        %2850 = vmatpush2.msra.mxu0 0.0
        %2851 = vmatprep.mubr.f32.mxu0 0.0
        %v2852 = vand.u32 %v2482, 4294901760
        %2853 = vmatmul.mubr.f32.gmra.mxu0 %v2852
        %v2854 = vpop.f32.mrf.mxu0
        %v2855 = vadd.f32 %v2781, %v2854
        %v2856 = vpop.f32.mrf.mxu0
        %2857 = vdwg.mxu0
        %2858 = vmatprep.subr.mxu0 0.0
        %2859 = vmatpush1.msra.mxu0 0.0
        %2860 = vmatprep.subr.mxu0 0.0
        %2861 = vmatpush1.msra.mxu0 0.0
        %2862 = vmatprep.subr.mxu0 0.0
        %2863 = vmatpush1.msra.mxu0 0.0
        %2864 = vmatprep.subr.mxu0 0.0
        %2865 = vmatpush1.msra.mxu0 0.0
        %2866 = vmatprep.subr.mxu0 0.0
        %2867 = vmatpush1.msra.mxu0 0.0
        %2868 = vmatprep.subr.mxu0 0.0
        %2869 = vmatpush1.msra.mxu0 0.0
        %2870 = vmatprep.subr.mxu0 0.0
        %2871 = vmatpush1.msra.mxu0 0.0
        %2872 = vmatprep.subr.mxu0 0.0
        %2873 = vmatpush1.msra.mxu0 0.0
        %2874 = vmatprep.subr.mxu0 0.0
        %2875 = vmatpush1.msra.mxu0 0.0
        %2876 = vmatprep.subr.mxu0 0.0
        %2877 = vmatpush1.msra.mxu0 0.0
        %2878 = vmatprep.subr.mxu0 0.0
        %2879 = vmatpush1.msra.mxu0 0.0
        %2880 = vmatprep.subr.mxu0 0.0
        %2881 = vmatpush1.msra.mxu0 0.0
        %2882 = vmatprep.subr.mxu0 0.0
        %2883 = vmatpush1.msra.mxu0 0.0
        %2884 = vmatprep.subr.mxu0 0.0
        %2885 = vmatpush1.msra.mxu0 0.0
        %2886 = vmatprep.subr.mxu0 0.0
        %2887 = vmatpush1.msra.mxu0 0.0
        %2888 = vmatprep.subr.mxu0 0.0
        %v2889 = vand.u32 %v2000, 4294901760
        %2890 = vmatpush1.msra.mxu0 %v2889
        %2891 = vmatprep.subr.mxu0 0.0
        %2892 = vmatpush2.msra.mxu0 0.0
        %2893 = vmatprep.subr.mxu0 0.0
        %2894 = vmatpush2.msra.mxu0 0.0
        %2895 = vmatprep.subr.mxu0 0.0
        %2896 = vmatpush2.msra.mxu0 0.0
        %2897 = vmatprep.subr.mxu0 0.0
        %2898 = vmatpush2.msra.mxu0 0.0
        %2899 = vmatprep.subr.mxu0 0.0
        %2900 = vmatpush2.msra.mxu0 0.0
        %2901 = vmatprep.subr.mxu0 0.0
        %2902 = vmatpush2.msra.mxu0 0.0
        %2903 = vmatprep.subr.mxu0 0.0
        %2904 = vmatpush2.msra.mxu0 0.0
        %2905 = vmatprep.subr.mxu0 0.0
        %2906 = vmatpush2.msra.mxu0 0.0
        %2907 = vmatprep.subr.mxu0 0.0
        %2908 = vmatpush2.msra.mxu0 0.0
        %2909 = vmatprep.subr.mxu0 0.0
        %2910 = vmatpush2.msra.mxu0 0.0
        %2911 = vmatprep.subr.mxu0 0.0
        %2912 = vmatpush2.msra.mxu0 0.0
        %2913 = vmatprep.subr.mxu0 0.0
        %2914 = vmatpush2.msra.mxu0 0.0
        %2915 = vmatprep.subr.mxu0 0.0
        %2916 = vmatpush2.msra.mxu0 0.0
        %2917 = vmatprep.subr.mxu0 0.0
        %2918 = vmatpush2.msra.mxu0 0.0
        %2919 = vmatprep.subr.mxu0 0.0
        %2920 = vmatpush2.msra.mxu0 0.0
        %2921 = vmatprep.subr.mxu0 0.0
        %2922 = vmatpush2.msra.mxu0 0.0
        %2923 = vmatprep.mubr.f32.mxu0 0.0
        %v2924 = vand.u32 %v2482, 4294901760
        %2925 = vmatmul.mubr.f32.gmra.mxu0 %v2924
        %v2926 = vpop.f32.mrf.mxu0
        %v2927 = vadd.f32 %v2855, %v2926
        %v2928 = vpop.f32.mrf.mxu0
        %2929 = vdwg.mxu0
        %v2930 = vadd.f32 %v2480, %v2927
        %2931 = vst [vmem:[#allocation5] sm:$0xff] %v2930
        %2932 = vst.msk [vmem:[#allocation3] sm:$0xff] %vm2472, %v2454
        // Predicated region
        $region77: #{tpu_custom_call.1} parent=51 // pred_check
          %p2933 = pneg %p428
        $region78: #{tpu_custom_call.1} parent=51 // pred_check_branch
          %2935 = sbr.rel (%p2933) target = $region80
        $region79: #{tpu_custom_call.1} parent=51 // pred_region
          %v2936 = vld [vmem:[#allocation5] sm:$0xff]
          %v2937 = vld [vmem:[#allocation4] sm:$0xff]
          %2939 = vset.pattern.permute.xlu0 0
          %2940 = vperm.xlu0 %2939, %v2937
          %v2941 = vpop.permute.xlu0 %2940
          %v2943 = vrcp.pop %v2941
          %v2944 = vmul.f32 %v2936, %v2943
          %v2945 = vld [vmem:[#allocation14] sm:$0xff]
          %v2946 = vld [vmem:[#allocation14 + $0x8] sm:$0xff]
          %v2947 = vld [vmem:[#allocation14 + $0x10] sm:$0xff]
          %v2948 = vld [vmem:[#allocation14 + $0x18] sm:$0xff]
          %v2949 = vld [vmem:[#allocation14 + $0x20] sm:$0xff]
          %v2950 = vld [vmem:[#allocation14 + $0x28] sm:$0xff]
          %v2951 = vld [vmem:[#allocation14 + $0x30] sm:$0xff]
          %v2952 = vld [vmem:[#allocation14 + $0x38] sm:$0xff]
          %v2953 = vld [vmem:[#allocation14 + $0x40] sm:$0xff]
          %v2954 = vld [vmem:[#allocation14 + $0x48] sm:$0xff]
          %v2955 = vld [vmem:[#allocation14 + $0x50] sm:$0xff]
          %v2956 = vld [vmem:[#allocation14 + $0x58] sm:$0xff]
          %v2957 = vld [vmem:[#allocation14 + $0x60] sm:$0xff]
          %v2958 = vld [vmem:[#allocation14 + $0x68] sm:$0xff]
          %v2959 = vld [vmem:[#allocation14 + $0x70] sm:$0xff]
          %v2960 = vld [vmem:[#allocation14 + $0x78] sm:$0xff]
          %v2961 = vld [vmem:[%s7] sm:$0x1]
          %v2963 = vlaneseq
          %v2964 = vshrl.u32 %v2963, 7
          %v2965 = vsub.s32 0, %v2964
          %v2966 = vrot.slane %v2961, %v2965
          %2968 = vmatprep.subr.mxu0 0.0
          %v2969 = vand.u32 %v2960, 4294901760
          %2970 = vmatpush1.msra.mxu0 %v2969
          %2971 = vmatprep.subr.mxu0 0.0
          %v2972 = vand.u32 %v2959, 4294901760
          %2973 = vmatpush1.msra.mxu0 %v2972
          %2974 = vmatprep.subr.mxu0 0.0
          %v2975 = vand.u32 %v2958, 4294901760
          %2976 = vmatpush1.msra.mxu0 %v2975
          %2977 = vmatprep.subr.mxu0 0.0
          %v2978 = vand.u32 %v2957, 4294901760
          %2979 = vmatpush1.msra.mxu0 %v2978
          %2980 = vmatprep.subr.mxu0 0.0
          %v2981 = vand.u32 %v2956, 4294901760
          %2982 = vmatpush1.msra.mxu0 %v2981
          %2983 = vmatprep.subr.mxu0 0.0
          %v2984 = vand.u32 %v2955, 4294901760
          %2985 = vmatpush1.msra.mxu0 %v2984
          %2986 = vmatprep.subr.mxu0 0.0
          %v2987 = vand.u32 %v2954, 4294901760
          %2988 = vmatpush1.msra.mxu0 %v2987
          %2989 = vmatprep.subr.mxu0 0.0
          %v2990 = vand.u32 %v2953, 4294901760
          %2991 = vmatpush1.msra.mxu0 %v2990
          %2992 = vmatprep.subr.mxu0 0.0
          %v2993 = vand.u32 %v2952, 4294901760
          %2994 = vmatpush1.msra.mxu0 %v2993
          %2995 = vmatprep.subr.mxu0 0.0
          %v2996 = vand.u32 %v2951, 4294901760
          %2997 = vmatpush1.msra.mxu0 %v2996
          %2998 = vmatprep.subr.mxu0 0.0
          %v2999 = vand.u32 %v2950, 4294901760
          %3000 = vmatpush1.msra.mxu0 %v2999
          %3001 = vmatprep.subr.mxu0 0.0
          %v3002 = vand.u32 %v2949, 4294901760
          %3003 = vmatpush1.msra.mxu0 %v3002
          %3004 = vmatprep.subr.mxu0 0.0
          %v3005 = vand.u32 %v2948, 4294901760
          %3006 = vmatpush1.msra.mxu0 %v3005
          %3007 = vmatprep.subr.mxu0 0.0
          %v3008 = vand.u32 %v2947, 4294901760
          %3009 = vmatpush1.msra.mxu0 %v3008
          %3010 = vmatprep.subr.mxu0 0.0
          %v3011 = vand.u32 %v2946, 4294901760
          %3012 = vmatpush1.msra.mxu0 %v3011
          %3013 = vmatprep.subr.mxu0 0.0
          %v3014 = vand.u32 %v2945, 4294901760
          %3015 = vmatpush1.msra.mxu0 %v3014
          %3016 = vmatprep.subr.mxu0 0.0
          %3017 = vmatpush2.msra.mxu0 0.0
          %3018 = vmatprep.subr.mxu0 0.0
          %3019 = vmatpush2.msra.mxu0 0.0
          %3020 = vmatprep.subr.mxu0 0.0
          %3021 = vmatpush2.msra.mxu0 0.0
          %3022 = vmatprep.subr.mxu0 0.0
          %3023 = vmatpush2.msra.mxu0 0.0
          %3024 = vmatprep.subr.mxu0 0.0
          %3025 = vmatpush2.msra.mxu0 0.0
          %3026 = vmatprep.subr.mxu0 0.0
          %3027 = vmatpush2.msra.mxu0 0.0
          %3028 = vmatprep.subr.mxu0 0.0
          %3029 = vmatpush2.msra.mxu0 0.0
          %3030 = vmatprep.subr.mxu0 0.0
          %3031 = vmatpush2.msra.mxu0 0.0
          %3032 = vmatprep.subr.mxu0 0.0
          %3033 = vmatpush2.msra.mxu0 0.0
          %3034 = vmatprep.subr.mxu0 0.0
          %3035 = vmatpush2.msra.mxu0 0.0
          %3036 = vmatprep.subr.mxu0 0.0
          %3037 = vmatpush2.msra.mxu0 0.0
          %3038 = vmatprep.subr.mxu0 0.0
          %3039 = vmatpush2.msra.mxu0 0.0
          %3040 = vmatprep.subr.mxu0 0.0
          %3041 = vmatpush2.msra.mxu0 0.0
          %3042 = vmatprep.subr.mxu0 0.0
          %3043 = vmatpush2.msra.mxu0 0.0
          %3044 = vmatprep.subr.mxu0 0.0
          %3045 = vmatpush2.msra.mxu0 0.0
          %3046 = vmatprep.subr.mxu0 0.0
          %3047 = vmatpush2.msra.mxu0 0.0
          %3048 = vmatprep.mubr.f32.mxu0 0.0
          %v3049 = vand.u32 %v2944, 4294901760
          %v3050 = vsub.f32 %v2944, %v3049
          %v3051 = vand.u32 %v3050, 4294901760
          %v3052 = vsub.f32 %v3050, %v3051
          %v3053 = vand.u32 %v3052, 4294901760
          %3054 = vmatmul.mubr.f32.gmra.mxu0 %v3053
          %v3055 = vpop.f32.mrf.mxu0
          %v3056 = vadd.f32 %v2966, %v3055
          %v3057 = vpop.f32.mrf.mxu0
          %3058 = vdwg.mxu0
          %3059 = vmatprep.subr.mxu0 0.0
          %v3060 = vand.u32 %v2960, 4294901760
          %v3061 = vsub.f32 %v2960, %v3060
          %v3062 = vand.u32 %v3061, 4294901760
          %v3063 = vsub.f32 %v3061, %v3062
          %v3064 = vand.u32 %v3063, 4294901760
          %3065 = vmatpush1.msra.mxu0 %v3064
          %3066 = vmatprep.subr.mxu0 0.0
          %v3067 = vand.u32 %v2959, 4294901760
          %v3068 = vsub.f32 %v2959, %v3067
          %v3069 = vand.u32 %v3068, 4294901760
          %v3070 = vsub.f32 %v3068, %v3069
          %v3071 = vand.u32 %v3070, 4294901760
          %3072 = vmatpush1.msra.mxu0 %v3071
          %3073 = vmatprep.subr.mxu0 0.0
          %v3074 = vand.u32 %v2958, 4294901760
          %v3075 = vsub.f32 %v2958, %v3074
          %v3076 = vand.u32 %v3075, 4294901760
          %v3077 = vsub.f32 %v3075, %v3076
          %v3078 = vand.u32 %v3077, 4294901760
          %3079 = vmatpush1.msra.mxu0 %v3078
          %3080 = vmatprep.subr.mxu0 0.0
          %v3081 = vand.u32 %v2957, 4294901760
          %v3082 = vsub.f32 %v2957, %v3081
          %v3083 = vand.u32 %v3082, 4294901760
          %v3084 = vsub.f32 %v3082, %v3083
          %v3085 = vand.u32 %v3084, 4294901760
          %3086 = vmatpush1.msra.mxu0 %v3085
          %3087 = vmatprep.subr.mxu0 0.0
          %v3088 = vand.u32 %v2956, 4294901760
          %v3089 = vsub.f32 %v2956, %v3088
          %v3090 = vand.u32 %v3089, 4294901760
          %v3091 = vsub.f32 %v3089, %v3090
          %v3092 = vand.u32 %v3091, 4294901760
          %3093 = vmatpush1.msra.mxu0 %v3092
          %3094 = vmatprep.subr.mxu0 0.0
          %v3095 = vand.u32 %v2955, 4294901760
          %v3096 = vsub.f32 %v2955, %v3095
          %v3097 = vand.u32 %v3096, 4294901760
          %v3098 = vsub.f32 %v3096, %v3097
          %v3099 = vand.u32 %v3098, 4294901760
          %3100 = vmatpush1.msra.mxu0 %v3099
          %3101 = vmatprep.subr.mxu0 0.0
          %v3102 = vand.u32 %v2954, 4294901760
          %v3103 = vsub.f32 %v2954, %v3102
          %v3104 = vand.u32 %v3103, 4294901760
          %v3105 = vsub.f32 %v3103, %v3104
          %v3106 = vand.u32 %v3105, 4294901760
          %3107 = vmatpush1.msra.mxu0 %v3106
          %3108 = vmatprep.subr.mxu0 0.0
          %v3109 = vand.u32 %v2953, 4294901760
          %v3110 = vsub.f32 %v2953, %v3109
          %v3111 = vand.u32 %v3110, 4294901760
          %v3112 = vsub.f32 %v3110, %v3111
          %v3113 = vand.u32 %v3112, 4294901760
          %3114 = vmatpush1.msra.mxu0 %v3113
          %3115 = vmatprep.subr.mxu0 0.0
          %v3116 = vand.u32 %v2952, 4294901760
          %v3117 = vsub.f32 %v2952, %v3116
          %v3118 = vand.u32 %v3117, 4294901760
          %v3119 = vsub.f32 %v3117, %v3118
          %v3120 = vand.u32 %v3119, 4294901760
          %3121 = vmatpush1.msra.mxu0 %v3120
          %3122 = vmatprep.subr.mxu0 0.0
          %v3123 = vand.u32 %v2951, 4294901760
          %v3124 = vsub.f32 %v2951, %v3123
          %v3125 = vand.u32 %v3124, 4294901760
          %v3126 = vsub.f32 %v3124, %v3125
          %v3127 = vand.u32 %v3126, 4294901760
          %3128 = vmatpush1.msra.mxu0 %v3127
          %3129 = vmatprep.subr.mxu0 0.0
          %v3130 = vand.u32 %v2950, 4294901760
          %v3131 = vsub.f32 %v2950, %v3130
          %v3132 = vand.u32 %v3131, 4294901760
          %v3133 = vsub.f32 %v3131, %v3132
          %v3134 = vand.u32 %v3133, 4294901760
          %3135 = vmatpush1.msra.mxu0 %v3134
          %3136 = vmatprep.subr.mxu0 0.0
          %v3137 = vand.u32 %v2949, 4294901760
          %v3138 = vsub.f32 %v2949, %v3137
          %v3139 = vand.u32 %v3138, 4294901760
          %v3140 = vsub.f32 %v3138, %v3139
          %v3141 = vand.u32 %v3140, 4294901760
          %3142 = vmatpush1.msra.mxu0 %v3141
          %3143 = vmatprep.subr.mxu0 0.0
          %v3144 = vand.u32 %v2948, 4294901760
          %v3145 = vsub.f32 %v2948, %v3144
          %v3146 = vand.u32 %v3145, 4294901760
          %v3147 = vsub.f32 %v3145, %v3146
          %v3148 = vand.u32 %v3147, 4294901760
          %3149 = vmatpush1.msra.mxu0 %v3148
          %3150 = vmatprep.subr.mxu0 0.0
          %v3151 = vand.u32 %v2947, 4294901760
          %v3152 = vsub.f32 %v2947, %v3151
          %v3153 = vand.u32 %v3152, 4294901760
          %v3154 = vsub.f32 %v3152, %v3153
          %v3155 = vand.u32 %v3154, 4294901760
          %3156 = vmatpush1.msra.mxu0 %v3155
          %3157 = vmatprep.subr.mxu0 0.0
          %v3158 = vand.u32 %v2946, 4294901760
          %v3159 = vsub.f32 %v2946, %v3158
          %v3160 = vand.u32 %v3159, 4294901760
          %v3161 = vsub.f32 %v3159, %v3160
          %v3162 = vand.u32 %v3161, 4294901760
          %3163 = vmatpush1.msra.mxu0 %v3162
          %3164 = vmatprep.subr.mxu0 0.0
          %v3165 = vand.u32 %v2945, 4294901760
          %v3166 = vsub.f32 %v2945, %v3165
          %v3167 = vand.u32 %v3166, 4294901760
          %v3168 = vsub.f32 %v3166, %v3167
          %v3169 = vand.u32 %v3168, 4294901760
          %3170 = vmatpush1.msra.mxu0 %v3169
          %3171 = vmatprep.subr.mxu0 0.0
          %3172 = vmatpush2.msra.mxu0 0.0
          %3173 = vmatprep.subr.mxu0 0.0
          %3174 = vmatpush2.msra.mxu0 0.0
          %3175 = vmatprep.subr.mxu0 0.0
          %3176 = vmatpush2.msra.mxu0 0.0
          %3177 = vmatprep.subr.mxu0 0.0
          %3178 = vmatpush2.msra.mxu0 0.0
          %3179 = vmatprep.subr.mxu0 0.0
          %3180 = vmatpush2.msra.mxu0 0.0
          %3181 = vmatprep.subr.mxu0 0.0
          %3182 = vmatpush2.msra.mxu0 0.0
          %3183 = vmatprep.subr.mxu0 0.0
          %3184 = vmatpush2.msra.mxu0 0.0
          %3185 = vmatprep.subr.mxu0 0.0
          %3186 = vmatpush2.msra.mxu0 0.0
          %3187 = vmatprep.subr.mxu0 0.0
          %3188 = vmatpush2.msra.mxu0 0.0
          %3189 = vmatprep.subr.mxu0 0.0
          %3190 = vmatpush2.msra.mxu0 0.0
          %3191 = vmatprep.subr.mxu0 0.0
          %3192 = vmatpush2.msra.mxu0 0.0
          %3193 = vmatprep.subr.mxu0 0.0
          %3194 = vmatpush2.msra.mxu0 0.0
          %3195 = vmatprep.subr.mxu0 0.0
          %3196 = vmatpush2.msra.mxu0 0.0
          %3197 = vmatprep.subr.mxu0 0.0
          %3198 = vmatpush2.msra.mxu0 0.0
          %3199 = vmatprep.subr.mxu0 0.0
          %3200 = vmatpush2.msra.mxu0 0.0
          %3201 = vmatprep.subr.mxu0 0.0
          %3202 = vmatpush2.msra.mxu0 0.0
          %3203 = vmatprep.mubr.f32.mxu0 0.0
          %v3204 = vand.u32 %v2944, 4294901760
          %3205 = vmatmul.mubr.f32.gmra.mxu0 %v3204
          %v3206 = vpop.f32.mrf.mxu0
          %v3207 = vadd.f32 %v3056, %v3206
          %v3208 = vpop.f32.mrf.mxu0
          %3209 = vdwg.mxu0
          %3210 = vmatprep.subr.mxu0 0.0
          %v3211 = vand.u32 %v2960, 4294901760
          %v3212 = vsub.f32 %v2960, %v3211
          %3213 = vmatpush1.msra.mxu0 %v3212
          %3214 = vmatprep.subr.mxu0 0.0
          %v3215 = vand.u32 %v2959, 4294901760
          %v3216 = vsub.f32 %v2959, %v3215
          %3217 = vmatpush1.msra.mxu0 %v3216
          %3218 = vmatprep.subr.mxu0 0.0
          %v3219 = vand.u32 %v2958, 4294901760
          %v3220 = vsub.f32 %v2958, %v3219
          %3221 = vmatpush1.msra.mxu0 %v3220
          %3222 = vmatprep.subr.mxu0 0.0
          %v3223 = vand.u32 %v2957, 4294901760
          %v3224 = vsub.f32 %v2957, %v3223
          %3225 = vmatpush1.msra.mxu0 %v3224
          %3226 = vmatprep.subr.mxu0 0.0
          %v3227 = vand.u32 %v2956, 4294901760
          %v3228 = vsub.f32 %v2956, %v3227
          %3229 = vmatpush1.msra.mxu0 %v3228
          %3230 = vmatprep.subr.mxu0 0.0
          %v3231 = vand.u32 %v2955, 4294901760
          %v3232 = vsub.f32 %v2955, %v3231
          %3233 = vmatpush1.msra.mxu0 %v3232
          %3234 = vmatprep.subr.mxu0 0.0
          %v3235 = vand.u32 %v2954, 4294901760
          %v3236 = vsub.f32 %v2954, %v3235
          %3237 = vmatpush1.msra.mxu0 %v3236
          %3238 = vmatprep.subr.mxu0 0.0
          %v3239 = vand.u32 %v2953, 4294901760
          %v3240 = vsub.f32 %v2953, %v3239
          %3241 = vmatpush1.msra.mxu0 %v3240
          %3242 = vmatprep.subr.mxu0 0.0
          %v3243 = vand.u32 %v2952, 4294901760
          %v3244 = vsub.f32 %v2952, %v3243
          %3245 = vmatpush1.msra.mxu0 %v3244
          %3246 = vmatprep.subr.mxu0 0.0
          %v3247 = vand.u32 %v2951, 4294901760
          %v3248 = vsub.f32 %v2951, %v3247
          %3249 = vmatpush1.msra.mxu0 %v3248
          %3250 = vmatprep.subr.mxu0 0.0
          %v3251 = vand.u32 %v2950, 4294901760
          %v3252 = vsub.f32 %v2950, %v3251
          %3253 = vmatpush1.msra.mxu0 %v3252
          %3254 = vmatprep.subr.mxu0 0.0
          %v3255 = vand.u32 %v2949, 4294901760
          %v3256 = vsub.f32 %v2949, %v3255
          %3257 = vmatpush1.msra.mxu0 %v3256
          %3258 = vmatprep.subr.mxu0 0.0
          %v3259 = vand.u32 %v2948, 4294901760
          %v3260 = vsub.f32 %v2948, %v3259
          %3261 = vmatpush1.msra.mxu0 %v3260
          %3262 = vmatprep.subr.mxu0 0.0
          %v3263 = vand.u32 %v2947, 4294901760
          %v3264 = vsub.f32 %v2947, %v3263
          %3265 = vmatpush1.msra.mxu0 %v3264
          %3266 = vmatprep.subr.mxu0 0.0
          %v3267 = vand.u32 %v2946, 4294901760
          %v3268 = vsub.f32 %v2946, %v3267
          %3269 = vmatpush1.msra.mxu0 %v3268
          %3270 = vmatprep.subr.mxu0 0.0
          %v3271 = vand.u32 %v2945, 4294901760
          %v3272 = vsub.f32 %v2945, %v3271
          %3273 = vmatpush1.msra.mxu0 %v3272
          %3274 = vmatprep.subr.mxu0 0.0
          %3275 = vmatpush2.msra.mxu0 0.0
          %3276 = vmatprep.subr.mxu0 0.0
          %3277 = vmatpush2.msra.mxu0 0.0
          %3278 = vmatprep.subr.mxu0 0.0
          %3279 = vmatpush2.msra.mxu0 0.0
          %3280 = vmatprep.subr.mxu0 0.0
          %3281 = vmatpush2.msra.mxu0 0.0
          %3282 = vmatprep.subr.mxu0 0.0
          %3283 = vmatpush2.msra.mxu0 0.0
          %3284 = vmatprep.subr.mxu0 0.0
          %3285 = vmatpush2.msra.mxu0 0.0
          %3286 = vmatprep.subr.mxu0 0.0
          %3287 = vmatpush2.msra.mxu0 0.0
          %3288 = vmatprep.subr.mxu0 0.0
          %3289 = vmatpush2.msra.mxu0 0.0
          %3290 = vmatprep.subr.mxu0 0.0
          %3291 = vmatpush2.msra.mxu0 0.0
          %3292 = vmatprep.subr.mxu0 0.0
          %3293 = vmatpush2.msra.mxu0 0.0
          %3294 = vmatprep.subr.mxu0 0.0
          %3295 = vmatpush2.msra.mxu0 0.0
          %3296 = vmatprep.subr.mxu0 0.0
          %3297 = vmatpush2.msra.mxu0 0.0
          %3298 = vmatprep.subr.mxu0 0.0
          %3299 = vmatpush2.msra.mxu0 0.0
          %3300 = vmatprep.subr.mxu0 0.0
          %3301 = vmatpush2.msra.mxu0 0.0
          %3302 = vmatprep.subr.mxu0 0.0
          %3303 = vmatpush2.msra.mxu0 0.0
          %3304 = vmatprep.subr.mxu0 0.0
          %3305 = vmatpush2.msra.mxu0 0.0
          %3306 = vmatprep.mubr.f32.mxu0 0.0
          %v3307 = vand.u32 %v2944, 4294901760
          %v3308 = vsub.f32 %v2944, %v3307
          %3309 = vmatmul.mubr.f32.gmra.mxu0 %v3308
          %v3310 = vpop.f32.mrf.mxu0
          %v3311 = vadd.f32 %v3207, %v3310
          %v3312 = vpop.f32.mrf.mxu0
          %3313 = vdwg.mxu0
          %3314 = vmatprep.subr.mxu0 0.0
          %v3315 = vand.u32 %v2960, 4294901760
          %3316 = vmatpush1.msra.mxu0 %v3315
          %3317 = vmatprep.subr.mxu0 0.0
          %v3318 = vand.u32 %v2959, 4294901760
          %3319 = vmatpush1.msra.mxu0 %v3318
          %3320 = vmatprep.subr.mxu0 0.0
          %v3321 = vand.u32 %v2958, 4294901760
          %3322 = vmatpush1.msra.mxu0 %v3321
          %3323 = vmatprep.subr.mxu0 0.0
          %v3324 = vand.u32 %v2957, 4294901760
          %3325 = vmatpush1.msra.mxu0 %v3324
          %3326 = vmatprep.subr.mxu0 0.0
          %v3327 = vand.u32 %v2956, 4294901760
          %3328 = vmatpush1.msra.mxu0 %v3327
          %3329 = vmatprep.subr.mxu0 0.0
          %v3330 = vand.u32 %v2955, 4294901760
          %3331 = vmatpush1.msra.mxu0 %v3330
          %3332 = vmatprep.subr.mxu0 0.0
          %v3333 = vand.u32 %v2954, 4294901760
          %3334 = vmatpush1.msra.mxu0 %v3333
          %3335 = vmatprep.subr.mxu0 0.0
          %v3336 = vand.u32 %v2953, 4294901760
          %3337 = vmatpush1.msra.mxu0 %v3336
          %3338 = vmatprep.subr.mxu0 0.0
          %v3339 = vand.u32 %v2952, 4294901760
          %3340 = vmatpush1.msra.mxu0 %v3339
          %3341 = vmatprep.subr.mxu0 0.0
          %v3342 = vand.u32 %v2951, 4294901760
          %3343 = vmatpush1.msra.mxu0 %v3342
          %3344 = vmatprep.subr.mxu0 0.0
          %v3345 = vand.u32 %v2950, 4294901760
          %3346 = vmatpush1.msra.mxu0 %v3345
          %3347 = vmatprep.subr.mxu0 0.0
          %v3348 = vand.u32 %v2949, 4294901760
          %3349 = vmatpush1.msra.mxu0 %v3348
          %3350 = vmatprep.subr.mxu0 0.0
          %v3351 = vand.u32 %v2948, 4294901760
          %3352 = vmatpush1.msra.mxu0 %v3351
          %3353 = vmatprep.subr.mxu0 0.0
          %v3354 = vand.u32 %v2947, 4294901760
          %3355 = vmatpush1.msra.mxu0 %v3354
          %3356 = vmatprep.subr.mxu0 0.0
          %v3357 = vand.u32 %v2946, 4294901760
          %3358 = vmatpush1.msra.mxu0 %v3357
          %3359 = vmatprep.subr.mxu0 0.0
          %v3360 = vand.u32 %v2945, 4294901760
          %3361 = vmatpush1.msra.mxu0 %v3360
          %3362 = vmatprep.subr.mxu0 0.0
          %3363 = vmatpush2.msra.mxu0 0.0
          %3364 = vmatprep.subr.mxu0 0.0
          %3365 = vmatpush2.msra.mxu0 0.0
          %3366 = vmatprep.subr.mxu0 0.0
          %3367 = vmatpush2.msra.mxu0 0.0
          %3368 = vmatprep.subr.mxu0 0.0
          %3369 = vmatpush2.msra.mxu0 0.0
          %3370 = vmatprep.subr.mxu0 0.0
          %3371 = vmatpush2.msra.mxu0 0.0
          %3372 = vmatprep.subr.mxu0 0.0
          %3373 = vmatpush2.msra.mxu0 0.0
          %3374 = vmatprep.subr.mxu0 0.0
          %3375 = vmatpush2.msra.mxu0 0.0
          %3376 = vmatprep.subr.mxu0 0.0
          %3377 = vmatpush2.msra.mxu0 0.0
          %3378 = vmatprep.subr.mxu0 0.0
          %3379 = vmatpush2.msra.mxu0 0.0
          %3380 = vmatprep.subr.mxu0 0.0
          %3381 = vmatpush2.msra.mxu0 0.0
          %3382 = vmatprep.subr.mxu0 0.0
          %3383 = vmatpush2.msra.mxu0 0.0
          %3384 = vmatprep.subr.mxu0 0.0
          %3385 = vmatpush2.msra.mxu0 0.0
          %3386 = vmatprep.subr.mxu0 0.0
          %3387 = vmatpush2.msra.mxu0 0.0
          %3388 = vmatprep.subr.mxu0 0.0
          %3389 = vmatpush2.msra.mxu0 0.0
          %3390 = vmatprep.subr.mxu0 0.0
          %3391 = vmatpush2.msra.mxu0 0.0
          %3392 = vmatprep.subr.mxu0 0.0
          %3393 = vmatpush2.msra.mxu0 0.0
          %3394 = vmatprep.mubr.f32.mxu0 0.0
          %v3395 = vand.u32 %v2944, 4294901760
          %v3396 = vsub.f32 %v2944, %v3395
          %v3397 = vand.u32 %v3396, 4294901760
          %3398 = vmatmul.mubr.f32.gmra.mxu0 %v3397
          %v3399 = vpop.f32.mrf.mxu0
          %v3400 = vadd.f32 %v3311, %v3399
          %v3401 = vpop.f32.mrf.mxu0
          %3402 = vdwg.mxu0
          %3403 = vmatprep.subr.mxu0 0.0
          %v3404 = vand.u32 %v2960, 4294901760
          %v3405 = vsub.f32 %v2960, %v3404
          %v3406 = vand.u32 %v3405, 4294901760
          %3407 = vmatpush1.msra.mxu0 %v3406
          %3408 = vmatprep.subr.mxu0 0.0
          %v3409 = vand.u32 %v2959, 4294901760
          %v3410 = vsub.f32 %v2959, %v3409
          %v3411 = vand.u32 %v3410, 4294901760
          %3412 = vmatpush1.msra.mxu0 %v3411
          %3413 = vmatprep.subr.mxu0 0.0
          %v3414 = vand.u32 %v2958, 4294901760
          %v3415 = vsub.f32 %v2958, %v3414
          %v3416 = vand.u32 %v3415, 4294901760
          %3417 = vmatpush1.msra.mxu0 %v3416
          %3418 = vmatprep.subr.mxu0 0.0
          %v3419 = vand.u32 %v2957, 4294901760
          %v3420 = vsub.f32 %v2957, %v3419
          %v3421 = vand.u32 %v3420, 4294901760
          %3422 = vmatpush1.msra.mxu0 %v3421
          %3423 = vmatprep.subr.mxu0 0.0
          %v3424 = vand.u32 %v2956, 4294901760
          %v3425 = vsub.f32 %v2956, %v3424
          %v3426 = vand.u32 %v3425, 4294901760
          %3427 = vmatpush1.msra.mxu0 %v3426
          %3428 = vmatprep.subr.mxu0 0.0
          %v3429 = vand.u32 %v2955, 4294901760
          %v3430 = vsub.f32 %v2955, %v3429
          %v3431 = vand.u32 %v3430, 4294901760
          %3432 = vmatpush1.msra.mxu0 %v3431
          %3433 = vmatprep.subr.mxu0 0.0
          %v3434 = vand.u32 %v2954, 4294901760
          %v3435 = vsub.f32 %v2954, %v3434
          %v3436 = vand.u32 %v3435, 4294901760
          %3437 = vmatpush1.msra.mxu0 %v3436
          %3438 = vmatprep.subr.mxu0 0.0
          %v3439 = vand.u32 %v2953, 4294901760
          %v3440 = vsub.f32 %v2953, %v3439
          %v3441 = vand.u32 %v3440, 4294901760
          %3442 = vmatpush1.msra.mxu0 %v3441
          %3443 = vmatprep.subr.mxu0 0.0
          %v3444 = vand.u32 %v2952, 4294901760
          %v3445 = vsub.f32 %v2952, %v3444
          %v3446 = vand.u32 %v3445, 4294901760
          %3447 = vmatpush1.msra.mxu0 %v3446
          %3448 = vmatprep.subr.mxu0 0.0
          %v3449 = vand.u32 %v2951, 4294901760
          %v3450 = vsub.f32 %v2951, %v3449
          %v3451 = vand.u32 %v3450, 4294901760
          %3452 = vmatpush1.msra.mxu0 %v3451
          %3453 = vmatprep.subr.mxu0 0.0
          %v3454 = vand.u32 %v2950, 4294901760
          %v3455 = vsub.f32 %v2950, %v3454
          %v3456 = vand.u32 %v3455, 4294901760
          %3457 = vmatpush1.msra.mxu0 %v3456
          %3458 = vmatprep.subr.mxu0 0.0
          %v3459 = vand.u32 %v2949, 4294901760
          %v3460 = vsub.f32 %v2949, %v3459
          %v3461 = vand.u32 %v3460, 4294901760
          %3462 = vmatpush1.msra.mxu0 %v3461
          %3463 = vmatprep.subr.mxu0 0.0
          %v3464 = vand.u32 %v2948, 4294901760
          %v3465 = vsub.f32 %v2948, %v3464
          %v3466 = vand.u32 %v3465, 4294901760
          %3467 = vmatpush1.msra.mxu0 %v3466
          %3468 = vmatprep.subr.mxu0 0.0
          %v3469 = vand.u32 %v2947, 4294901760
          %v3470 = vsub.f32 %v2947, %v3469
          %v3471 = vand.u32 %v3470, 4294901760
          %3472 = vmatpush1.msra.mxu0 %v3471
          %3473 = vmatprep.subr.mxu0 0.0
          %v3474 = vand.u32 %v2946, 4294901760
          %v3475 = vsub.f32 %v2946, %v3474
          %v3476 = vand.u32 %v3475, 4294901760
          %3477 = vmatpush1.msra.mxu0 %v3476
          %3478 = vmatprep.subr.mxu0 0.0
          %v3479 = vand.u32 %v2945, 4294901760
          %v3480 = vsub.f32 %v2945, %v3479
          %v3481 = vand.u32 %v3480, 4294901760
          %3482 = vmatpush1.msra.mxu0 %v3481
          %3483 = vmatprep.subr.mxu0 0.0
          %3484 = vmatpush2.msra.mxu0 0.0
          %3485 = vmatprep.subr.mxu0 0.0
          %3486 = vmatpush2.msra.mxu0 0.0
          %3487 = vmatprep.subr.mxu0 0.0
          %3488 = vmatpush2.msra.mxu0 0.0
          %3489 = vmatprep.subr.mxu0 0.0
          %3490 = vmatpush2.msra.mxu0 0.0
          %3491 = vmatprep.subr.mxu0 0.0
          %3492 = vmatpush2.msra.mxu0 0.0
          %3493 = vmatprep.subr.mxu0 0.0
          %3494 = vmatpush2.msra.mxu0 0.0
          %3495 = vmatprep.subr.mxu0 0.0
          %3496 = vmatpush2.msra.mxu0 0.0
          %3497 = vmatprep.subr.mxu0 0.0
          %3498 = vmatpush2.msra.mxu0 0.0
          %3499 = vmatprep.subr.mxu0 0.0
          %3500 = vmatpush2.msra.mxu0 0.0
          %3501 = vmatprep.subr.mxu0 0.0
          %3502 = vmatpush2.msra.mxu0 0.0
          %3503 = vmatprep.subr.mxu0 0.0
          %3504 = vmatpush2.msra.mxu0 0.0
          %3505 = vmatprep.subr.mxu0 0.0
          %3506 = vmatpush2.msra.mxu0 0.0
          %3507 = vmatprep.subr.mxu0 0.0
          %3508 = vmatpush2.msra.mxu0 0.0
          %3509 = vmatprep.subr.mxu0 0.0
          %3510 = vmatpush2.msra.mxu0 0.0
          %3511 = vmatprep.subr.mxu0 0.0
          %3512 = vmatpush2.msra.mxu0 0.0
          %3513 = vmatprep.subr.mxu0 0.0
          %3514 = vmatpush2.msra.mxu0 0.0
          %3515 = vmatprep.mubr.f32.mxu0 0.0
          %v3516 = vand.u32 %v2944, 4294901760
          %3517 = vmatmul.mubr.f32.gmra.mxu0 %v3516
          %v3518 = vpop.f32.mrf.mxu0
          %v3519 = vadd.f32 %v3400, %v3518
          %v3520 = vpop.f32.mrf.mxu0
          %3521 = vdwg.mxu0
          %3522 = vmatprep.subr.mxu0 0.0
          %v3523 = vand.u32 %v2960, 4294901760
          %3524 = vmatpush1.msra.mxu0 %v3523
          %3525 = vmatprep.subr.mxu0 0.0
          %v3526 = vand.u32 %v2959, 4294901760
          %3527 = vmatpush1.msra.mxu0 %v3526
          %3528 = vmatprep.subr.mxu0 0.0
          %v3529 = vand.u32 %v2958, 4294901760
          %3530 = vmatpush1.msra.mxu0 %v3529
          %3531 = vmatprep.subr.mxu0 0.0
          %v3532 = vand.u32 %v2957, 4294901760
          %3533 = vmatpush1.msra.mxu0 %v3532
          %3534 = vmatprep.subr.mxu0 0.0
          %v3535 = vand.u32 %v2956, 4294901760
          %3536 = vmatpush1.msra.mxu0 %v3535
          %3537 = vmatprep.subr.mxu0 0.0
          %v3538 = vand.u32 %v2955, 4294901760
          %3539 = vmatpush1.msra.mxu0 %v3538
          %3540 = vmatprep.subr.mxu0 0.0
          %v3541 = vand.u32 %v2954, 4294901760
          %3542 = vmatpush1.msra.mxu0 %v3541
          %3543 = vmatprep.subr.mxu0 0.0
          %v3544 = vand.u32 %v2953, 4294901760
          %3545 = vmatpush1.msra.mxu0 %v3544
          %3546 = vmatprep.subr.mxu0 0.0
          %v3547 = vand.u32 %v2952, 4294901760
          %3548 = vmatpush1.msra.mxu0 %v3547
          %3549 = vmatprep.subr.mxu0 0.0
          %v3550 = vand.u32 %v2951, 4294901760
          %3551 = vmatpush1.msra.mxu0 %v3550
          %3552 = vmatprep.subr.mxu0 0.0
          %v3553 = vand.u32 %v2950, 4294901760
          %3554 = vmatpush1.msra.mxu0 %v3553
          %3555 = vmatprep.subr.mxu0 0.0
          %v3556 = vand.u32 %v2949, 4294901760
          %3557 = vmatpush1.msra.mxu0 %v3556
          %3558 = vmatprep.subr.mxu0 0.0
          %v3559 = vand.u32 %v2948, 4294901760
          %3560 = vmatpush1.msra.mxu0 %v3559
          %3561 = vmatprep.subr.mxu0 0.0
          %v3562 = vand.u32 %v2947, 4294901760
          %3563 = vmatpush1.msra.mxu0 %v3562
          %3564 = vmatprep.subr.mxu0 0.0
          %v3565 = vand.u32 %v2946, 4294901760
          %3566 = vmatpush1.msra.mxu0 %v3565
          %3567 = vmatprep.subr.mxu0 0.0
          %v3568 = vand.u32 %v2945, 4294901760
          %3569 = vmatpush1.msra.mxu0 %v3568
          %3570 = vmatprep.subr.mxu0 0.0
          %3571 = vmatpush2.msra.mxu0 0.0
          %3572 = vmatprep.subr.mxu0 0.0
          %3573 = vmatpush2.msra.mxu0 0.0
          %3574 = vmatprep.subr.mxu0 0.0
          %3575 = vmatpush2.msra.mxu0 0.0
          %3576 = vmatprep.subr.mxu0 0.0
          %3577 = vmatpush2.msra.mxu0 0.0
          %3578 = vmatprep.subr.mxu0 0.0
          %3579 = vmatpush2.msra.mxu0 0.0
          %3580 = vmatprep.subr.mxu0 0.0
          %3581 = vmatpush2.msra.mxu0 0.0
          %3582 = vmatprep.subr.mxu0 0.0
          %3583 = vmatpush2.msra.mxu0 0.0
          %3584 = vmatprep.subr.mxu0 0.0
          %3585 = vmatpush2.msra.mxu0 0.0
          %3586 = vmatprep.subr.mxu0 0.0
          %3587 = vmatpush2.msra.mxu0 0.0
          %3588 = vmatprep.subr.mxu0 0.0
          %3589 = vmatpush2.msra.mxu0 0.0
          %3590 = vmatprep.subr.mxu0 0.0
          %3591 = vmatpush2.msra.mxu0 0.0
          %3592 = vmatprep.subr.mxu0 0.0
          %3593 = vmatpush2.msra.mxu0 0.0
          %3594 = vmatprep.subr.mxu0 0.0
          %3595 = vmatpush2.msra.mxu0 0.0
          %3596 = vmatprep.subr.mxu0 0.0
          %3597 = vmatpush2.msra.mxu0 0.0
          %3598 = vmatprep.subr.mxu0 0.0
          %3599 = vmatpush2.msra.mxu0 0.0
          %3600 = vmatprep.subr.mxu0 0.0
          %3601 = vmatpush2.msra.mxu0 0.0
          %3602 = vmatprep.mubr.f32.mxu0 0.0
          %v3603 = vand.u32 %v2944, 4294901760
          %3604 = vmatmul.mubr.f32.gmra.mxu0 %v3603
          %v3605 = vpop.f32.mrf.mxu0
          %v3606 = vadd.f32 %v3519, %v3605
          %v3607 = vpop.f32.mrf.mxu0
          %3608 = vdwg.mxu0
          %3609 = vst [vmem:[%s427] sm:$0xff] %v3606
        $region80: #{tpu_custom_call.1} parent=51 // pred_fallthru
          _
        %s3610 = sand.u32 %s240, 1
        %s3611 = scalar_lea.sflag [#allocation8], %s3610
        %s3612 = sand.u32 %s240, 1
        %s3613 = smul.addr %s3612, 8
        %s3614 = scalar_lea.vmem [#allocation15], %s3613
        // Predicated region
        $region81: #{tpu_custom_call.1} parent=51 // pred_check
          %p3615 = pneg %p250
        $region82: #{tpu_custom_call.1} parent=51 // pred_check_branch
          %3617 = sbr.rel (%p3615) target = $region84
        $region83: #{tpu_custom_call.1} parent=51 // pred_region
          %s3619 = ssub.s32 128, 128
          %3620 = vsyncadd %s3611, %s3619
          %s3621 = sadd.s32 %s35, %s34
          %s3622 = smul.addr %s3621, 128
          %s3623 = scalar_lea.hbm %s8, %s3622
          %s3625 = sshll.u32 %s3614, 4
          %s3626 = int_to_ptr.vmem [resolvable:$true] %s3625
          %3628 = dma.vmem_to_hbm [thread:$0]  %s3626, 128, %s3623, %s3611
        $region84: #{tpu_custom_call.1} parent=51 // pred_fallthru
          _
      $region52: #{tpu_custom_call.1} parent=5 // pred_fallthru
        _
      %p3629 = scmp.le.s32.totalorder 2, %s24
      // Predicated region
      $region85: #{tpu_custom_call.1} parent=5 // pred_check
        %p3630 = pneg %p3629
      $region86: #{tpu_custom_call.1} parent=5 // pred_check_branch
        %3632 = sbr.rel (%p3630) target = $region88
      $region87: #{tpu_custom_call.1} parent=5 // pred_region
        %s3633 = ssub.s32 %s24, 2
        // Predicated region
        $region89: #{tpu_custom_call.1} parent=87 // pred_check
          %p3634 = pneg %p256
        $region90: #{tpu_custom_call.1} parent=87 // pred_check_branch
          %3636 = sbr.rel (%p3634) target = $region92
        $region91: #{tpu_custom_call.1} parent=87 // pred_region
          %s3637 = sand.u32 %s241, 1
          %s3638 = scalar_lea.sflag [#allocation8], %s3637
          %s3639 = sand.u32 %s241, 1
          %s3640 = smul.addr %s3639, 8
          %s3641 = scalar_lea.vmem [#allocation15], %s3640
          %3642 = dma.done %s3638, 128
        $region92: #{tpu_custom_call.1} parent=87 // pred_fallthru
          _
      $region88: #{tpu_custom_call.1} parent=5 // pred_fallthru
        _
    $region6: #{tpu_custom_call.1} parent=1 // loop_footer
      %s28 = sadd.s32 1, %s24
    $region7: #{tpu_custom_call.1} parent=1 // loop_footer_branch
      %23 = sbr.rel target = $region3
    $region8: #{tpu_custom_call.1} parent=1 // loop_exit
      _
    %3643 = vsyncpa [#allocation7], 1
    %s3644 = scalar_lea.sflag [#allocation7], 1
    %3645 = vsyncpa %s3644, 1
    %3646 = vsyncpa [#allocation10], 1
    %s3647 = scalar_lea.sflag [#allocation10], 1
    %3648 = vsyncpa %s3647, 1
    %3649 = vsyncpa [#allocation13], 1
    %3650 = vsyncpa [#allocation8], 1
    %s3651 = scalar_lea.sflag [#allocation8], 1
    %3652 = vsyncpa %s3651, 1

</llo_original>
